<compile_context>
chip_gen: v7x
topology: tpu7x:2x2x1
jax: 0.10.0
libtpu: 0.0.40
codegen_flags: <defaults>
</compile_context>

<pallas_src>
import functools

import jax
import jax.numpy as jnp
from jax.experimental import pallas as pl
from jax.experimental.pallas import tpu as pltpu


# ---------------------------------------------------------------------------
# Fused 3x3 conv (stride 1, pad 1) + folded BatchNorm + ReLU (+ optional 2x2 maxpool)
# ---------------------------------------------------------------------------
def _conv_bn_relu_kernel(cur_ref, top_ref, bot_ref, w_ref, s_ref, b_ref, o_ref,
                         pad_ref, col_ref=None, *, TH, W, Cin, Cout, pool, flat_out):
    """One (batch, row-block) grid point: 3x3 'SAME' conv + folded BN + ReLU (+ pool)."""
    r = pl.program_id(1)
    nr = pl.num_programs(1)
    f32 = jnp.float32
    in_dt = cur_ref.dtype

    # NOTE: the pad_ref border/interior writes are done every step (not hoisted under
    # pl.when(first step)) so correctness is independent of how megacore shards the
    # parallel grid axes across TensorCores; the extra stores are negligible vs fc1.
    if Cin == 1:
        # ---- path A: single input channel, x laid out (H, W) with W on the lane axis ----
        pad_ref[1:TH + 1, 1:W + 1] = cur_ref[0]
        top_row = jnp.where(r > 0, top_ref[0, TH - 1:TH, :], jnp.zeros((1, W), in_dt))
        bot_row = jnp.where(r < nr - 1, bot_ref[0, 0:1, :], jnp.zeros((1, W), in_dt))
        pad_ref[0:1, 1:W + 1] = top_row
        pad_ref[TH + 1:TH + 2, 1:W + 1] = bot_row
        pad_ref[:, 0:1] = jnp.zeros((TH + 2, 1), in_dt)
        pad_ref[:, W + 1:W + 2] = jnp.zeros((TH + 2, 1), in_dt)

        y = jnp.zeros((TH, W, Cout), f32)
        for ky in range(3):
            for kx in range(3):
                t = ky * 3 + kx
                patch = pad_ref[ky:ky + TH, kx:kx + W].astype(f32)        # (TH, W)
                wk = w_ref[t:t + 1, :].astype(f32).reshape(1, 1, Cout)    # (1, 1, Cout)
                y = y + patch[:, :, None] * wk                            # VPU broadcast-FMA
    else:
        # ---- path B: bf16 im2col into VMEM scratch + one MXU matmul with K = 9*Cin ----
        pad_ref[1:TH + 1, 1:W + 1, :] = cur_ref[0]
        top_row = jnp.where(r > 0, top_ref[0], jnp.zeros((1, W, Cin), in_dt))
        bot_row = jnp.where(r < nr - 1, bot_ref[0], jnp.zeros((1, W, Cin), in_dt))
        pad_ref[0:1, 1:W + 1, :] = top_row
        pad_ref[TH + 1:TH + 2, 1:W + 1, :] = bot_row
        pad_ref[:, 0:1, :] = jnp.zeros((TH + 2, 1, Cin), in_dt)
        pad_ref[:, W + 1:W + 2, :] = jnp.zeros((TH + 2, 1, Cin), in_dt)

        for ky in range(3):
            for kx in range(3):
                t = ky * 3 + kx
                col_ref[:, t * Cin:(t + 1) * Cin] = (
                    pad_ref[ky:ky + TH, kx:kx + W, :]
                    .reshape(TH * W, Cin).astype(col_ref.dtype))
        y = jnp.dot(col_ref[...], w_ref[...], preferred_element_type=f32)  # (TH*W, Cout)
        y = y.reshape(TH, W, Cout)

    y = y * s_ref[...].reshape(1, 1, Cout) + b_ref[...].reshape(1, 1, Cout)
    y = jnp.maximum(y, 0.0)
    if pool:
        y = jnp.max(y.reshape(TH // 2, 2, W // 2, 2, Cout), axis=(1, 3))
    THo = TH // 2 if pool else TH
    Wo = W // 2 if pool else W
    if flat_out:
        # lane-dense store: minor dim Wo*Cout is a big multiple of 128 (no masked vst).
        o_ref[0] = y.reshape(THo, Wo * Cout).astype(o_ref.dtype)
    else:
        o_ref[0] = y.astype(o_ref.dtype)


def _pick_block_rows(H, W, Cin, Cout, pool, in_bytes, out_bytes,
                     budget_bytes=12 * 1024 * 1024,
                     hard_cap_bytes=40 * 1024 * 1024):
    """Largest row-block height TH (divisor of H, layout-legal) whose per-step VMEM
    footprint (padded input + bf16 im2col + double-buffered in/out blocks) fits the budget."""
    flat_out = (Cout % 128 != 0)
    in_sub = 16 if in_bytes == 2 else 8
    out_sub = 16 if out_bytes == 2 else 8
    Ho = H // 2 if pool else H

    def ok(th):
        if H % th:
            return False
        if pool and th % 2:
            return False
        tho = th // 2 if pool else th
        if Cin == 1 and th != H and th % in_sub:
            return False          # (sublane,128) rule: row axis is second-minor in (H, W)
        if flat_out and tho != Ho and tho % out_sub:
            return False          # lane-flattened output: row axis is second-minor
        return True

    def est(th):
        tho = th // 2 if pool else th
        wo = W // 2 if pool else W
        e = (th + 2) * (W + 2) * Cin * in_bytes           # padded-input scratch
        if Cin > 1:
            e += th * W * 9 * Cin * 2                     # bf16 im2col scratch
        e += 2 * th * W * Cin * in_bytes                  # double-buffered input block
        e += 2 * tho * wo * Cout * out_bytes              # double-buffered output block
        return e

    valid = [th for th in range(1, H + 1) if ok(th)]
    assert valid, ("no legal row-block height", H, W, Cin, Cout, pool)
    fitting = [th for th in valid if est(th) <= budget_bytes]
    th = max(fitting) if fitting else min(valid)
    assert est(th) <= hard_cap_bytes, (
        f"conv row-block scratch {est(th)} B exceeds hard cap {hard_cap_bytes} B")
    return th


def conv3x3_bn_relu(x, w, scale, bias, *, pool=False, block_rows=None,
                    out_dtype=jnp.bfloat16):
    """Fused 3x3 conv (stride 1, pad 1) + folded BatchNorm + ReLU, optionally followed by a
    fused MaxPool2d(2, 2).  x: (N, H, W, Cin) NHWC (Cin==1 may also be (N, H, W))."""
    Cin, Cout = w.shape[2], w.shape[3]
    if Cin == 1 and x.ndim == 4:
        x = x[..., 0]                       # (N, H, W): W becomes the 128-lane axis
    N, H, W = x.shape[0], x.shape[1], x.shape[2]
    flat_out = (Cout % 128 != 0)
    in_bytes = x.dtype.itemsize
    out_bytes = jnp.dtype(out_dtype).itemsize
    in_sub = 16 if in_bytes == 2 else 8
    out_sub = 16 if out_bytes == 2 else 8

    TH = block_rows if block_rows is not None else _pick_block_rows(
        H, W, Cin, Cout, pool, in_bytes, out_bytes)
    assert H % TH == 0, (H, TH)
    if pool:
        assert TH % 2 == 0 and W % 2 == 0, (TH, W)
    R = H // TH
    Ho, Wo = (H // 2, W // 2) if pool else (H, W)
    THo = TH // 2 if pool else TH
    if Cin == 1:
        assert TH == H or TH % in_sub == 0, TH
    if flat_out:
        assert THo == Ho or THo % out_sub == 0, THo

    w_flat = w.reshape(9 * Cin, Cout).astype(jnp.bfloat16)   # tap-major: row = tap*Cin + cin
    s = scale.reshape(1, Cout).astype(jnp.float32)
    b = bias.reshape(1, Cout).astype(jnp.float32)

    if Cin == 1:
        # Halo blocks are full TH-row blocks of the neighbouring row-tiles (single-row blocks
        # would violate the sublane rule when the row axis is second-minor); only one row of
        # each is consumed, and the conv1 image is tiny so the extra DMA is negligible.
        cur_spec = pl.BlockSpec((1, TH, W), lambda n, r: (n, r, 0))
        top_spec = pl.BlockSpec((1, TH, W), lambda n, r: (n, jnp.maximum(r - 1, 0), 0))
        bot_spec = pl.BlockSpec((1, TH, W), lambda n, r: (n, jnp.minimum(r + 1, R - 1), 0))
        scratch = [pltpu.VMEM((TH + 2, W + 2), x.dtype)]
    else:
        cur_spec = pl.BlockSpec((1, TH, W, Cin), lambda n, r: (n, r, 0, 0))
        top_spec = pl.BlockSpec((1, 1, W, Cin),
                                lambda n, r: (n, jnp.maximum(r * TH - 1, 0), 0, 0))
        bot_spec = pl.BlockSpec((1, 1, W, Cin),
                                lambda n, r: (n, jnp.minimum(r * TH + TH, H - 1), 0, 0))
        scratch = [pltpu.VMEM((TH + 2, W + 2, Cin), x.dtype),
                   pltpu.VMEM((TH * W, 9 * Cin), jnp.bfloat16)]   # bf16 im2col

    if flat_out:
        out_shape = jax.ShapeDtypeStruct((N, Ho, Wo * Cout), out_dtype)
        out_spec = pl.BlockSpec((1, THo, Wo * Cout), lambda n, r: (n, r, 0))
    else:
        out_shape = jax.ShapeDtypeStruct((N, Ho, Wo, Cout), out_dtype)
        out_spec = pl.BlockSpec((1, THo, Wo, Cout), lambda n, r: (n, r, 0, 0))

    kernel = functools.partial(_conv_bn_relu_kernel, TH=TH, W=W, Cin=Cin,
                               Cout=Cout, pool=pool, flat_out=flat_out)
    out = pl.pallas_call(
        kernel,
        out_shape=out_shape,
        grid_spec=pltpu.PrefetchScalarGridSpec(
            num_scalar_prefetch=0,
            grid=(N, R),
            in_specs=[cur_spec, top_spec, bot_spec,
                      pl.BlockSpec((9 * Cin, Cout), lambda n, r: (0, 0)),
                      pl.BlockSpec((1, Cout), lambda n, r: (0, 0)),
                      pl.BlockSpec((1, Cout), lambda n, r: (0, 0))],
            out_specs=out_spec,
            scratch_shapes=scratch,
        ),
        compiler_params=pltpu.CompilerParams(
            dimension_semantics=("parallel", "parallel"),
            vmem_limit_bytes=48 * 1024 * 1024),
    )(x, x, x, w_flat, s, b)
    if flat_out:
        out = out.reshape(N, Ho, Wo, Cout)          # contiguous, free
    return out


# ---------------------------------------------------------------------------
# Linear (+ ReLU or softmax epilogue): bf16 weight streaming, f32 VMEM accumulator
# ---------------------------------------------------------------------------
def _largest_divisor_leq(n, cap):
    for d in range(min(n, cap), 0, -1):
        if n % d == 0:
            return d
    return 1


def _linear_kernel(x_ref, w_ref, b_ref, o_ref, acc_ref, *, activation):
    k = pl.program_id(1)

    @pl.when(k == 0)
    def _():
        acc_ref[...] = jnp.zeros_like(acc_ref)

    acc_ref[...] += jnp.dot(x_ref[...], w_ref[...], preferred_element_type=jnp.float32)

    @pl.when(k == pl.num_programs(1) - 1)
    def _():
        y = acc_ref[...] + b_ref[...]
        if activation == "relu":
            y = jnp.maximum(y, 0.0)
        elif activation == "softmax":
            m = jnp.max(y, axis=-1, keepdims=True)
            e = jnp.exp(y - m)
            y = e / jnp.sum(e, axis=-1, keepdims=True)
        o_ref[...] = y.astype(o_ref.dtype)


def linear(x, w, b, activation="none"):
    # x: (B, Din) bf16/f32 ; w: (Din, Dout) bf16 ; b: (Dout,) f32
    B, Din = x.shape
    Dout = w.shape[1]
    Bp = max(8, ((B + 7) // 8) * 8)                 # pad batch to a sublane multiple
    xp = x.astype(w.dtype)                          # bf16 MXU inputs (no per-step cast)
    if Bp != B:
        xp = jnp.pad(xp, ((0, Bp - B), (0, 0)))

    if activation == "softmax" or Dout < 256:
        tn = Dout                                   # softmax needs the full row
    else:
        # keep >= 2 programs on the parallel axis (v7x megacore)
        tn = _largest_divisor_leq(Dout, min(1024, Dout // 2))
    tk = _largest_divisor_leq(Din, 3072)            # bigger HBM weight tiles (3072 | 153600)
    nk = Din // tk

    out_dtype = jnp.float32 if activation == "softmax" else jnp.bfloat16

    # Triple-buffer the weight stream when the reduction loop is deep enough, so the
    # HBM-bound fc1 weight read never stalls on per-step pipeline overhead.
    w_spec = pl.BlockSpec((tk, tn), lambda n, k: (k, n))
    if nk >= 3:
        try:
            w_spec = pl.BlockSpec((tk, tn), lambda n, k: (k, n),
                                  pipeline_mode=pl.Buffered(3))
        except Exception:
            pass                                    # fall back to default double-buffering

    kernel = functools.partial(_linear_kernel, activation=activation)
    out = pl.pallas_call(
        kernel,
        out_shape=jax.ShapeDtypeStruct((Bp, Dout), out_dtype),
        grid_spec=pltpu.PrefetchScalarGridSpec(
            num_scalar_prefetch=0,
            grid=(Dout // tn, nk),
            in_specs=[
                pl.BlockSpec((Bp, tk), lambda n, k: (0, k)),
                w_spec,
                pl.BlockSpec((1, tn), lambda n, k: (0, n)),
            ],
            out_specs=pl.BlockSpec((Bp, tn), lambda n, k: (0, n)),
            scratch_shapes=[pltpu.VMEM((Bp, tn), jnp.float32)],
        ),
        compiler_params=pltpu.CompilerParams(
            dimension_semantics=("parallel", "arbitrary"),
            vmem_limit_bytes=48 * 1024 * 1024),
    )(xp, w, b.reshape(1, Dout).astype(jnp.float32))
    return out[:B]


# ---------------------------------------------------------------------------
# Parameters (deterministic, synthetic) and full forward pass
# ---------------------------------------------------------------------------
def _fold_bn(gamma, beta, mean, var, eps=1e-5):
    s = gamma / jnp.sqrt(var + eps)
    return s, beta - mean * s


def init_params(key, feat_hw):
    Hf, Wf = feat_hw
    fc_in = 256 * Hf * Wf
    ks = list(jax.random.split(key, 16))
    p = {}

    def conv_block(kw, kbn, cin, cout):
        w = jax.random.normal(kw, (3, 3, cin, cout), jnp.float32) / jnp.sqrt(9.0 * cin)
        k1, k2, k3 = jax.random.split(kbn, 3)
        gamma = 1.0 + 0.1 * jax.random.normal(k1, (cout,), jnp.float32)
        beta = 0.1 * jax.random.normal(k2, (cout,), jnp.float32)
        mean = 0.1 * jax.random.normal(k3, (cout,), jnp.float32)
        var = jnp.ones((cout,), jnp.float32)
        s, b = _fold_bn(gamma, beta, mean, var)
        return w, s, b

    p["w1"], p["s1"], p["b1"] = conv_block(ks[0], ks[1], 1, 16)      # layer1
    p["w2"], p["s2"], p["b2"] = conv_block(ks[2], ks[3], 16, 64)     # layer2
    p["w3"], p["s3"], p["b3"] = conv_block(ks[4], ks[5], 64, 128)    # layer3 conv a
    p["w4"], p["s4"], p["b4"] = conv_block(ks[6], ks[7], 128, 256)   # layer3 conv b

    def fc(kw, kb, din, dout):
        w = jax.random.normal(kw, (din, dout), jnp.float32) / jnp.sqrt(float(din))
        b = 0.01 * jax.random.normal(kb, (dout,), jnp.float32)
        return w, b

    fw1_nchw, p["fb1"] = fc(ks[8], ks[9], fc_in, 2048)
    # Fold PyTorch's NCHW `view()` flatten order into fw1 once at init so the forward pass
    # can flatten the NHWC activations directly (no runtime activation transpose).
    fw1_nhwc = fw1_nchw.reshape(256, Hf, Wf, 2048).transpose(1, 2, 0, 3).reshape(fc_in, 2048)
    p["fw1"] = fw1_nhwc.astype(jnp.bfloat16)                # bf16 weight streaming
    fw2, p["fb2"] = fc(ks[10], ks[11], 2048, 1024)
    fw3, p["fb3"] = fc(ks[12], ks[13], 1024, 40)
    p["fw2"] = fw2.astype(jnp.bfloat16)
    p["fw3"] = fw3.astype(jnp.bfloat16)
    return p


def cnn_forward(p, x_nchw):
    x = jnp.transpose(x_nchw, (0, 2, 3, 1))                          # NCHW -> NHWC (C=1)
    x = conv3x3_bn_relu(x, p["w1"], p["s1"], p["b1"], pool=False)    # layer1   -> bf16
    x = conv3x3_bn_relu(x, p["w2"], p["s2"], p["b2"], pool=True)     # layer2   -> bf16
    x = conv3x3_bn_relu(x, p["w3"], p["s3"], p["b3"], pool=False)    # layer3 a -> bf16
    x = conv3x3_bn_relu(x, p["w4"], p["s4"], p["b4"], pool=True)     # layer3 b -> bf16
    x = x.reshape(x.shape[0], -1)       # NHWC flatten; NCHW view() order folded into fw1
    x = linear(x, p["fw1"], p["fb1"], activation="relu")
    x = linear(x, p["fw2"], p["fb2"], activation="relu")
    x = linear(x, p["fw3"], p["fb3"], activation="softmax")
    return x


# ---------------------------------------------------------------------------
# Pure-JAX reference (mirrors the kernel's bf16 precision; for correctness checks only)
# ---------------------------------------------------------------------------
def _ref_conv_bn_relu(x_nhwc, w, s, b, pool):
    wq = w.astype(jnp.bfloat16).astype(x_nhwc.dtype)   # same bf16-rounded weights as kernel
    y = jax.lax.conv_general_dilated(
        x_nhwc, wq, window_strides=(1, 1), padding="SAME",
        dimension_numbers=("NHWC", "HWIO", "NHWC"),
        preferred_element_type=jnp.float32,
        precision=jax.lax.Precision.HIGHEST)
    y = y * s.reshape(1, 1, 1, -1) + b.reshape(1, 1, 1, -1)
    y = jnp.maximum(y, 0.0)
    if pool:
        N, H, W, C = y.shape
        y = jnp.max(y.reshape(N, H // 2, 2, W // 2, 2, C), axis=(2, 4))
    return y.astype(jnp.bfloat16)


def _ref_linear(x, w, b, activation):
    y = jnp.dot(x.astype(w.dtype), w, preferred_element_type=jnp.float32) + b
    if activation == "relu":
        return jnp.maximum(y, 0.0).astype(jnp.bfloat16)
    if activation == "softmax":
        return jax.nn.softmax(y, axis=-1)
    return y


def cnn_forward_ref(p, x_nchw):
    x = jnp.transpose(x_nchw, (0, 2, 3, 1))
    x = _ref_conv_bn_relu(x, p["w1"], p["s1"], p["b1"], False)
    x = _ref_conv_bn_relu(x, p["w2"], p["s2"], p["b2"], True)
    x = _ref_conv_bn_relu(x, p["w3"], p["s3"], p["b3"], False)
    x = _ref_conv_bn_relu(x, p["w4"], p["s4"], p["b4"], True)
    x = x.reshape(x.shape[0], -1)
    x = _ref_linear(x, p["fw1"], p["fb1"], "relu")
    x = _ref_linear(x, p["fw2"], p["fb2"], "relu")
    x = _ref_linear(x, p["fw3"], p["fb3"], "softmax")
    return x


if __name__ == "__main__":
    # Structure-preserving small config: a 16x32 grayscale image so that
    # fc_in = 256 * (16//4) * (32//4) = 8192 (the real model uses 60x160 -> 256*15*40).
    B, H, W = 2, 16, 32
    key = jax.random.PRNGKey(0)
    k_params, k_x, k_u = jax.random.split(key, 3)
    params = init_params(k_params, feat_hw=(H // 4, W // 4))
    x = jax.random.normal(k_x, (B, 1, H, W), jnp.float32)            # NCHW like PyTorch

    # --- unit checks: force row tiling (R > 1) so the in-kernel halo paths are exercised ---
    # path A (Cin==1, lane-dense (H, W) layout): H=32, block_rows=16 -> 2 row blocks.
    xa = jax.random.normal(k_u, (B, 32, 32), jnp.float32)
    ya = conv3x3_bn_relu(xa, params["w1"], params["s1"], params["b1"],
                         pool=False, block_rows=16)
    ya_ref = _ref_conv_bn_relu(xa[..., None], params["w1"], params["s1"], params["b1"], False)
    assert bool(jnp.allclose(ya.astype(jnp.float32), ya_ref.astype(jnp.float32),
                             atol=5e-2, rtol=5e-2))

    # path B (bf16 im2col + fused pool): conv4 weights (128->256), block_rows=8 -> 2 blocks.
    xb = (0.5 * jax.random.normal(k_u, (B, 16, 32, 128), jnp.float32)).astype(jnp.bfloat16)
    yb = conv3x3_bn_relu(xb, params["w4"], params["s4"], params["b4"],
                         pool=True, block_rows=8)
    yb_ref = _ref_conv_bn_relu(xb, params["w4"], params["s4"], params["b4"], True)
    assert bool(jnp.allclose(yb.astype(jnp.float32), yb_ref.astype(jnp.float32),
                             atol=5e-2, rtol=5e-2))

    # --- full forward pass ---
    out = jax.jit(cnn_forward)(params, x)
    out = jax.block_until_ready(out)
    ref = cnn_forward_ref(params, x)

    assert out.shape == (B, 40), out.shape
    assert bool(jnp.all(jnp.abs(jnp.sum(out, axis=-1) - 1.0) < 1e-4))   # softmax rows sum to 1
    assert bool(jnp.allclose(out, ref, atol=5e-3, rtol=5e-2))           # matches bf16 reference
    print("KERNEL_OK")
</pallas_src>

<mosaic_0001>
module attributes {stable_mosaic.version = 11 : i64} {
  func.func @_conv_bn_relu_kernel(%arg0: i32, %arg1: i32, %arg2: memref<1x16x32xf32, #tpu.memory_space<vmem>>, %arg3: memref<1x16x32xf32, #tpu.memory_space<vmem>>, %arg4: memref<1x16x32xf32, #tpu.memory_space<vmem>>, %arg5: memref<9x16xbf16, #tpu.memory_space<vmem>>, %arg6: memref<1x16xf32, #tpu.memory_space<vmem>>, %arg7: memref<1x16xf32, #tpu.memory_space<vmem>>, %arg8: memref<1x16x512xbf16, #tpu.memory_space<vmem>>, %arg9: memref<18x34xf32, #tpu.memory_space<vmem>>) attributes {dimension_semantics = [#tpu.dimension_semantics<parallel>, #tpu.dimension_semantics<parallel>], iteration_bounds = array<i64: 2, 2>, scalar_prefetch = 0 : i64, scratch_operands = 1 : i64, tpu.core_type = #tpu.core_type<tc>, window_params = [{transform_indices = @transform_0, window_bounds = array<i64: 1, 16, 32>}, {transform_indices = @transform_1, window_bounds = array<i64: 1, 16, 32>}, {transform_indices = @transform_2, window_bounds = array<i64: 1, 16, 32>}, {pipeline_mode = #tpu.pipeline_mode<synchronous>, transform_indices = @transform_3, window_bounds = array<i64: 9, 16>}, {pipeline_mode = #tpu.pipeline_mode<synchronous>, transform_indices = @transform_4, window_bounds = array<i64: 1, 16>}, {pipeline_mode = #tpu.pipeline_mode<synchronous>, transform_indices = @transform_5, window_bounds = array<i64: 1, 16>}, {transform_indices = @transform_6, window_bounds = array<i64: 1, 16, 512>}]} {
    %c0 = arith.constant 0 : index
    %c0_0 = arith.constant 0 : index
    %c0_1 = arith.constant 0 : index
    %0 = vector.load %arg2[%c0, %c0_0, %c0_1] : memref<1x16x32xf32, #tpu.memory_space<vmem>>, vector<1x16x32xf32>
    %1 = vector.shape_cast %0 : vector<1x16x32xf32> to vector<16x32xf32>
    %c1 = arith.constant 1 : index
    %c1_2 = arith.constant 1 : index
    %2 = vector.load %arg9[%c1, %c1_2] : memref<18x34xf32, #tpu.memory_space<vmem>>, vector<16x32xf32>
    tpu.vector_store %arg9[%c1, %c1_2], %1 {strides = array<i32>} : memref<18x34xf32, #tpu.memory_space<vmem>>, vector<16x32xf32>,
    %c0_i32 = arith.constant 0 : i32
    %3 = arith.cmpi sgt, %arg1, %c0_i32 : i32
    %c0_3 = arith.constant 0 : index
    %c15 = arith.constant 15 : index
    %c0_4 = arith.constant 0 : index
    %4 = vector.load %arg3[%c0_3, %c15, %c0_4] : memref<1x16x32xf32, #tpu.memory_space<vmem>>, vector<1x1x32xf32>
    %5 = vector.shape_cast %4 : vector<1x1x32xf32> to vector<1x32xf32>
    %cst = arith.constant 0.000000e+00 : f32
    %6 = vector.broadcast %cst : f32 to vector<1x32xf32>
    %7 = arith.select %3, %5, %6 : vector<1x32xf32>
    %c1_i32 = arith.constant 1 : i32
    %8 = arith.cmpi slt, %arg1, %c1_i32 : i32
    %c0_5 = arith.constant 0 : index
    %c0_6 = arith.constant 0 : index
    %c0_7 = arith.constant 0 : index
    %9 = vector.load %arg4[%c0_5, %c0_6, %c0_7] : memref<1x16x32xf32, #tpu.memory_space<vmem>>, vector<1x1x32xf32>
    %10 = vector.shape_cast %9 : vector<1x1x32xf32> to vector<1x32xf32>
    %cst_8 = arith.constant 0.000000e+00 : f32
    %11 = vector.broadcast %cst_8 : f32 to vector<1x32xf32>
    %12 = arith.select %8, %10, %11 : vector<1x32xf32>
    %c0_9 = arith.constant 0 : index
    %c1_10 = arith.constant 1 : index
    %13 = vector.load %arg9[%c0_9, %c1_10] : memref<18x34xf32, #tpu.memory_space<vmem>>, vector<1x32xf32>
    tpu.vector_store %arg9[%c0_9, %c1_10], %7 {strides = array<i32>} : memref<18x34xf32, #tpu.memory_space<vmem>>, vector<1x32xf32>,
    %c17 = arith.constant 17 : index
    %c1_11 = arith.constant 1 : index
    %14 = vector.load %arg9[%c17, %c1_11] : memref<18x34xf32, #tpu.memory_space<vmem>>, vector<1x32xf32>
    tpu.vector_store %arg9[%c17, %c1_11], %12 {strides = array<i32>} : memref<18x34xf32, #tpu.memory_space<vmem>>, vector<1x32xf32>,
    %cst_12 = arith.constant 0.000000e+00 : f32
    %15 = vector.broadcast %cst_12 : f32 to vector<18x1xf32>
    %c0_13 = arith.constant 0 : index
    %c0_14 = arith.constant 0 : index
    %16 = vector.load %arg9[%c0_13, %c0_14] : memref<18x34xf32, #tpu.memory_space<vmem>>, vector<18x1xf32>
    tpu.vector_store %arg9[%c0_13, %c0_14], %15 {strides = array<i32>} : memref<18x34xf32, #tpu.memory_space<vmem>>, vector<18x1xf32>,
    %cst_15 = arith.constant 0.000000e+00 : f32
    %17 = vector.broadcast %cst_15 : f32 to vector<18x1xf32>
    %c0_16 = arith.constant 0 : index
    %c33 = arith.constant 33 : index
    %18 = vector.load %arg9[%c0_16, %c33] : memref<18x34xf32, #tpu.memory_space<vmem>>, vector<18x1xf32>
    tpu.vector_store %arg9[%c0_16, %c33], %17 {strides = array<i32>} : memref<18x34xf32, #tpu.memory_space<vmem>>, vector<18x1xf32>,
    %cst_17 = arith.constant 0.000000e+00 : f32
    %19 = vector.broadcast %cst_17 : f32 to vector<16x32x16xf32>
    %c0_18 = arith.constant 0 : index
    %c0_19 = arith.constant 0 : index
    %20 = vector.load %arg9[%c0_18, %c0_19] : memref<18x34xf32, #tpu.memory_space<vmem>>, vector<16x32xf32>
    %c0_20 = arith.constant 0 : index
    %c0_21 = arith.constant 0 : index
    %21 = vector.load %arg5[%c0_20, %c0_21] : memref<9x16xbf16, #tpu.memory_space<vmem>>, vector<1x16xbf16>
    %22 = arith.extf %21 : vector<1x16xbf16> to vector<1x16xf32>
    %23 = vector.shape_cast %22 : vector<1x16xf32> to vector<1x1x16xf32>
    %24 = vector.shape_cast %20 : vector<16x32xf32> to vector<16x32x1xf32>
    %25 = vector.broadcast %24 : vector<16x32x1xf32> to vector<16x32x16xf32>
    %26 = vector.broadcast %23 : vector<1x1x16xf32> to vector<16x32x16xf32>
    %27 = arith.mulf %25, %26 : vector<16x32x16xf32>
    %28 = arith.addf %19, %27 : vector<16x32x16xf32>
    %c0_22 = arith.constant 0 : index
    %c1_23 = arith.constant 1 : index
    %29 = vector.load %arg9[%c0_22, %c1_23] : memref<18x34xf32, #tpu.memory_space<vmem>>, vector<16x32xf32>
    %c1_24 = arith.constant 1 : index
    %c0_25 = arith.constant 0 : index
    %30 = vector.load %arg5[%c1_24, %c0_25] : memref<9x16xbf16, #tpu.memory_space<vmem>>, vector<1x16xbf16>
    %31 = arith.extf %30 : vector<1x16xbf16> to vector<1x16xf32>
    %32 = vector.shape_cast %31 : vector<1x16xf32> to vector<1x1x16xf32>
    %33 = vector.shape_cast %29 : vector<16x32xf32> to vector<16x32x1xf32>
    %34 = vector.broadcast %33 : vector<16x32x1xf32> to vector<16x32x16xf32>
    %35 = vector.broadcast %32 : vector<1x1x16xf32> to vector<16x32x16xf32>
    %36 = arith.mulf %34, %35 : vector<16x32x16xf32>
    %37 = arith.addf %28, %36 : vector<16x32x16xf32>
    %c0_26 = arith.constant 0 : index
    %c2 = arith.constant 2 : index
    %38 = vector.load %arg9[%c0_26, %c2] : memref<18x34xf32, #tpu.memory_space<vmem>>, vector<16x32xf32>
    %c2_27 = arith.constant 2 : index
    %c0_28 = arith.constant 0 : index
    %39 = vector.load %arg5[%c2_27, %c0_28] : memref<9x16xbf16, #tpu.memory_space<vmem>>, vector<1x16xbf16>
    %40 = arith.extf %39 : vector<1x16xbf16> to vector<1x16xf32>
    %41 = vector.shape_cast %40 : vector<1x16xf32> to vector<1x1x16xf32>
    %42 = vector.shape_cast %38 : vector<16x32xf32> to vector<16x32x1xf32>
    %43 = vector.broadcast %42 : vector<16x32x1xf32> to vector<16x32x16xf32>
    %44 = vector.broadcast %41 : vector<1x1x16xf32> to vector<16x32x16xf32>
    %45 = arith.mulf %43, %44 : vector<16x32x16xf32>
    %46 = arith.addf %37, %45 : vector<16x32x16xf32>
    %c1_29 = arith.constant 1 : index
    %c0_30 = arith.constant 0 : index
    %47 = vector.load %arg9[%c1_29, %c0_30] : memref<18x34xf32, #tpu.memory_space<vmem>>, vector<16x32xf32>
    %c3 = arith.constant 3 : index
    %c0_31 = arith.constant 0 : index
    %48 = vector.load %arg5[%c3, %c0_31] : memref<9x16xbf16, #tpu.memory_space<vmem>>, vector<1x16xbf16>
    %49 = arith.extf %48 : vector<1x16xbf16> to vector<1x16xf32>
    %50 = vector.shape_cast %49 : vector<1x16xf32> to vector<1x1x16xf32>
    %51 = vector.shape_cast %47 : vector<16x32xf32> to vector<16x32x1xf32>
    %52 = vector.broadcast %51 : vector<16x32x1xf32> to vector<16x32x16xf32>
    %53 = vector.broadcast %50 : vector<1x1x16xf32> to vector<16x32x16xf32>
    %54 = arith.mulf %52, %53 : vector<16x32x16xf32>
    %55 = arith.addf %46, %54 : vector<16x32x16xf32>
    %c1_32 = arith.constant 1 : index
    %c1_33 = arith.constant 1 : index
    %56 = vector.load %arg9[%c1_32, %c1_33] : memref<18x34xf32, #tpu.memory_space<vmem>>, vector<16x32xf32>
    %c4 = arith.constant 4 : index
    %c0_34 = arith.constant 0 : index
    %57 = vector.load %arg5[%c4, %c0_34] : memref<9x16xbf16, #tpu.memory_space<vmem>>, vector<1x16xbf16>
    %58 = arith.extf %57 : vector<1x16xbf16> to vector<1x16xf32>
    %59 = vector.shape_cast %58 : vector<1x16xf32> to vector<1x1x16xf32>
    %60 = vector.shape_cast %56 : vector<16x32xf32> to vector<16x32x1xf32>
    %61 = vector.broadcast %60 : vector<16x32x1xf32> to vector<16x32x16xf32>
    %62 = vector.broadcast %59 : vector<1x1x16xf32> to vector<16x32x16xf32>
    %63 = arith.mulf %61, %62 : vector<16x32x16xf32>
    %64 = arith.addf %55, %63 : vector<16x32x16xf32>
    %c1_35 = arith.constant 1 : index
    %c2_36 = arith.constant 2 : index
    %65 = vector.load %arg9[%c1_35, %c2_36] : memref<18x34xf32, #tpu.memory_space<vmem>>, vector<16x32xf32>
    %c5 = arith.constant 5 : index
    %c0_37 = arith.constant 0 : index
    %66 = vector.load %arg5[%c5, %c0_37] : memref<9x16xbf16, #tpu.memory_space<vmem>>, vector<1x16xbf16>
    %67 = arith.extf %66 : vector<1x16xbf16> to vector<1x16xf32>
    %68 = vector.shape_cast %67 : vector<1x16xf32> to vector<1x1x16xf32>
    %69 = vector.shape_cast %65 : vector<16x32xf32> to vector<16x32x1xf32>
    %70 = vector.broadcast %69 : vector<16x32x1xf32> to vector<16x32x16xf32>
    %71 = vector.broadcast %68 : vector<1x1x16xf32> to vector<16x32x16xf32>
    %72 = arith.mulf %70, %71 : vector<16x32x16xf32>
    %73 = arith.addf %64, %72 : vector<16x32x16xf32>
    %c2_38 = arith.constant 2 : index
    %c0_39 = arith.constant 0 : index
    %74 = vector.load %arg9[%c2_38, %c0_39] : memref<18x34xf32, #tpu.memory_space<vmem>>, vector<16x32xf32>
    %c6 = arith.constant 6 : index
    %c0_40 = arith.constant 0 : index
    %75 = vector.load %arg5[%c6, %c0_40] : memref<9x16xbf16, #tpu.memory_space<vmem>>, vector<1x16xbf16>
    %76 = arith.extf %75 : vector<1x16xbf16> to vector<1x16xf32>
    %77 = vector.shape_cast %76 : vector<1x16xf32> to vector<1x1x16xf32>
    %78 = vector.shape_cast %74 : vector<16x32xf32> to vector<16x32x1xf32>
    %79 = vector.broadcast %78 : vector<16x32x1xf32> to vector<16x32x16xf32>
    %80 = vector.broadcast %77 : vector<1x1x16xf32> to vector<16x32x16xf32>
    %81 = arith.mulf %79, %80 : vector<16x32x16xf32>
    %82 = arith.addf %73, %81 : vector<16x32x16xf32>
    %c2_41 = arith.constant 2 : index
    %c1_42 = arith.constant 1 : index
    %83 = vector.load %arg9[%c2_41, %c1_42] : memref<18x34xf32, #tpu.memory_space<vmem>>, vector<16x32xf32>
    %c7 = arith.constant 7 : index
    %c0_43 = arith.constant 0 : index
    %84 = vector.load %arg5[%c7, %c0_43] : memref<9x16xbf16, #tpu.memory_space<vmem>>, vector<1x16xbf16>
    %85 = arith.extf %84 : vector<1x16xbf16> to vector<1x16xf32>
    %86 = vector.shape_cast %85 : vector<1x16xf32> to vector<1x1x16xf32>
    %87 = vector.shape_cast %83 : vector<16x32xf32> to vector<16x32x1xf32>
    %88 = vector.broadcast %87 : vector<16x32x1xf32> to vector<16x32x16xf32>
    %89 = vector.broadcast %86 : vector<1x1x16xf32> to vector<16x32x16xf32>
    %90 = arith.mulf %88, %89 : vector<16x32x16xf32>
    %91 = arith.addf %82, %90 : vector<16x32x16xf32>
    %c2_44 = arith.constant 2 : index
    %c2_45 = arith.constant 2 : index
    %92 = vector.load %arg9[%c2_44, %c2_45] : memref<18x34xf32, #tpu.memory_space<vmem>>, vector<16x32xf32>
    %c8 = arith.constant 8 : index
    %c0_46 = arith.constant 0 : index
    %93 = vector.load %arg5[%c8, %c0_46] : memref<9x16xbf16, #tpu.memory_space<vmem>>, vector<1x16xbf16>
    %94 = arith.extf %93 : vector<1x16xbf16> to vector<1x16xf32>
    %95 = vector.shape_cast %94 : vector<1x16xf32> to vector<1x1x16xf32>
    %96 = vector.shape_cast %92 : vector<16x32xf32> to vector<16x32x1xf32>
    %97 = vector.broadcast %96 : vector<16x32x1xf32> to vector<16x32x16xf32>
    %98 = vector.broadcast %95 : vector<1x1x16xf32> to vector<16x32x16xf32>
    %99 = arith.mulf %97, %98 : vector<16x32x16xf32>
    %100 = arith.addf %91, %99 : vector<16x32x16xf32>
    %c0_47 = arith.constant 0 : index
    %c0_48 = arith.constant 0 : index
    %101 = vector.load %arg6[%c0_47, %c0_48] : memref<1x16xf32, #tpu.memory_space<vmem>>, vector<1x16xf32>
    %102 = vector.shape_cast %101 : vector<1x16xf32> to vector<1x1x16xf32>
    %103 = vector.broadcast %102 : vector<1x1x16xf32> to vector<16x32x16xf32>
    %104 = arith.mulf %100, %103 : vector<16x32x16xf32>
    %c0_49 = arith.constant 0 : index
    %c0_50 = arith.constant 0 : index
    %105 = vector.load %arg7[%c0_49, %c0_50] : memref<1x16xf32, #tpu.memory_space<vmem>>, vector<1x16xf32>
    %106 = vector.shape_cast %105 : vector<1x16xf32> to vector<1x1x16xf32>
    %107 = vector.broadcast %106 : vector<1x1x16xf32> to vector<16x32x16xf32>
    %108 = arith.addf %104, %107 : vector<16x32x16xf32>
    %cst_51 = arith.constant 0.000000e+00 : f32
    %109 = vector.broadcast %cst_51 : f32 to vector<16x32x16xf32>
    %110 = arith.maximumf %108, %109 : vector<16x32x16xf32>
    %111 = vector.shape_cast %110 : vector<16x32x16xf32> to vector<16x512xf32>
    %112 = arith.truncf %111 : vector<16x512xf32> to vector<16x512xbf16>
    %c0_52 = arith.constant 0 : index
    %c0_53 = arith.constant 0 : index
    %c0_54 = arith.constant 0 : index
    %113 = vector.load %arg8[%c0_52, %c0_53, %c0_54] : memref<1x16x512xbf16, #tpu.memory_space<vmem>>, vector<1x16x512xbf16>
    %114 = vector.shape_cast %113 : vector<1x16x512xbf16> to vector<16x512xbf16>
    %115 = vector.shape_cast %112 : vector<16x512xbf16> to vector<1x16x512xbf16>
    tpu.vector_store %arg8[%c0_52, %c0_53, %c0_54], %115 {strides = array<i32>} : memref<1x16x512xbf16, #tpu.memory_space<vmem>>, vector<1x16x512xbf16>,
    return
  }
  func.func @transform_0(%arg0: i32, %arg1: i32) -> (i32, i32, i32) {
    %c0_i32 = arith.constant 0 : i32
    %c0_i32_0 = arith.constant 0 : i32
    return %arg0, %arg1, %c0_i32 : i32, i32, i32
  }
  func.func @transform_1(%arg0: i32, %arg1: i32) -> (i32, i32, i32) {
    %c1_i32 = arith.constant 1 : i32
    %0 = arith.subi %arg1, %c1_i32 : i32
    %c0_i32 = arith.constant 0 : i32
    %1 = arith.maxsi %0, %c0_i32 : i32
    %c0_i32_0 = arith.constant 0 : i32
    %c0_i32_1 = arith.constant 0 : i32
    return %arg0, %1, %c0_i32_0 : i32, i32, i32
  }
  func.func @transform_2(%arg0: i32, %arg1: i32) -> (i32, i32, i32) {
    %c1_i32 = arith.constant 1 : i32
    %0 = arith.addi %arg1, %c1_i32 : i32
    %c1_i32_0 = arith.constant 1 : i32
    %1 = arith.minsi %0, %c1_i32_0 : i32
    %c0_i32 = arith.constant 0 : i32
    %c0_i32_1 = arith.constant 0 : i32
    return %arg0, %1, %c0_i32 : i32, i32, i32
  }
  func.func @transform_3(%arg0: i32, %arg1: i32) -> (i32, i32) {
    %c0_i32 = arith.constant 0 : i32
    %c0_i32_0 = arith.constant 0 : i32
    %c0_i32_1 = arith.constant 0 : i32
    return %c0_i32, %c0_i32_0 : i32, i32
  }
  func.func @transform_4(%arg0: i32, %arg1: i32) -> (i32, i32) {
    %c0_i32 = arith.constant 0 : i32
    %c0_i32_0 = arith.constant 0 : i32
    %c0_i32_1 = arith.constant 0 : i32
    return %c0_i32, %c0_i32_0 : i32, i32
  }
  func.func @transform_5(%arg0: i32, %arg1: i32) -> (i32, i32) {
    %c0_i32 = arith.constant 0 : i32
    %c0_i32_0 = arith.constant 0 : i32
    %c0_i32_1 = arith.constant 0 : i32
    return %c0_i32, %c0_i32_0 : i32, i32
  }
  func.func @transform_6(%arg0: i32, %arg1: i32) -> (i32, i32, i32) {
    %c0_i32 = arith.constant 0 : i32
    %c0_i32_0 = arith.constant 0 : i32
    return %arg0, %arg1, %c0_i32 : i32, i32, i32
  }
}

</mosaic_0001>

<llo_original>
// kernel: tpu_custom_call.1
$region0: #{tpu_custom_call.1}
  #allocation0 [shape = 'u32[]', space=smem, size = 0x4, offset = 0x4, fixed_abs, tag = 'smem constant byte address 0x4 - core index']
  #allocation1 [shape = 'u32[144,128]{1,0:T(1,128)}', space=vmem, size = 0x12000, scoped, tag = 'internal scratch']
  #allocation2 [shape = 'f32[18,34]{1,0:T(8,128)}', space=vmem, size = 0x3000, scoped, tag = 'scratch operand']
  %s0 = inlined_call_operand.hbm [shape: f32[2,32,32], index: 0, kind: input, shape index: {}]
  %s1 = inlined_call_operand.hbm [shape: f32[2,32,32], index: 1, kind: input, shape index: {}]
  %s2 = inlined_call_operand.hbm [shape: f32[2,32,32], index: 2, kind: input, shape index: {}]
  %s3 = inlined_call_operand.vmem [shape: bf16[9,16], index: 3, kind: input, shape index: {}]
  %s4 = inlined_call_operand.vmem [shape: f32[1,16], index: 4, kind: input, shape index: {}]
  %s5 = inlined_call_operand.vmem [shape: f32[1,16], index: 5, kind: input, shape index: {}]
  %s6 = inlined_call_operand.hbm [shape: bf16[2,32,512], index: 6, kind: output, shape index: {}]
  %s7 = sld [smem:[#allocation0]]
  $region69: #{tpu_custom_call.1} parent=0
    _
  %s9 = ssub.s32 1, %s7
  %s10 = scalar_select 0, %s9, %s7
  $region1: #{tpu_custom_call.1} parent=0
    #allocation3 [shape = 'u8[16384]{0}', space=vmem, size = 0x4000, scoped, tag = 'input window, operand 0']
    #allocation4 [shape = 's32[2]{0}', space=sflag, size = 0x8, scoped, tag = 'scoped memory for tpu_custom_call.1']
    #allocation5 [shape = 's32[2]{0}', space=sflag, size = 0x8, scoped, tag = 'scoped memory for tpu_custom_call.1']
    #allocation6 [shape = 'u8[16384]{0}', space=vmem, size = 0x4000, scoped, tag = 'input window, operand 1']
    #allocation7 [shape = 's32[2]{0}', space=sflag, size = 0x8, scoped, tag = 'scoped memory for tpu_custom_call.1']
    #allocation8 [shape = 'u8[16384]{0}', space=vmem, size = 0x4000, scoped, tag = 'input window, operand 2']
    #allocation9 [shape = 'u8[32768]{0}', space=vmem, size = 0x8000, scoped, tag = 'output window, operand 0']
    %11 = vsyncpa [#allocation4], 0
    %s12 = scalar_lea.sflag [#allocation4], 1
    %13 = vsyncpa %s12, 0
    %14 = vsyncpa [#allocation7], 0
    %s15 = scalar_lea.sflag [#allocation7], 1
    %16 = vsyncpa %s15, 0
    %17 = vsyncpa [#allocation5], 0
    %s18 = scalar_lea.sflag [#allocation5], 1
    %19 = vsyncpa %s18, 0
    loop: start=0, step=1, limit=6
    $region2: #{tpu_custom_call.1} parent=1 // loop_pre_header
      _
    $region3: #{tpu_custom_call.1} parent=1 // loop_header
      %s21 = sphi 0, %s25
      %p22 = scmp.ge.s32.totalorder %s21, 6
      %s28 = sphi 0, %s40
      %s29 = sphi 0, %s36
      %s30 = sphi 0, %s28
      %s31 = sphi 0, %s29
      %s32 = sphi 0, %s30
      %s33 = sphi 0, %s31
      %s45 = sphi 0, %s47
      %s48 = sphi 0, %s45
      %s49 = sphi 0, %s48
      %s65 = sphi 0, %s49
      %s79 = sphi 0, %s81
      %s82 = sphi 0, %s79
      %s83 = sphi 0, %s82
      %s99 = sphi 0, %s83
      %s113 = sphi 0, %s115
      %s116 = sphi 0, %s113
      %s117 = sphi 0, %s116
      %s133 = sphi 0, %s117
      %s137 = sphi 0, %s137
      %s139 = sphi 0, %s137
      %s140 = sphi 0, %s139
      %s154 = sphi 0, %s140
      %s158 = sphi 0, %s158
      %s160 = sphi 0, %s158
      %s161 = sphi 0, %s160
      %s175 = sphi 0, %s161
      %s179 = sphi 0, %s179
      %s181 = sphi 0, %s179
      %s182 = sphi 0, %s181
      %s196 = sphi 0, %s182
      %s204 = sphi 0, %s206
      %s207 = sphi 0, %s204
      %s208 = sphi 0, %s207
      %s224 = sphi 0, %s208
    $region4: #{tpu_custom_call.1} parent=1 // loop_header_branch
      %24 = sbr.rel (%p22) target = $region8
    $region5: #{tpu_custom_call.1} parent=1 // loop_body
      %s26 = ssub.s32 %s21, 1
      %s27 = ssub.s32 %s21, 2
      %s34 = sadd.s32 1, %s29
      %p35 = scmp.ge.s32.totalorder %s34, 2
      %s36 = scalar_select %p35, 0, %s34
      %s37 = sadd.s32 1, %s28
      %s38 = scalar_select %p35, %s37, %s28
      %p39 = scmp.ge.s32.totalorder %s38, 2
      %s40 = scalar_select %p39, 0, %s38
      %s41 = ssub.s32 %s28, %s40
      %s42 = ssub.s32 %s29, %s36
      %s43 = sor.u32 %s41, %s42
      %p44 = scmp.eq.s32.totalorder %s43, 0
      %s46 = sadd.s32 %s45, 1
      %s47 = scalar_select %p44, %s45, %s46
      %p50 = pneg %p44
      %p51 = scmp.eq.s32.totalorder %s21, 3
      %p52 = por %p50, %p51
      %p53 = scmp.ne.s32.totalorder %s45, %s48
      %p54 = scmp.eq.s32.totalorder %s21, 0
      %p55 = por %p53, %p54
      %p56 = scmp.ne.s32.totalorder %s45, %s48
      %p57 = scmp.eq.s32.totalorder %s26, 3
      %p58 = por %p56, %p57
      %p59 = scmp.ne.s32.totalorder %s48, %s49
      %p60 = scmp.eq.s32.totalorder %s26, 0
      %p61 = por %p59, %p60
      %p62 = scmp.ne.s32.totalorder %s48, %s49
      %p63 = scmp.eq.s32.totalorder %s27, 3
      %p64 = por %p62, %p63
      %p66 = scmp.ne.s32.totalorder %s49, %s65
      %p67 = scmp.eq.s32.totalorder %s27, 0
      %p68 = por %p66, %p67
      %s69 = ssub.s32 %s29, 1
      %p70 = scmp.gt.s32.totalorder %s69, 0
      %s71 = scalar_select %p70, %s69, 0
      %s72 = ssub.s32 %s36, 1
      %p73 = scmp.gt.s32.totalorder %s72, 0
      %s74 = scalar_select %p73, %s72, 0
      %s75 = ssub.s32 %s28, %s40
      %s76 = ssub.s32 %s71, %s74
      %s77 = sor.u32 %s75, %s76
      %p78 = scmp.eq.s32.totalorder %s77, 0
      %s80 = sadd.s32 %s79, 1
      %s81 = scalar_select %p78, %s79, %s80
      %p84 = pneg %p78
      %p85 = scmp.eq.s32.totalorder %s21, 3
      %p86 = por %p84, %p85
      %p87 = scmp.ne.s32.totalorder %s79, %s82
      %p88 = scmp.eq.s32.totalorder %s21, 0
      %p89 = por %p87, %p88
      %p90 = scmp.ne.s32.totalorder %s79, %s82
      %p91 = scmp.eq.s32.totalorder %s26, 3
      %p92 = por %p90, %p91
      %p93 = scmp.ne.s32.totalorder %s82, %s83
      %p94 = scmp.eq.s32.totalorder %s26, 0
      %p95 = por %p93, %p94
      %p96 = scmp.ne.s32.totalorder %s82, %s83
      %p97 = scmp.eq.s32.totalorder %s27, 3
      %p98 = por %p96, %p97
      %p100 = scmp.ne.s32.totalorder %s83, %s99
      %p101 = scmp.eq.s32.totalorder %s27, 0
      %p102 = por %p100, %p101
      %s103 = sadd.s32 %s29, 1
      %p104 = scmp.lt.s32.totalorder %s103, 1
      %s105 = scalar_select %p104, %s103, 1
      %s106 = sadd.s32 %s36, 1
      %p107 = scmp.lt.s32.totalorder %s106, 1
      %s108 = scalar_select %p107, %s106, 1
      %s109 = ssub.s32 %s28, %s40
      %s110 = ssub.s32 %s105, %s108
      %s111 = sor.u32 %s109, %s110
      %p112 = scmp.eq.s32.totalorder %s111, 0
      %s114 = sadd.s32 %s113, 1
      %s115 = scalar_select %p112, %s113, %s114
      %p118 = pneg %p112
      %p119 = scmp.eq.s32.totalorder %s21, 3
      %p120 = por %p118, %p119
      %p121 = scmp.ne.s32.totalorder %s113, %s116
      %p122 = scmp.eq.s32.totalorder %s21, 0
      %p123 = por %p121, %p122
      %p124 = scmp.ne.s32.totalorder %s113, %s116
      %p125 = scmp.eq.s32.totalorder %s26, 3
      %p126 = por %p124, %p125
      %p127 = scmp.ne.s32.totalorder %s116, %s117
      %p128 = scmp.eq.s32.totalorder %s26, 0
      %p129 = por %p127, %p128
      %p130 = scmp.ne.s32.totalorder %s116, %s117
      %p131 = scmp.eq.s32.totalorder %s27, 3
      %p132 = por %p130, %p131
      %p134 = scmp.ne.s32.totalorder %s117, %s133
      %p135 = scmp.eq.s32.totalorder %s27, 0
      %p136 = por %p134, %p135
      %s138 = sadd.s32 %s137, 1
      %p141 = scmp.eq.s32.totalorder %s21, 3
      %p142 = scmp.ne.s32.totalorder %s137, %s139
      %p143 = scmp.eq.s32.totalorder %s21, 0
      %p144 = por %p142, %p143
      %p145 = scmp.ne.s32.totalorder %s137, %s139
      %p146 = scmp.eq.s32.totalorder %s26, 3
      %p147 = por %p145, %p146
      %p148 = scmp.ne.s32.totalorder %s139, %s140
      %p149 = scmp.eq.s32.totalorder %s26, 0
      %p150 = por %p148, %p149
      %p151 = scmp.ne.s32.totalorder %s139, %s140
      %p152 = scmp.eq.s32.totalorder %s27, 3
      %p153 = por %p151, %p152
      %p155 = scmp.ne.s32.totalorder %s140, %s154
      %p156 = scmp.eq.s32.totalorder %s27, 0
      %p157 = por %p155, %p156
      %s159 = sadd.s32 %s158, 1
      %p162 = scmp.eq.s32.totalorder %s21, 3
      %p163 = scmp.ne.s32.totalorder %s158, %s160
      %p164 = scmp.eq.s32.totalorder %s21, 0
      %p165 = por %p163, %p164
      %p166 = scmp.ne.s32.totalorder %s158, %s160
      %p167 = scmp.eq.s32.totalorder %s26, 3
      %p168 = por %p166, %p167
      %p169 = scmp.ne.s32.totalorder %s160, %s161
      %p170 = scmp.eq.s32.totalorder %s26, 0
      %p171 = por %p169, %p170
      %p172 = scmp.ne.s32.totalorder %s160, %s161
      %p173 = scmp.eq.s32.totalorder %s27, 3
      %p174 = por %p172, %p173
      %p176 = scmp.ne.s32.totalorder %s161, %s175
      %p177 = scmp.eq.s32.totalorder %s27, 0
      %p178 = por %p176, %p177
      %s180 = sadd.s32 %s179, 1
      %p183 = scmp.eq.s32.totalorder %s21, 3
      %p184 = scmp.ne.s32.totalorder %s179, %s181
      %p185 = scmp.eq.s32.totalorder %s21, 0
      %p186 = por %p184, %p185
      %p187 = scmp.ne.s32.totalorder %s179, %s181
      %p188 = scmp.eq.s32.totalorder %s26, 3
      %p189 = por %p187, %p188
      %p190 = scmp.ne.s32.totalorder %s181, %s182
      %p191 = scmp.eq.s32.totalorder %s26, 0
      %p192 = por %p190, %p191
      %p193 = scmp.ne.s32.totalorder %s181, %s182
      %p194 = scmp.eq.s32.totalorder %s27, 3
      %p195 = por %p193, %p194
      %p197 = scmp.ne.s32.totalorder %s182, %s196
      %p198 = scmp.eq.s32.totalorder %s27, 0
      %p199 = por %p197, %p198
      %s200 = ssub.s32 %s28, %s40
      %s201 = ssub.s32 %s29, %s36
      %s202 = sor.u32 %s200, %s201
      %p203 = scmp.eq.s32.totalorder %s202, 0
      %s205 = sadd.s32 %s204, 1
      %s206 = scalar_select %p203, %s204, %s205
      %p209 = pneg %p203
      %p210 = scmp.eq.s32.totalorder %s21, 3
      %p211 = por %p209, %p210
      %p212 = scmp.ne.s32.totalorder %s204, %s207
      %p213 = scmp.eq.s32.totalorder %s21, 0
      %p214 = por %p212, %p213
      %p215 = scmp.ne.s32.totalorder %s204, %s207
      %p216 = scmp.eq.s32.totalorder %s26, 3
      %p217 = por %p215, %p216
      %p218 = scmp.ne.s32.totalorder %s207, %s208
      %p219 = scmp.eq.s32.totalorder %s26, 0
      %p220 = por %p218, %p219
      %p221 = scmp.ne.s32.totalorder %s207, %s208
      %p222 = scmp.eq.s32.totalorder %s27, 3
      %p223 = por %p221, %p222
      %p225 = scmp.ne.s32.totalorder %s208, %s224
      %p226 = scmp.eq.s32.totalorder %s27, 0
      %p227 = por %p225, %p226
      %p228 = scmp.le.s32.totalorder 1, %s21
      %p229 = scmp.lt.s32.totalorder %s21, 5
      %p230 = pnand %p228, %p229
      %p231 = pneg %p230
      // Predicated region
      $region9: #{tpu_custom_call.1} parent=5 // pred_check
        _
      $region10: #{tpu_custom_call.1} parent=5 // pred_check_branch
        %233 = sbr.rel (%p230) target = $region12
      $region11: #{tpu_custom_call.1} parent=5 // pred_region
        %s234 = ssub.s32 %s21, 1
        // Predicated region
        $region13: #{tpu_custom_call.1} parent=11 // pred_check
          %p235 = pneg %p150
        $region14: #{tpu_custom_call.1} parent=11 // pred_check_branch
          %237 = sbr.rel (%p235) target = $region16
        $region15: #{tpu_custom_call.1} parent=11 // pred_region
          _
        $region16: #{tpu_custom_call.1} parent=11 // pred_fallthru
          _
        // Predicated region
        $region17: #{tpu_custom_call.1} parent=11 // pred_check
          %p238 = pneg %p171
        $region18: #{tpu_custom_call.1} parent=11 // pred_check_branch
          %240 = sbr.rel (%p238) target = $region20
        $region19: #{tpu_custom_call.1} parent=11 // pred_region
          _
        $region20: #{tpu_custom_call.1} parent=11 // pred_fallthru
          _
        // Predicated region
        $region21: #{tpu_custom_call.1} parent=11 // pred_check
          %p241 = pneg %p192
        $region22: #{tpu_custom_call.1} parent=11 // pred_check_branch
          %243 = sbr.rel (%p241) target = $region24
        $region23: #{tpu_custom_call.1} parent=11 // pred_region
          _
        $region24: #{tpu_custom_call.1} parent=11 // pred_fallthru
          _
      $region12: #{tpu_custom_call.1} parent=5 // pred_fallthru
        _
      %p244 = scmp.lt.s32.totalorder %s21, 4
      // Predicated region
      $region25: #{tpu_custom_call.1} parent=5 // pred_check
        %p245 = pneg %p244
      $region26: #{tpu_custom_call.1} parent=5 // pred_check_branch
        %247 = sbr.rel (%p245) target = $region28
      $region27: #{tpu_custom_call.1} parent=5 // pred_region
        // Predicated region
        $region29: #{tpu_custom_call.1} parent=27 // pred_check
          %p248 = pneg %p55
        $region30: #{tpu_custom_call.1} parent=27 // pred_check_branch
          %250 = sbr.rel (%p248) target = $region32
        $region31: #{tpu_custom_call.1} parent=27 // pred_region
          %s251 = sand.u32 %s45, 1
          %s252 = scalar_lea.sflag [#allocation4], %s251
          %s253 = sand.u32 %s45, 1
          %s254 = smul.addr %s253, 16
          %s255 = scalar_lea.vmem [#allocation3], %s254
          %s256 = smul.u32 2, %s29
          %s258 = ssub.s32 256, 256
          %259 = vsyncadd %s252, %s258
          %s260 = smul.addr %s28, 4
          %s261 = sadd.s32 %s256, %s260
          %s262 = smul.addr %s261, 128
          %s263 = scalar_lea.hbm %s0, %s262
          %s264 = sshll.u32 %s255, 4
          %s265 = int_to_ptr.vmem [resolvable:$true] %s264
          %270 = dma.hbm_to_vmem [thread:$0]  %s263, 256, %s265, %s252, 128, 128, 8
        $region32: #{tpu_custom_call.1} parent=27 // pred_fallthru
          _
        // Predicated region
        $region33: #{tpu_custom_call.1} parent=27 // pred_check
          %p271 = pneg %p89
        $region34: #{tpu_custom_call.1} parent=27 // pred_check_branch
          %273 = sbr.rel (%p271) target = $region36
        $region35: #{tpu_custom_call.1} parent=27 // pred_region
          %s274 = sand.u32 %s21, 1
          %s275 = scalar_lea.sflag [#allocation7], %s274
          %s276 = sand.u32 %s79, 1
          %s277 = smul.addr %s276, 16
          %s278 = scalar_lea.vmem [#allocation6], %s277
          %s279 = ssub.s32 %s29, 1
          %p280 = scmp.gt.s32.totalorder %s279, 0
          %s281 = scalar_select %p280, %s279, 0
          %s282 = smul.u32 2, %s281
          %s284 = ssub.s32 256, 256
          %285 = vsyncadd %s275, %s284
          %s286 = smul.addr %s28, 4
          %s287 = sadd.s32 %s282, %s286
          %s288 = smul.addr %s287, 128
          %s289 = scalar_lea.hbm %s1, %s288
          %s290 = sshll.u32 %s278, 4
          %s291 = int_to_ptr.vmem [resolvable:$true] %s290
          %296 = dma.hbm_to_vmem [thread:$0]  %s289, 256, %s291, %s275, 128, 128, 8
        $region36: #{tpu_custom_call.1} parent=27 // pred_fallthru
          _
        // Predicated region
        $region37: #{tpu_custom_call.1} parent=27 // pred_check
          %p297 = pneg %p123
        $region38: #{tpu_custom_call.1} parent=27 // pred_check_branch
          %299 = sbr.rel (%p297) target = $region40
        $region39: #{tpu_custom_call.1} parent=27 // pred_region
          %s300 = sand.u32 %s21, 1
          %s301 = scalar_lea.sflag [#allocation7], %s300
          %s302 = sand.u32 %s113, 1
          %s303 = smul.addr %s302, 16
          %s304 = scalar_lea.vmem [#allocation8], %s303
          %s305 = sadd.s32 %s29, 1
          %p306 = scmp.lt.s32.totalorder %s305, 1
          %s307 = scalar_select %p306, %s305, 1
          %s308 = smul.u32 2, %s307
          %s310 = ssub.s32 256, 256
          %311 = vsyncadd %s301, %s310
          %s312 = smul.addr %s28, 4
          %s313 = sadd.s32 %s308, %s312
          %s314 = smul.addr %s313, 128
          %s315 = scalar_lea.hbm %s2, %s314
          %s316 = sshll.u32 %s304, 4
          %s317 = int_to_ptr.vmem [resolvable:$true] %s316
          %322 = dma.hbm_to_vmem [thread:$0]  %s315, 256, %s317, %s301, 128, 128, 8
        $region40: #{tpu_custom_call.1} parent=27 // pred_fallthru
          _
      $region28: #{tpu_custom_call.1} parent=5 // pred_fallthru
        _
      %p323 = scmp.le.s32.totalorder 1, %s21
      %p324 = scmp.lt.s32.totalorder %s21, 5
      %p325 = pnand %p323, %p324
      %p326 = pneg %p325
      // Predicated region
      $region41: #{tpu_custom_call.1} parent=5 // pred_check
        _
      $region42: #{tpu_custom_call.1} parent=5 // pred_check_branch
        %328 = sbr.rel (%p325) target = $region44
      $region43: #{tpu_custom_call.1} parent=5 // pred_region
        %s329 = ssub.s32 %s21, 1
        %s330 = sand.u32 %s48, 1
        %s331 = scalar_lea.sflag [#allocation4], %s330
        %s332 = sand.u32 %s48, 1
        %s333 = smul.addr %s332, 16
        %s334 = scalar_lea.vmem [#allocation3], %s333
        // Predicated region
        $region45: #{tpu_custom_call.1} parent=43 // pred_check
          %p335 = pneg %p61
        $region46: #{tpu_custom_call.1} parent=43 // pred_check_branch
          %337 = sbr.rel (%p335) target = $region48
        $region47: #{tpu_custom_call.1} parent=43 // pred_region
          %338 = dma.done %s331, 256
        $region48: #{tpu_custom_call.1} parent=43 // pred_fallthru
          _
        %s339 = sand.u32 %s26, 1
        %s340 = scalar_lea.sflag [#allocation7], %s339
        %s341 = sand.u32 %s82, 1
        %s342 = smul.addr %s341, 16
        %s343 = scalar_lea.vmem [#allocation6], %s342
        // Predicated region
        $region49: #{tpu_custom_call.1} parent=43 // pred_check
          %p344 = pneg %p95
        $region50: #{tpu_custom_call.1} parent=43 // pred_check_branch
          %346 = sbr.rel (%p344) target = $region52
        $region51: #{tpu_custom_call.1} parent=43 // pred_region
          %347 = dma.done %s340, 256
        $region52: #{tpu_custom_call.1} parent=43 // pred_fallthru
          _
        %s348 = sand.u32 %s26, 1
        %s349 = scalar_lea.sflag [#allocation7], %s348
        %s350 = sand.u32 %s116, 1
        %s351 = smul.addr %s350, 16
        %s352 = scalar_lea.vmem [#allocation8], %s351
        // Predicated region
        $region53: #{tpu_custom_call.1} parent=43 // pred_check
          %p353 = pneg %p129
        $region54: #{tpu_custom_call.1} parent=43 // pred_check_branch
          %355 = sbr.rel (%p353) target = $region56
        $region55: #{tpu_custom_call.1} parent=43 // pred_region
          %356 = dma.done %s349, 256
        $region56: #{tpu_custom_call.1} parent=43 // pred_fallthru
          _
        %s357 = sand.u32 %s48, 1
        %s358 = scalar_lea.sflag [#allocation4], %s357
        %s359 = sand.u32 %s48, 1
        %s360 = smul.addr %s359, 16
        %s361 = scalar_lea.vmem [#allocation3], %s360
        %p362 = pneg %p61
        %p363 = pneg %p58
        %s364 = sand.u32 %s26, 1
        %s365 = scalar_lea.sflag [#allocation7], %s364
        %s366 = sand.u32 %s82, 1
        %s367 = smul.addr %s366, 16
        %s368 = scalar_lea.vmem [#allocation6], %s367
        %p369 = pneg %p95
        %p370 = pneg %p92
        %s371 = sand.u32 %s26, 1
        %s372 = scalar_lea.sflag [#allocation7], %s371
        %s373 = sand.u32 %s116, 1
        %s374 = smul.addr %s373, 16
        %s375 = scalar_lea.vmem [#allocation8], %s374
        %p376 = pneg %p129
        %p377 = pneg %p126
        %p378 = pneg %p150
        %p379 = pneg %p147
        %p380 = pneg %p171
        %p381 = pneg %p168
        %p382 = pneg %p192
        %p383 = pneg %p189
        %p384 = pneg %p220
        %p385 = pneg %p217
        %s386 = sand.u32 %s207, 1
        %s387 = scalar_lea.sflag [#allocation5], %s386
        %s388 = sand.u32 %s207, 1
        %s389 = smul.addr %s388, 32
        %s390 = scalar_lea.vmem [#allocation9], %s389
        %s391 = smul.u32 2, %s31
        %s392 = ssub.s32 %s31, 1
        %p393 = scmp.gt.s32.totalorder %s392, 0
        %s394 = scalar_select %p393, %s392, 0
        %s395 = smul.u32 2, %s394
        %s396 = sadd.s32 %s31, 1
        %p397 = scmp.lt.s32.totalorder %s396, 1
        %s398 = scalar_select %p397, %s396, 1
        %s399 = smul.u32 2, %s398
        %s400 = smul.u32 2, %s31
        %v401 = vld [vmem:[%s334] sm:$0xff]
        %v402 = vld [vmem:[%s334 + $0x8] sm:$0xff]
        %405 = vrot.lane.b32.xlu0 %v401, 1
        %v406 = vpop.permute.xlu0 %405
        %407 = vrot.lane.b32.xlu0 %v402, 1
        %v408 = vpop.permute.xlu0 %407
        %vm411 = vcmask 269320
        %412 = vst.msk [vmem:[#allocation2 + $0x1] sm:$0xff] %vm411, %v406
        %413 = vst.msk [vmem:[#allocation2 + $0x9] sm:$0xff] %vm411, %v408
        %p414 = scmp.gt.s32.totalorder %s31, 0
        %v415 = vld [vmem:[%s343 + $0xf] sm:$0x1]
        %s416 = scalar_select %p414, 1, 0
        %v417 = vstv %s416
        %vm418 = vcmp.eq.s32.totalorder %v417, 1
        %v419 = vsel %vm418, %v415, 0.0
        %p420 = scmp.lt.s32.totalorder %s31, 1
        %v421 = vld [vmem:[%s352] sm:$0x1]
        %s422 = scalar_select %p420, 1, 0
        %v423 = vstv %s422
        %vm424 = vcmp.eq.s32.totalorder %v423, 1
        %v425 = vsel %vm424, %v421, 0.0
        %427 = vrot.lane.b32.xlu0 %v419, 1
        %v428 = vpop.permute.xlu0 %427
        %vm430 = vcmask 262152
        %431 = vst.msk [vmem:[#allocation2] sm:$0x1] %vm430, %v428
        %433 = vrot.lane.b32.xlu0 %v425, 1
        %v434 = vpop.permute.xlu0 %433
        %436 = vst.msk [vmem:[#allocation2 + $0x11] sm:$0x1] %vm430, %v434
        %vm437 = vcmask 7168
        %438 = vst.msk [vmem:[#allocation2] sm:$0xff] %vm437, 0.0
        %439 = vst.msk [vmem:[#allocation2 + $0x8] sm:$0xff] %vm437, 0.0
        %vm440 = vcmask 1024
        %441 = vst.msk [vmem:[#allocation2 + $0x10] sm:$0x3] %vm440, 0.0
        %vm442 = vcmask 277768
        %443 = vst.msk [vmem:[#allocation2] sm:$0xff] %vm442, 0.0
        %444 = vst.msk [vmem:[#allocation2 + $0x8] sm:$0xff] %vm442, 0.0
        %vm445 = vcmask 271624
        %446 = vst.msk [vmem:[#allocation2 + $0x10] sm:$0x3] %vm445, 0.0
        %v447 = vld [vmem:[#allocation2] sm:$0xff]
        %v448 = vld [vmem:[#allocation2 + $0x8] sm:$0xff]
        %v449 = vld [vmem:[%s3] sm:$0x1]
        %v450 = vunpack.c.l.bf16 %v449
        %v451 = vlaneseq
        %v452 = vshrl.u32 %v451, 7
        %v453 = vsub.s32 0, %v452
        %v454 = vrot.slane %v447, %v453
        %456 = vbcast.lane.b32.xlu0 %v454, 256
        %v457 = vpop.permute.xlu0 %456
        %s459 = sor.u32 256, 8
        %460 = vbcast.lane.b32.xlu0 %v454, %s459
        %v461 = vpop.permute.xlu0 %460
        %s463 = sor.u32 256, 16
        %464 = vbcast.lane.b32.xlu0 %v454, %s463
        %v465 = vpop.permute.xlu0 %464
        %s467 = sor.u32 256, 24
        %468 = vbcast.lane.b32.xlu0 %v454, %s467
        %v469 = vpop.permute.xlu0 %468
        %v470 = vlaneseq
        %v471 = vshrl.u32 %v470, 7
        %v472 = vsub.s32 1, %v471
        %v473 = vrot.slane %v447, %v472
        %475 = vbcast.lane.b32.xlu0 %v473, 256
        %v476 = vpop.permute.xlu0 %475
        %s478 = sor.u32 256, 8
        %479 = vbcast.lane.b32.xlu0 %v473, %s478
        %v480 = vpop.permute.xlu0 %479
        %s482 = sor.u32 256, 16
        %483 = vbcast.lane.b32.xlu0 %v473, %s482
        %v484 = vpop.permute.xlu0 %483
        %s486 = sor.u32 256, 24
        %487 = vbcast.lane.b32.xlu0 %v473, %s486
        %v488 = vpop.permute.xlu0 %487
        %v489 = vlaneseq
        %v490 = vshrl.u32 %v489, 7
        %v491 = vsub.s32 2, %v490
        %v492 = vrot.slane %v447, %v491
        %494 = vbcast.lane.b32.xlu0 %v492, 256
        %v495 = vpop.permute.xlu0 %494
        %s497 = sor.u32 256, 8
        %498 = vbcast.lane.b32.xlu0 %v492, %s497
        %v499 = vpop.permute.xlu0 %498
        %s501 = sor.u32 256, 16
        %502 = vbcast.lane.b32.xlu0 %v492, %s501
        %v503 = vpop.permute.xlu0 %502
        %s505 = sor.u32 256, 24
        %506 = vbcast.lane.b32.xlu0 %v492, %s505
        %v507 = vpop.permute.xlu0 %506
        %v508 = vlaneseq
        %v509 = vshrl.u32 %v508, 7
        %v510 = vsub.s32 3, %v509
        %v511 = vrot.slane %v447, %v510
        %513 = vbcast.lane.b32.xlu0 %v511, 256
        %v514 = vpop.permute.xlu0 %513
        %s516 = sor.u32 256, 8
        %517 = vbcast.lane.b32.xlu0 %v511, %s516
        %v518 = vpop.permute.xlu0 %517
        %s520 = sor.u32 256, 16
        %521 = vbcast.lane.b32.xlu0 %v511, %s520
        %v522 = vpop.permute.xlu0 %521
        %s524 = sor.u32 256, 24
        %525 = vbcast.lane.b32.xlu0 %v511, %s524
        %v526 = vpop.permute.xlu0 %525
        %v527 = vlaneseq
        %v528 = vshrl.u32 %v527, 7
        %v529 = vsub.s32 4, %v528
        %v530 = vrot.slane %v447, %v529
        %532 = vbcast.lane.b32.xlu0 %v530, 256
        %v533 = vpop.permute.xlu0 %532
        %s535 = sor.u32 256, 8
        %536 = vbcast.lane.b32.xlu0 %v530, %s535
        %v537 = vpop.permute.xlu0 %536
        %s539 = sor.u32 256, 16
        %540 = vbcast.lane.b32.xlu0 %v530, %s539
        %v541 = vpop.permute.xlu0 %540
        %s543 = sor.u32 256, 24
        %544 = vbcast.lane.b32.xlu0 %v530, %s543
        %v545 = vpop.permute.xlu0 %544
        %v546 = vlaneseq
        %v547 = vshrl.u32 %v546, 7
        %v548 = vsub.s32 5, %v547
        %v549 = vrot.slane %v447, %v548
        %551 = vbcast.lane.b32.xlu0 %v549, 256
        %v552 = vpop.permute.xlu0 %551
        %s554 = sor.u32 256, 8
        %555 = vbcast.lane.b32.xlu0 %v549, %s554
        %v556 = vpop.permute.xlu0 %555
        %s558 = sor.u32 256, 16
        %559 = vbcast.lane.b32.xlu0 %v549, %s558
        %v560 = vpop.permute.xlu0 %559
        %s562 = sor.u32 256, 24
        %563 = vbcast.lane.b32.xlu0 %v549, %s562
        %v564 = vpop.permute.xlu0 %563
        %v565 = vlaneseq
        %v566 = vshrl.u32 %v565, 7
        %v567 = vsub.s32 6, %v566
        %v568 = vrot.slane %v447, %v567
        %570 = vbcast.lane.b32.xlu0 %v568, 256
        %v571 = vpop.permute.xlu0 %570
        %s573 = sor.u32 256, 8
        %574 = vbcast.lane.b32.xlu0 %v568, %s573
        %v575 = vpop.permute.xlu0 %574
        %s577 = sor.u32 256, 16
        %578 = vbcast.lane.b32.xlu0 %v568, %s577
        %v579 = vpop.permute.xlu0 %578
        %s581 = sor.u32 256, 24
        %582 = vbcast.lane.b32.xlu0 %v568, %s581
        %v583 = vpop.permute.xlu0 %582
        %v584 = vlaneseq
        %v585 = vshrl.u32 %v584, 7
        %v586 = vsub.s32 7, %v585
        %v587 = vrot.slane %v447, %v586
        %589 = vbcast.lane.b32.xlu0 %v587, 256
        %v590 = vpop.permute.xlu0 %589
        %s592 = sor.u32 256, 8
        %593 = vbcast.lane.b32.xlu0 %v587, %s592
        %v594 = vpop.permute.xlu0 %593
        %s596 = sor.u32 256, 16
        %597 = vbcast.lane.b32.xlu0 %v587, %s596
        %v598 = vpop.permute.xlu0 %597
        %s600 = sor.u32 256, 24
        %601 = vbcast.lane.b32.xlu0 %v587, %s600
        %v602 = vpop.permute.xlu0 %601
        %v603 = vlaneseq
        %v604 = vshrl.u32 %v603, 7
        %v605 = vsub.s32 0, %v604
        %v606 = vrot.slane %v448, %v605
        %608 = vbcast.lane.b32.xlu0 %v606, 256
        %v609 = vpop.permute.xlu0 %608
        %s611 = sor.u32 256, 8
        %612 = vbcast.lane.b32.xlu0 %v606, %s611
        %v613 = vpop.permute.xlu0 %612
        %s615 = sor.u32 256, 16
        %616 = vbcast.lane.b32.xlu0 %v606, %s615
        %v617 = vpop.permute.xlu0 %616
        %s619 = sor.u32 256, 24
        %620 = vbcast.lane.b32.xlu0 %v606, %s619
        %v621 = vpop.permute.xlu0 %620
        %v622 = vlaneseq
        %v623 = vshrl.u32 %v622, 7
        %v624 = vsub.s32 1, %v623
        %v625 = vrot.slane %v448, %v624
        %627 = vbcast.lane.b32.xlu0 %v625, 256
        %v628 = vpop.permute.xlu0 %627
        %s630 = sor.u32 256, 8
        %631 = vbcast.lane.b32.xlu0 %v625, %s630
        %v632 = vpop.permute.xlu0 %631
        %s634 = sor.u32 256, 16
        %635 = vbcast.lane.b32.xlu0 %v625, %s634
        %v636 = vpop.permute.xlu0 %635
        %s638 = sor.u32 256, 24
        %639 = vbcast.lane.b32.xlu0 %v625, %s638
        %v640 = vpop.permute.xlu0 %639
        %v641 = vlaneseq
        %v642 = vshrl.u32 %v641, 7
        %v643 = vsub.s32 2, %v642
        %v644 = vrot.slane %v448, %v643
        %646 = vbcast.lane.b32.xlu0 %v644, 256
        %v647 = vpop.permute.xlu0 %646
        %s649 = sor.u32 256, 8
        %650 = vbcast.lane.b32.xlu0 %v644, %s649
        %v651 = vpop.permute.xlu0 %650
        %s653 = sor.u32 256, 16
        %654 = vbcast.lane.b32.xlu0 %v644, %s653
        %v655 = vpop.permute.xlu0 %654
        %s657 = sor.u32 256, 24
        %658 = vbcast.lane.b32.xlu0 %v644, %s657
        %v659 = vpop.permute.xlu0 %658
        %v660 = vlaneseq
        %v661 = vshrl.u32 %v660, 7
        %v662 = vsub.s32 3, %v661
        %v663 = vrot.slane %v448, %v662
        %665 = vbcast.lane.b32.xlu0 %v663, 256
        %v666 = vpop.permute.xlu0 %665
        %s668 = sor.u32 256, 8
        %669 = vbcast.lane.b32.xlu0 %v663, %s668
        %v670 = vpop.permute.xlu0 %669
        %s672 = sor.u32 256, 16
        %673 = vbcast.lane.b32.xlu0 %v663, %s672
        %v674 = vpop.permute.xlu0 %673
        %s676 = sor.u32 256, 24
        %677 = vbcast.lane.b32.xlu0 %v663, %s676
        %v678 = vpop.permute.xlu0 %677
        %v679 = vlaneseq
        %v680 = vshrl.u32 %v679, 7
        %v681 = vsub.s32 4, %v680
        %v682 = vrot.slane %v448, %v681
        %684 = vbcast.lane.b32.xlu0 %v682, 256
        %v685 = vpop.permute.xlu0 %684
        %s687 = sor.u32 256, 8
        %688 = vbcast.lane.b32.xlu0 %v682, %s687
        %v689 = vpop.permute.xlu0 %688
        %s691 = sor.u32 256, 16
        %692 = vbcast.lane.b32.xlu0 %v682, %s691
        %v693 = vpop.permute.xlu0 %692
        %s695 = sor.u32 256, 24
        %696 = vbcast.lane.b32.xlu0 %v682, %s695
        %v697 = vpop.permute.xlu0 %696
        %v698 = vlaneseq
        %v699 = vshrl.u32 %v698, 7
        %v700 = vsub.s32 5, %v699
        %v701 = vrot.slane %v448, %v700
        %703 = vbcast.lane.b32.xlu0 %v701, 256
        %v704 = vpop.permute.xlu0 %703
        %s706 = sor.u32 256, 8
        %707 = vbcast.lane.b32.xlu0 %v701, %s706
        %v708 = vpop.permute.xlu0 %707
        %s710 = sor.u32 256, 16
        %711 = vbcast.lane.b32.xlu0 %v701, %s710
        %v712 = vpop.permute.xlu0 %711
        %s714 = sor.u32 256, 24
        %715 = vbcast.lane.b32.xlu0 %v701, %s714
        %v716 = vpop.permute.xlu0 %715
        %v717 = vlaneseq
        %v718 = vshrl.u32 %v717, 7
        %v719 = vsub.s32 6, %v718
        %v720 = vrot.slane %v448, %v719
        %722 = vbcast.lane.b32.xlu0 %v720, 256
        %v723 = vpop.permute.xlu0 %722
        %s725 = sor.u32 256, 8
        %726 = vbcast.lane.b32.xlu0 %v720, %s725
        %v727 = vpop.permute.xlu0 %726
        %s729 = sor.u32 256, 16
        %730 = vbcast.lane.b32.xlu0 %v720, %s729
        %v731 = vpop.permute.xlu0 %730
        %s733 = sor.u32 256, 24
        %734 = vbcast.lane.b32.xlu0 %v720, %s733
        %v735 = vpop.permute.xlu0 %734
        %v736 = vlaneseq
        %v737 = vshrl.u32 %v736, 7
        %v738 = vsub.s32 7, %v737
        %v739 = vrot.slane %v448, %v738
        %741 = vbcast.lane.b32.xlu0 %v739, 256
        %v742 = vpop.permute.xlu0 %741
        %s744 = sor.u32 256, 8
        %745 = vbcast.lane.b32.xlu0 %v739, %s744
        %v746 = vpop.permute.xlu0 %745
        %s748 = sor.u32 256, 16
        %749 = vbcast.lane.b32.xlu0 %v739, %s748
        %v750 = vpop.permute.xlu0 %749
        %s752 = sor.u32 256, 24
        %753 = vbcast.lane.b32.xlu0 %v739, %s752
        %v754 = vpop.permute.xlu0 %753
        %v755 = vlaneseq
        %v756 = vshrl.u32 %v755, 7
        %v757 = vsub.s32 0, %v756
        %v758 = vrot.slane %v450, %v757
        %v759 = vmul.f32 %v457, %v758
        %v760 = vmul.f32 %v461, %v758
        %v761 = vmul.f32 %v465, %v758
        %v762 = vmul.f32 %v469, %v758
        %v763 = vmul.f32 %v476, %v758
        %v764 = vmul.f32 %v480, %v758
        %v765 = vmul.f32 %v484, %v758
        %v766 = vmul.f32 %v488, %v758
        %v767 = vmul.f32 %v495, %v758
        %v768 = vmul.f32 %v499, %v758
        %v769 = vmul.f32 %v503, %v758
        %v770 = vmul.f32 %v507, %v758
        %v771 = vmul.f32 %v514, %v758
        %v772 = vmul.f32 %v518, %v758
        %v773 = vmul.f32 %v522, %v758
        %v774 = vmul.f32 %v526, %v758
        %v775 = vmul.f32 %v533, %v758
        %v776 = vmul.f32 %v537, %v758
        %v777 = vmul.f32 %v541, %v758
        %v778 = vmul.f32 %v545, %v758
        %v779 = vmul.f32 %v552, %v758
        %v780 = vmul.f32 %v556, %v758
        %v781 = vmul.f32 %v560, %v758
        %v782 = vmul.f32 %v564, %v758
        %v783 = vmul.f32 %v571, %v758
        %v784 = vmul.f32 %v575, %v758
        %v785 = vmul.f32 %v579, %v758
        %v786 = vmul.f32 %v583, %v758
        %v787 = vmul.f32 %v590, %v758
        %v788 = vmul.f32 %v594, %v758
        %v789 = vmul.f32 %v598, %v758
        %v790 = vmul.f32 %v602, %v758
        %v791 = vmul.f32 %v609, %v758
        %v792 = vmul.f32 %v613, %v758
        %v793 = vmul.f32 %v617, %v758
        %v794 = vmul.f32 %v621, %v758
        %v795 = vmul.f32 %v628, %v758
        %v796 = vmul.f32 %v632, %v758
        %v797 = vmul.f32 %v636, %v758
        %v798 = vmul.f32 %v640, %v758
        %v799 = vmul.f32 %v647, %v758
        %v800 = vmul.f32 %v651, %v758
        %v801 = vmul.f32 %v655, %v758
        %v802 = vmul.f32 %v659, %v758
        %v803 = vmul.f32 %v666, %v758
        %v804 = vmul.f32 %v670, %v758
        %v805 = vmul.f32 %v674, %v758
        %v806 = vmul.f32 %v678, %v758
        %v807 = vmul.f32 %v685, %v758
        %v808 = vmul.f32 %v689, %v758
        %v809 = vmul.f32 %v693, %v758
        %v810 = vmul.f32 %v697, %v758
        %v811 = vmul.f32 %v704, %v758
        %v812 = vmul.f32 %v708, %v758
        %v813 = vmul.f32 %v712, %v758
        %v814 = vmul.f32 %v716, %v758
        %v815 = vmul.f32 %v723, %v758
        %v816 = vmul.f32 %v727, %v758
        %v817 = vmul.f32 %v731, %v758
        %v818 = vmul.f32 %v735, %v758
        %v819 = vmul.f32 %v742, %v758
        %v820 = vmul.f32 %v746, %v758
        %v821 = vmul.f32 %v750, %v758
        %v822 = vmul.f32 %v754, %v758
        %v823 = vadd.f32 %v759, 0.0
        %v824 = vadd.f32 %v760, 0.0
        %v825 = vadd.f32 %v761, 0.0
        %v826 = vadd.f32 %v762, 0.0
        %v827 = vadd.f32 %v763, 0.0
        %v828 = vadd.f32 %v764, 0.0
        %v829 = vadd.f32 %v765, 0.0
        %v830 = vadd.f32 %v766, 0.0
        %v831 = vadd.f32 %v767, 0.0
        %v832 = vadd.f32 %v768, 0.0
        %v833 = vadd.f32 %v769, 0.0
        %v834 = vadd.f32 %v770, 0.0
        %v835 = vadd.f32 %v771, 0.0
        %v836 = vadd.f32 %v772, 0.0
        %v837 = vadd.f32 %v773, 0.0
        %v838 = vadd.f32 %v774, 0.0
        %v839 = vadd.f32 %v775, 0.0
        %v840 = vadd.f32 %v776, 0.0
        %v841 = vadd.f32 %v777, 0.0
        %v842 = vadd.f32 %v778, 0.0
        %v843 = vadd.f32 %v779, 0.0
        %v844 = vadd.f32 %v780, 0.0
        %v845 = vadd.f32 %v781, 0.0
        %v846 = vadd.f32 %v782, 0.0
        %v847 = vadd.f32 %v783, 0.0
        %v848 = vadd.f32 %v784, 0.0
        %v849 = vadd.f32 %v785, 0.0
        %v850 = vadd.f32 %v786, 0.0
        %v851 = vadd.f32 %v787, 0.0
        %v852 = vadd.f32 %v788, 0.0
        %v853 = vadd.f32 %v789, 0.0
        %v854 = vadd.f32 %v790, 0.0
        %v855 = vadd.f32 %v791, 0.0
        %v856 = vadd.f32 %v792, 0.0
        %v857 = vadd.f32 %v793, 0.0
        %v858 = vadd.f32 %v794, 0.0
        %v859 = vadd.f32 %v795, 0.0
        %v860 = vadd.f32 %v796, 0.0
        %v861 = vadd.f32 %v797, 0.0
        %v862 = vadd.f32 %v798, 0.0
        %v863 = vadd.f32 %v799, 0.0
        %v864 = vadd.f32 %v800, 0.0
        %v865 = vadd.f32 %v801, 0.0
        %v866 = vadd.f32 %v802, 0.0
        %v867 = vadd.f32 %v803, 0.0
        %v868 = vadd.f32 %v804, 0.0
        %v869 = vadd.f32 %v805, 0.0
        %v870 = vadd.f32 %v806, 0.0
        %v871 = vadd.f32 %v807, 0.0
        %v872 = vadd.f32 %v808, 0.0
        %v873 = vadd.f32 %v809, 0.0
        %v874 = vadd.f32 %v810, 0.0
        %v875 = vadd.f32 %v811, 0.0
        %v876 = vadd.f32 %v812, 0.0
        %v877 = vadd.f32 %v813, 0.0
        %v878 = vadd.f32 %v814, 0.0
        %v879 = vadd.f32 %v815, 0.0
        %v880 = vadd.f32 %v816, 0.0
        %v881 = vadd.f32 %v817, 0.0
        %v882 = vadd.f32 %v818, 0.0
        %v883 = vadd.f32 %v819, 0.0
        %v884 = vadd.f32 %v820, 0.0
        %v885 = vadd.f32 %v821, 0.0
        %v886 = vadd.f32 %v822, 0.0
        %s888 = sor.u32 256, 1
        %889 = vbcast.lane.b32.xlu0 %v454, %s888
        %v890 = vpop.permute.xlu0 %889
        %s892 = sor.u32 256, 9
        %893 = vbcast.lane.b32.xlu0 %v454, %s892
        %v894 = vpop.permute.xlu0 %893
        %s896 = sor.u32 256, 17
        %897 = vbcast.lane.b32.xlu0 %v454, %s896
        %v898 = vpop.permute.xlu0 %897
        %s900 = sor.u32 256, 25
        %901 = vbcast.lane.b32.xlu0 %v454, %s900
        %v902 = vpop.permute.xlu0 %901
        %s904 = sor.u32 256, 1
        %905 = vbcast.lane.b32.xlu0 %v473, %s904
        %v906 = vpop.permute.xlu0 %905
        %s908 = sor.u32 256, 9
        %909 = vbcast.lane.b32.xlu0 %v473, %s908
        %v910 = vpop.permute.xlu0 %909
        %s912 = sor.u32 256, 17
        %913 = vbcast.lane.b32.xlu0 %v473, %s912
        %v914 = vpop.permute.xlu0 %913
        %s916 = sor.u32 256, 25
        %917 = vbcast.lane.b32.xlu0 %v473, %s916
        %v918 = vpop.permute.xlu0 %917
        %s920 = sor.u32 256, 1
        %921 = vbcast.lane.b32.xlu0 %v492, %s920
        %v922 = vpop.permute.xlu0 %921
        %s924 = sor.u32 256, 9
        %925 = vbcast.lane.b32.xlu0 %v492, %s924
        %v926 = vpop.permute.xlu0 %925
        %s928 = sor.u32 256, 17
        %929 = vbcast.lane.b32.xlu0 %v492, %s928
        %v930 = vpop.permute.xlu0 %929
        %s932 = sor.u32 256, 25
        %933 = vbcast.lane.b32.xlu0 %v492, %s932
        %v934 = vpop.permute.xlu0 %933
        %s936 = sor.u32 256, 1
        %937 = vbcast.lane.b32.xlu0 %v511, %s936
        %v938 = vpop.permute.xlu0 %937
        %s940 = sor.u32 256, 9
        %941 = vbcast.lane.b32.xlu0 %v511, %s940
        %v942 = vpop.permute.xlu0 %941
        %s944 = sor.u32 256, 17
        %945 = vbcast.lane.b32.xlu0 %v511, %s944
        %v946 = vpop.permute.xlu0 %945
        %s948 = sor.u32 256, 25
        %949 = vbcast.lane.b32.xlu0 %v511, %s948
        %v950 = vpop.permute.xlu0 %949
        %s952 = sor.u32 256, 1
        %953 = vbcast.lane.b32.xlu0 %v530, %s952
        %v954 = vpop.permute.xlu0 %953
        %s956 = sor.u32 256, 9
        %957 = vbcast.lane.b32.xlu0 %v530, %s956
        %v958 = vpop.permute.xlu0 %957
        %s960 = sor.u32 256, 17
        %961 = vbcast.lane.b32.xlu0 %v530, %s960
        %v962 = vpop.permute.xlu0 %961
        %s964 = sor.u32 256, 25
        %965 = vbcast.lane.b32.xlu0 %v530, %s964
        %v966 = vpop.permute.xlu0 %965
        %s968 = sor.u32 256, 1
        %969 = vbcast.lane.b32.xlu0 %v549, %s968
        %v970 = vpop.permute.xlu0 %969
        %s972 = sor.u32 256, 9
        %973 = vbcast.lane.b32.xlu0 %v549, %s972
        %v974 = vpop.permute.xlu0 %973
        %s976 = sor.u32 256, 17
        %977 = vbcast.lane.b32.xlu0 %v549, %s976
        %v978 = vpop.permute.xlu0 %977
        %s980 = sor.u32 256, 25
        %981 = vbcast.lane.b32.xlu0 %v549, %s980
        %v982 = vpop.permute.xlu0 %981
        %s984 = sor.u32 256, 1
        %985 = vbcast.lane.b32.xlu0 %v568, %s984
        %v986 = vpop.permute.xlu0 %985
        %s988 = sor.u32 256, 9
        %989 = vbcast.lane.b32.xlu0 %v568, %s988
        %v990 = vpop.permute.xlu0 %989
        %s992 = sor.u32 256, 17
        %993 = vbcast.lane.b32.xlu0 %v568, %s992
        %v994 = vpop.permute.xlu0 %993
        %s996 = sor.u32 256, 25
        %997 = vbcast.lane.b32.xlu0 %v568, %s996
        %v998 = vpop.permute.xlu0 %997
        %s1000 = sor.u32 256, 1
        %1001 = vbcast.lane.b32.xlu0 %v587, %s1000
        %v1002 = vpop.permute.xlu0 %1001
        %s1004 = sor.u32 256, 9
        %1005 = vbcast.lane.b32.xlu0 %v587, %s1004
        %v1006 = vpop.permute.xlu0 %1005
        %s1008 = sor.u32 256, 17
        %1009 = vbcast.lane.b32.xlu0 %v587, %s1008
        %v1010 = vpop.permute.xlu0 %1009
        %s1012 = sor.u32 256, 25
        %1013 = vbcast.lane.b32.xlu0 %v587, %s1012
        %v1014 = vpop.permute.xlu0 %1013
        %s1016 = sor.u32 256, 1
        %1017 = vbcast.lane.b32.xlu0 %v606, %s1016
        %v1018 = vpop.permute.xlu0 %1017
        %s1020 = sor.u32 256, 9
        %1021 = vbcast.lane.b32.xlu0 %v606, %s1020
        %v1022 = vpop.permute.xlu0 %1021
        %s1024 = sor.u32 256, 17
        %1025 = vbcast.lane.b32.xlu0 %v606, %s1024
        %v1026 = vpop.permute.xlu0 %1025
        %s1028 = sor.u32 256, 25
        %1029 = vbcast.lane.b32.xlu0 %v606, %s1028
        %v1030 = vpop.permute.xlu0 %1029
        %s1032 = sor.u32 256, 1
        %1033 = vbcast.lane.b32.xlu0 %v625, %s1032
        %v1034 = vpop.permute.xlu0 %1033
        %s1036 = sor.u32 256, 9
        %1037 = vbcast.lane.b32.xlu0 %v625, %s1036
        %v1038 = vpop.permute.xlu0 %1037
        %s1040 = sor.u32 256, 17
        %1041 = vbcast.lane.b32.xlu0 %v625, %s1040
        %v1042 = vpop.permute.xlu0 %1041
        %s1044 = sor.u32 256, 25
        %1045 = vbcast.lane.b32.xlu0 %v625, %s1044
        %v1046 = vpop.permute.xlu0 %1045
        %s1048 = sor.u32 256, 1
        %1049 = vbcast.lane.b32.xlu0 %v644, %s1048
        %v1050 = vpop.permute.xlu0 %1049
        %s1052 = sor.u32 256, 9
        %1053 = vbcast.lane.b32.xlu0 %v644, %s1052
        %v1054 = vpop.permute.xlu0 %1053
        %s1056 = sor.u32 256, 17
        %1057 = vbcast.lane.b32.xlu0 %v644, %s1056
        %v1058 = vpop.permute.xlu0 %1057
        %s1060 = sor.u32 256, 25
        %1061 = vbcast.lane.b32.xlu0 %v644, %s1060
        %v1062 = vpop.permute.xlu0 %1061
        %s1064 = sor.u32 256, 1
        %1065 = vbcast.lane.b32.xlu0 %v663, %s1064
        %v1066 = vpop.permute.xlu0 %1065
        %s1068 = sor.u32 256, 9
        %1069 = vbcast.lane.b32.xlu0 %v663, %s1068
        %v1070 = vpop.permute.xlu0 %1069
        %s1072 = sor.u32 256, 17
        %1073 = vbcast.lane.b32.xlu0 %v663, %s1072
        %v1074 = vpop.permute.xlu0 %1073
        %s1076 = sor.u32 256, 25
        %1077 = vbcast.lane.b32.xlu0 %v663, %s1076
        %v1078 = vpop.permute.xlu0 %1077
        %s1080 = sor.u32 256, 1
        %1081 = vbcast.lane.b32.xlu0 %v682, %s1080
        %v1082 = vpop.permute.xlu0 %1081
        %s1084 = sor.u32 256, 9
        %1085 = vbcast.lane.b32.xlu0 %v682, %s1084
        %v1086 = vpop.permute.xlu0 %1085
        %s1088 = sor.u32 256, 17
        %1089 = vbcast.lane.b32.xlu0 %v682, %s1088
        %v1090 = vpop.permute.xlu0 %1089
        %s1092 = sor.u32 256, 25
        %1093 = vbcast.lane.b32.xlu0 %v682, %s1092
        %v1094 = vpop.permute.xlu0 %1093
        %s1096 = sor.u32 256, 1
        %1097 = vbcast.lane.b32.xlu0 %v701, %s1096
        %v1098 = vpop.permute.xlu0 %1097
        %s1100 = sor.u32 256, 9
        %1101 = vbcast.lane.b32.xlu0 %v701, %s1100
        %v1102 = vpop.permute.xlu0 %1101
        %s1104 = sor.u32 256, 17
        %1105 = vbcast.lane.b32.xlu0 %v701, %s1104
        %v1106 = vpop.permute.xlu0 %1105
        %s1108 = sor.u32 256, 25
        %1109 = vbcast.lane.b32.xlu0 %v701, %s1108
        %v1110 = vpop.permute.xlu0 %1109
        %s1112 = sor.u32 256, 1
        %1113 = vbcast.lane.b32.xlu0 %v720, %s1112
        %v1114 = vpop.permute.xlu0 %1113
        %s1116 = sor.u32 256, 9
        %1117 = vbcast.lane.b32.xlu0 %v720, %s1116
        %v1118 = vpop.permute.xlu0 %1117
        %s1120 = sor.u32 256, 17
        %1121 = vbcast.lane.b32.xlu0 %v720, %s1120
        %v1122 = vpop.permute.xlu0 %1121
        %s1124 = sor.u32 256, 25
        %1125 = vbcast.lane.b32.xlu0 %v720, %s1124
        %v1126 = vpop.permute.xlu0 %1125
        %s1128 = sor.u32 256, 1
        %1129 = vbcast.lane.b32.xlu0 %v739, %s1128
        %v1130 = vpop.permute.xlu0 %1129
        %s1132 = sor.u32 256, 9
        %1133 = vbcast.lane.b32.xlu0 %v739, %s1132
        %v1134 = vpop.permute.xlu0 %1133
        %s1136 = sor.u32 256, 17
        %1137 = vbcast.lane.b32.xlu0 %v739, %s1136
        %v1138 = vpop.permute.xlu0 %1137
        %s1140 = sor.u32 256, 25
        %1141 = vbcast.lane.b32.xlu0 %v739, %s1140
        %v1142 = vpop.permute.xlu0 %1141
        %v1143 = vlaneseq
        %v1144 = vshrl.u32 %v1143, 7
        %v1145 = vsub.s32 1, %v1144
        %v1146 = vrot.slane %v450, %v1145
        %v1147 = vmul.f32 %v890, %v1146
        %v1148 = vmul.f32 %v894, %v1146
        %v1149 = vmul.f32 %v898, %v1146
        %v1150 = vmul.f32 %v902, %v1146
        %v1151 = vmul.f32 %v906, %v1146
        %v1152 = vmul.f32 %v910, %v1146
        %v1153 = vmul.f32 %v914, %v1146
        %v1154 = vmul.f32 %v918, %v1146
        %v1155 = vmul.f32 %v922, %v1146
        %v1156 = vmul.f32 %v926, %v1146
        %v1157 = vmul.f32 %v930, %v1146
        %v1158 = vmul.f32 %v934, %v1146
        %v1159 = vmul.f32 %v938, %v1146
        %v1160 = vmul.f32 %v942, %v1146
        %v1161 = vmul.f32 %v946, %v1146
        %v1162 = vmul.f32 %v950, %v1146
        %v1163 = vmul.f32 %v954, %v1146
        %v1164 = vmul.f32 %v958, %v1146
        %v1165 = vmul.f32 %v962, %v1146
        %v1166 = vmul.f32 %v966, %v1146
        %v1167 = vmul.f32 %v970, %v1146
        %v1168 = vmul.f32 %v974, %v1146
        %v1169 = vmul.f32 %v978, %v1146
        %v1170 = vmul.f32 %v982, %v1146
        %v1171 = vmul.f32 %v986, %v1146
        %v1172 = vmul.f32 %v990, %v1146
        %v1173 = vmul.f32 %v994, %v1146
        %v1174 = vmul.f32 %v998, %v1146
        %v1175 = vmul.f32 %v1002, %v1146
        %v1176 = vmul.f32 %v1006, %v1146
        %v1177 = vmul.f32 %v1010, %v1146
        %v1178 = vmul.f32 %v1014, %v1146
        %v1179 = vmul.f32 %v1018, %v1146
        %v1180 = vmul.f32 %v1022, %v1146
        %v1181 = vmul.f32 %v1026, %v1146
        %v1182 = vmul.f32 %v1030, %v1146
        %v1183 = vmul.f32 %v1034, %v1146
        %v1184 = vmul.f32 %v1038, %v1146
        %v1185 = vmul.f32 %v1042, %v1146
        %v1186 = vmul.f32 %v1046, %v1146
        %v1187 = vmul.f32 %v1050, %v1146
        %v1188 = vmul.f32 %v1054, %v1146
        %v1189 = vmul.f32 %v1058, %v1146
        %v1190 = vmul.f32 %v1062, %v1146
        %v1191 = vmul.f32 %v1066, %v1146
        %v1192 = vmul.f32 %v1070, %v1146
        %v1193 = vmul.f32 %v1074, %v1146
        %v1194 = vmul.f32 %v1078, %v1146
        %v1195 = vmul.f32 %v1082, %v1146
        %v1196 = vmul.f32 %v1086, %v1146
        %v1197 = vmul.f32 %v1090, %v1146
        %v1198 = vmul.f32 %v1094, %v1146
        %v1199 = vmul.f32 %v1098, %v1146
        %v1200 = vmul.f32 %v1102, %v1146
        %v1201 = vmul.f32 %v1106, %v1146
        %v1202 = vmul.f32 %v1110, %v1146
        %v1203 = vmul.f32 %v1114, %v1146
        %v1204 = vmul.f32 %v1118, %v1146
        %v1205 = vmul.f32 %v1122, %v1146
        %v1206 = vmul.f32 %v1126, %v1146
        %v1207 = vmul.f32 %v1130, %v1146
        %v1208 = vmul.f32 %v1134, %v1146
        %v1209 = vmul.f32 %v1138, %v1146
        %v1210 = vmul.f32 %v1142, %v1146
        %v1211 = vadd.f32 %v823, %v1147
        %v1212 = vadd.f32 %v824, %v1148
        %v1213 = vadd.f32 %v825, %v1149
        %v1214 = vadd.f32 %v826, %v1150
        %v1215 = vadd.f32 %v827, %v1151
        %v1216 = vadd.f32 %v828, %v1152
        %v1217 = vadd.f32 %v829, %v1153
        %v1218 = vadd.f32 %v830, %v1154
        %v1219 = vadd.f32 %v831, %v1155
        %v1220 = vadd.f32 %v832, %v1156
        %v1221 = vadd.f32 %v833, %v1157
        %v1222 = vadd.f32 %v834, %v1158
        %v1223 = vadd.f32 %v835, %v1159
        %v1224 = vadd.f32 %v836, %v1160
        %v1225 = vadd.f32 %v837, %v1161
        %v1226 = vadd.f32 %v838, %v1162
        %v1227 = vadd.f32 %v839, %v1163
        %v1228 = vadd.f32 %v840, %v1164
        %v1229 = vadd.f32 %v841, %v1165
        %v1230 = vadd.f32 %v842, %v1166
        %v1231 = vadd.f32 %v843, %v1167
        %v1232 = vadd.f32 %v844, %v1168
        %v1233 = vadd.f32 %v845, %v1169
        %v1234 = vadd.f32 %v846, %v1170
        %v1235 = vadd.f32 %v847, %v1171
        %v1236 = vadd.f32 %v848, %v1172
        %v1237 = vadd.f32 %v849, %v1173
        %v1238 = vadd.f32 %v850, %v1174
        %v1239 = vadd.f32 %v851, %v1175
        %v1240 = vadd.f32 %v852, %v1176
        %v1241 = vadd.f32 %v853, %v1177
        %v1242 = vadd.f32 %v854, %v1178
        %v1243 = vadd.f32 %v855, %v1179
        %v1244 = vadd.f32 %v856, %v1180
        %v1245 = vadd.f32 %v857, %v1181
        %v1246 = vadd.f32 %v858, %v1182
        %v1247 = vadd.f32 %v859, %v1183
        %v1248 = vadd.f32 %v860, %v1184
        %v1249 = vadd.f32 %v861, %v1185
        %v1250 = vadd.f32 %v862, %v1186
        %v1251 = vadd.f32 %v863, %v1187
        %v1252 = vadd.f32 %v864, %v1188
        %v1253 = vadd.f32 %v865, %v1189
        %v1254 = vadd.f32 %v866, %v1190
        %v1255 = vadd.f32 %v867, %v1191
        %v1256 = vadd.f32 %v868, %v1192
        %v1257 = vadd.f32 %v869, %v1193
        %v1258 = vadd.f32 %v870, %v1194
        %v1259 = vadd.f32 %v871, %v1195
        %v1260 = vadd.f32 %v872, %v1196
        %v1261 = vadd.f32 %v873, %v1197
        %v1262 = vadd.f32 %v874, %v1198
        %v1263 = vadd.f32 %v875, %v1199
        %v1264 = vadd.f32 %v876, %v1200
        %v1265 = vadd.f32 %v877, %v1201
        %v1266 = vadd.f32 %v878, %v1202
        %v1267 = vadd.f32 %v879, %v1203
        %v1268 = vadd.f32 %v880, %v1204
        %v1269 = vadd.f32 %v881, %v1205
        %v1270 = vadd.f32 %v882, %v1206
        %v1271 = vadd.f32 %v883, %v1207
        %v1272 = vadd.f32 %v884, %v1208
        %v1273 = vadd.f32 %v885, %v1209
        %v1274 = vadd.f32 %v886, %v1210
        %v1275 = vld [vmem:[%s3] sm:$0x2]
        %v1276 = vunpack.c.l.bf16 %v1275
        %s1278 = sor.u32 256, 2
        %1279 = vbcast.lane.b32.xlu0 %v454, %s1278
        %v1280 = vpop.permute.xlu0 %1279
        %s1282 = sor.u32 256, 10
        %1283 = vbcast.lane.b32.xlu0 %v454, %s1282
        %v1284 = vpop.permute.xlu0 %1283
        %s1286 = sor.u32 256, 18
        %1287 = vbcast.lane.b32.xlu0 %v454, %s1286
        %v1288 = vpop.permute.xlu0 %1287
        %s1290 = sor.u32 256, 26
        %1291 = vbcast.lane.b32.xlu0 %v454, %s1290
        %v1292 = vpop.permute.xlu0 %1291
        %s1294 = sor.u32 256, 2
        %1295 = vbcast.lane.b32.xlu0 %v473, %s1294
        %v1296 = vpop.permute.xlu0 %1295
        %s1298 = sor.u32 256, 10
        %1299 = vbcast.lane.b32.xlu0 %v473, %s1298
        %v1300 = vpop.permute.xlu0 %1299
        %s1302 = sor.u32 256, 18
        %1303 = vbcast.lane.b32.xlu0 %v473, %s1302
        %v1304 = vpop.permute.xlu0 %1303
        %s1306 = sor.u32 256, 26
        %1307 = vbcast.lane.b32.xlu0 %v473, %s1306
        %v1308 = vpop.permute.xlu0 %1307
        %s1310 = sor.u32 256, 2
        %1311 = vbcast.lane.b32.xlu0 %v492, %s1310
        %v1312 = vpop.permute.xlu0 %1311
        %s1314 = sor.u32 256, 10
        %1315 = vbcast.lane.b32.xlu0 %v492, %s1314
        %v1316 = vpop.permute.xlu0 %1315
        %s1318 = sor.u32 256, 18
        %1319 = vbcast.lane.b32.xlu0 %v492, %s1318
        %v1320 = vpop.permute.xlu0 %1319
        %s1322 = sor.u32 256, 26
        %1323 = vbcast.lane.b32.xlu0 %v492, %s1322
        %v1324 = vpop.permute.xlu0 %1323
        %s1326 = sor.u32 256, 2
        %1327 = vbcast.lane.b32.xlu0 %v511, %s1326
        %v1328 = vpop.permute.xlu0 %1327
        %s1330 = sor.u32 256, 10
        %1331 = vbcast.lane.b32.xlu0 %v511, %s1330
        %v1332 = vpop.permute.xlu0 %1331
        %s1334 = sor.u32 256, 18
        %1335 = vbcast.lane.b32.xlu0 %v511, %s1334
        %v1336 = vpop.permute.xlu0 %1335
        %s1338 = sor.u32 256, 26
        %1339 = vbcast.lane.b32.xlu0 %v511, %s1338
        %v1340 = vpop.permute.xlu0 %1339
        %s1342 = sor.u32 256, 2
        %1343 = vbcast.lane.b32.xlu0 %v530, %s1342
        %v1344 = vpop.permute.xlu0 %1343
        %s1346 = sor.u32 256, 10
        %1347 = vbcast.lane.b32.xlu0 %v530, %s1346
        %v1348 = vpop.permute.xlu0 %1347
        %s1350 = sor.u32 256, 18
        %1351 = vbcast.lane.b32.xlu0 %v530, %s1350
        %v1352 = vpop.permute.xlu0 %1351
        %s1354 = sor.u32 256, 26
        %1355 = vbcast.lane.b32.xlu0 %v530, %s1354
        %v1356 = vpop.permute.xlu0 %1355
        %s1358 = sor.u32 256, 2
        %1359 = vbcast.lane.b32.xlu0 %v549, %s1358
        %v1360 = vpop.permute.xlu0 %1359
        %s1362 = sor.u32 256, 10
        %1363 = vbcast.lane.b32.xlu0 %v549, %s1362
        %v1364 = vpop.permute.xlu0 %1363
        %s1366 = sor.u32 256, 18
        %1367 = vbcast.lane.b32.xlu0 %v549, %s1366
        %v1368 = vpop.permute.xlu0 %1367
        %s1370 = sor.u32 256, 26
        %1371 = vbcast.lane.b32.xlu0 %v549, %s1370
        %v1372 = vpop.permute.xlu0 %1371
        %s1374 = sor.u32 256, 2
        %1375 = vbcast.lane.b32.xlu0 %v568, %s1374
        %v1376 = vpop.permute.xlu0 %1375
        %s1378 = sor.u32 256, 10
        %1379 = vbcast.lane.b32.xlu0 %v568, %s1378
        %v1380 = vpop.permute.xlu0 %1379
        %s1382 = sor.u32 256, 18
        %1383 = vbcast.lane.b32.xlu0 %v568, %s1382
        %v1384 = vpop.permute.xlu0 %1383
        %s1386 = sor.u32 256, 26
        %1387 = vbcast.lane.b32.xlu0 %v568, %s1386
        %v1388 = vpop.permute.xlu0 %1387
        %s1390 = sor.u32 256, 2
        %1391 = vbcast.lane.b32.xlu0 %v587, %s1390
        %v1392 = vpop.permute.xlu0 %1391
        %s1394 = sor.u32 256, 10
        %1395 = vbcast.lane.b32.xlu0 %v587, %s1394
        %v1396 = vpop.permute.xlu0 %1395
        %s1398 = sor.u32 256, 18
        %1399 = vbcast.lane.b32.xlu0 %v587, %s1398
        %v1400 = vpop.permute.xlu0 %1399
        %s1402 = sor.u32 256, 26
        %1403 = vbcast.lane.b32.xlu0 %v587, %s1402
        %v1404 = vpop.permute.xlu0 %1403
        %s1406 = sor.u32 256, 2
        %1407 = vbcast.lane.b32.xlu0 %v606, %s1406
        %v1408 = vpop.permute.xlu0 %1407
        %s1410 = sor.u32 256, 10
        %1411 = vbcast.lane.b32.xlu0 %v606, %s1410
        %v1412 = vpop.permute.xlu0 %1411
        %s1414 = sor.u32 256, 18
        %1415 = vbcast.lane.b32.xlu0 %v606, %s1414
        %v1416 = vpop.permute.xlu0 %1415
        %s1418 = sor.u32 256, 26
        %1419 = vbcast.lane.b32.xlu0 %v606, %s1418
        %v1420 = vpop.permute.xlu0 %1419
        %s1422 = sor.u32 256, 2
        %1423 = vbcast.lane.b32.xlu0 %v625, %s1422
        %v1424 = vpop.permute.xlu0 %1423
        %s1426 = sor.u32 256, 10
        %1427 = vbcast.lane.b32.xlu0 %v625, %s1426
        %v1428 = vpop.permute.xlu0 %1427
        %s1430 = sor.u32 256, 18
        %1431 = vbcast.lane.b32.xlu0 %v625, %s1430
        %v1432 = vpop.permute.xlu0 %1431
        %s1434 = sor.u32 256, 26
        %1435 = vbcast.lane.b32.xlu0 %v625, %s1434
        %v1436 = vpop.permute.xlu0 %1435
        %s1438 = sor.u32 256, 2
        %1439 = vbcast.lane.b32.xlu0 %v644, %s1438
        %v1440 = vpop.permute.xlu0 %1439
        %s1442 = sor.u32 256, 10
        %1443 = vbcast.lane.b32.xlu0 %v644, %s1442
        %v1444 = vpop.permute.xlu0 %1443
        %s1446 = sor.u32 256, 18
        %1447 = vbcast.lane.b32.xlu0 %v644, %s1446
        %v1448 = vpop.permute.xlu0 %1447
        %s1450 = sor.u32 256, 26
        %1451 = vbcast.lane.b32.xlu0 %v644, %s1450
        %v1452 = vpop.permute.xlu0 %1451
        %s1454 = sor.u32 256, 2
        %1455 = vbcast.lane.b32.xlu0 %v663, %s1454
        %v1456 = vpop.permute.xlu0 %1455
        %s1458 = sor.u32 256, 10
        %1459 = vbcast.lane.b32.xlu0 %v663, %s1458
        %v1460 = vpop.permute.xlu0 %1459
        %s1462 = sor.u32 256, 18
        %1463 = vbcast.lane.b32.xlu0 %v663, %s1462
        %v1464 = vpop.permute.xlu0 %1463
        %s1466 = sor.u32 256, 26
        %1467 = vbcast.lane.b32.xlu0 %v663, %s1466
        %v1468 = vpop.permute.xlu0 %1467
        %s1470 = sor.u32 256, 2
        %1471 = vbcast.lane.b32.xlu0 %v682, %s1470
        %v1472 = vpop.permute.xlu0 %1471
        %s1474 = sor.u32 256, 10
        %1475 = vbcast.lane.b32.xlu0 %v682, %s1474
        %v1476 = vpop.permute.xlu0 %1475
        %s1478 = sor.u32 256, 18
        %1479 = vbcast.lane.b32.xlu0 %v682, %s1478
        %v1480 = vpop.permute.xlu0 %1479
        %s1482 = sor.u32 256, 26
        %1483 = vbcast.lane.b32.xlu0 %v682, %s1482
        %v1484 = vpop.permute.xlu0 %1483
        %s1486 = sor.u32 256, 2
        %1487 = vbcast.lane.b32.xlu0 %v701, %s1486
        %v1488 = vpop.permute.xlu0 %1487
        %s1490 = sor.u32 256, 10
        %1491 = vbcast.lane.b32.xlu0 %v701, %s1490
        %v1492 = vpop.permute.xlu0 %1491
        %s1494 = sor.u32 256, 18
        %1495 = vbcast.lane.b32.xlu0 %v701, %s1494
        %v1496 = vpop.permute.xlu0 %1495
        %s1498 = sor.u32 256, 26
        %1499 = vbcast.lane.b32.xlu0 %v701, %s1498
        %v1500 = vpop.permute.xlu0 %1499
        %s1502 = sor.u32 256, 2
        %1503 = vbcast.lane.b32.xlu0 %v720, %s1502
        %v1504 = vpop.permute.xlu0 %1503
        %s1506 = sor.u32 256, 10
        %1507 = vbcast.lane.b32.xlu0 %v720, %s1506
        %v1508 = vpop.permute.xlu0 %1507
        %s1510 = sor.u32 256, 18
        %1511 = vbcast.lane.b32.xlu0 %v720, %s1510
        %v1512 = vpop.permute.xlu0 %1511
        %s1514 = sor.u32 256, 26
        %1515 = vbcast.lane.b32.xlu0 %v720, %s1514
        %v1516 = vpop.permute.xlu0 %1515
        %s1518 = sor.u32 256, 2
        %1519 = vbcast.lane.b32.xlu0 %v739, %s1518
        %v1520 = vpop.permute.xlu0 %1519
        %s1522 = sor.u32 256, 10
        %1523 = vbcast.lane.b32.xlu0 %v739, %s1522
        %v1524 = vpop.permute.xlu0 %1523
        %s1526 = sor.u32 256, 18
        %1527 = vbcast.lane.b32.xlu0 %v739, %s1526
        %v1528 = vpop.permute.xlu0 %1527
        %s1530 = sor.u32 256, 26
        %1531 = vbcast.lane.b32.xlu0 %v739, %s1530
        %v1532 = vpop.permute.xlu0 %1531
        %v1533 = vlaneseq
        %v1534 = vshrl.u32 %v1533, 7
        %v1535 = vsub.s32 2, %v1534
        %v1536 = vrot.slane %v1276, %v1535
        %v1537 = vmul.f32 %v1280, %v1536
        %v1538 = vmul.f32 %v1284, %v1536
        %v1539 = vmul.f32 %v1288, %v1536
        %v1540 = vmul.f32 %v1292, %v1536
        %v1541 = vmul.f32 %v1296, %v1536
        %v1542 = vmul.f32 %v1300, %v1536
        %v1543 = vmul.f32 %v1304, %v1536
        %v1544 = vmul.f32 %v1308, %v1536
        %v1545 = vmul.f32 %v1312, %v1536
        %v1546 = vmul.f32 %v1316, %v1536
        %v1547 = vmul.f32 %v1320, %v1536
        %v1548 = vmul.f32 %v1324, %v1536
        %v1549 = vmul.f32 %v1328, %v1536
        %v1550 = vmul.f32 %v1332, %v1536
        %v1551 = vmul.f32 %v1336, %v1536
        %v1552 = vmul.f32 %v1340, %v1536
        %v1553 = vmul.f32 %v1344, %v1536
        %v1554 = vmul.f32 %v1348, %v1536
        %v1555 = vmul.f32 %v1352, %v1536
        %v1556 = vmul.f32 %v1356, %v1536
        %v1557 = vmul.f32 %v1360, %v1536
        %v1558 = vmul.f32 %v1364, %v1536
        %v1559 = vmul.f32 %v1368, %v1536
        %v1560 = vmul.f32 %v1372, %v1536
        %v1561 = vmul.f32 %v1376, %v1536
        %v1562 = vmul.f32 %v1380, %v1536
        %v1563 = vmul.f32 %v1384, %v1536
        %v1564 = vmul.f32 %v1388, %v1536
        %v1565 = vmul.f32 %v1392, %v1536
        %v1566 = vmul.f32 %v1396, %v1536
        %v1567 = vmul.f32 %v1400, %v1536
        %v1568 = vmul.f32 %v1404, %v1536
        %v1569 = vmul.f32 %v1408, %v1536
        %v1570 = vmul.f32 %v1412, %v1536
        %v1571 = vmul.f32 %v1416, %v1536
        %v1572 = vmul.f32 %v1420, %v1536
        %v1573 = vmul.f32 %v1424, %v1536
        %v1574 = vmul.f32 %v1428, %v1536
        %v1575 = vmul.f32 %v1432, %v1536
        %v1576 = vmul.f32 %v1436, %v1536
        %v1577 = vmul.f32 %v1440, %v1536
        %v1578 = vmul.f32 %v1444, %v1536
        %v1579 = vmul.f32 %v1448, %v1536
        %v1580 = vmul.f32 %v1452, %v1536
        %v1581 = vmul.f32 %v1456, %v1536
        %v1582 = vmul.f32 %v1460, %v1536
        %v1583 = vmul.f32 %v1464, %v1536
        %v1584 = vmul.f32 %v1468, %v1536
        %v1585 = vmul.f32 %v1472, %v1536
        %v1586 = vmul.f32 %v1476, %v1536
        %v1587 = vmul.f32 %v1480, %v1536
        %v1588 = vmul.f32 %v1484, %v1536
        %v1589 = vmul.f32 %v1488, %v1536
        %v1590 = vmul.f32 %v1492, %v1536
        %v1591 = vmul.f32 %v1496, %v1536
        %v1592 = vmul.f32 %v1500, %v1536
        %v1593 = vmul.f32 %v1504, %v1536
        %v1594 = vmul.f32 %v1508, %v1536
        %v1595 = vmul.f32 %v1512, %v1536
        %v1596 = vmul.f32 %v1516, %v1536
        %v1597 = vmul.f32 %v1520, %v1536
        %v1598 = vmul.f32 %v1524, %v1536
        %v1599 = vmul.f32 %v1528, %v1536
        %v1600 = vmul.f32 %v1532, %v1536
        %v1601 = vadd.f32 %v1211, %v1537
        %v1602 = vadd.f32 %v1212, %v1538
        %v1603 = vadd.f32 %v1213, %v1539
        %v1604 = vadd.f32 %v1214, %v1540
        %v1605 = vadd.f32 %v1215, %v1541
        %v1606 = vadd.f32 %v1216, %v1542
        %v1607 = vadd.f32 %v1217, %v1543
        %v1608 = vadd.f32 %v1218, %v1544
        %v1609 = vadd.f32 %v1219, %v1545
        %v1610 = vadd.f32 %v1220, %v1546
        %v1611 = vadd.f32 %v1221, %v1547
        %v1612 = vadd.f32 %v1222, %v1548
        %v1613 = vadd.f32 %v1223, %v1549
        %v1614 = vadd.f32 %v1224, %v1550
        %v1615 = vadd.f32 %v1225, %v1551
        %v1616 = vadd.f32 %v1226, %v1552
        %v1617 = vadd.f32 %v1227, %v1553
        %v1618 = vadd.f32 %v1228, %v1554
        %v1619 = vadd.f32 %v1229, %v1555
        %v1620 = vadd.f32 %v1230, %v1556
        %v1621 = vadd.f32 %v1231, %v1557
        %v1622 = vadd.f32 %v1232, %v1558
        %v1623 = vadd.f32 %v1233, %v1559
        %v1624 = vadd.f32 %v1234, %v1560
        %v1625 = vadd.f32 %v1235, %v1561
        %v1626 = vadd.f32 %v1236, %v1562
        %v1627 = vadd.f32 %v1237, %v1563
        %v1628 = vadd.f32 %v1238, %v1564
        %v1629 = vadd.f32 %v1239, %v1565
        %v1630 = vadd.f32 %v1240, %v1566
        %v1631 = vadd.f32 %v1241, %v1567
        %v1632 = vadd.f32 %v1242, %v1568
        %v1633 = vadd.f32 %v1243, %v1569
        %v1634 = vadd.f32 %v1244, %v1570
        %v1635 = vadd.f32 %v1245, %v1571
        %v1636 = vadd.f32 %v1246, %v1572
        %v1637 = vadd.f32 %v1247, %v1573
        %v1638 = vadd.f32 %v1248, %v1574
        %v1639 = vadd.f32 %v1249, %v1575
        %v1640 = vadd.f32 %v1250, %v1576
        %v1641 = vadd.f32 %v1251, %v1577
        %v1642 = vadd.f32 %v1252, %v1578
        %v1643 = vadd.f32 %v1253, %v1579
        %v1644 = vadd.f32 %v1254, %v1580
        %v1645 = vadd.f32 %v1255, %v1581
        %v1646 = vadd.f32 %v1256, %v1582
        %v1647 = vadd.f32 %v1257, %v1583
        %v1648 = vadd.f32 %v1258, %v1584
        %v1649 = vadd.f32 %v1259, %v1585
        %v1650 = vadd.f32 %v1260, %v1586
        %v1651 = vadd.f32 %v1261, %v1587
        %v1652 = vadd.f32 %v1262, %v1588
        %v1653 = vadd.f32 %v1263, %v1589
        %v1654 = vadd.f32 %v1264, %v1590
        %v1655 = vadd.f32 %v1265, %v1591
        %v1656 = vadd.f32 %v1266, %v1592
        %v1657 = vadd.f32 %v1267, %v1593
        %v1658 = vadd.f32 %v1268, %v1594
        %v1659 = vadd.f32 %v1269, %v1595
        %v1660 = vadd.f32 %v1270, %v1596
        %v1661 = vadd.f32 %v1271, %v1597
        %v1662 = vadd.f32 %v1272, %v1598
        %v1663 = vadd.f32 %v1273, %v1599
        %v1664 = vadd.f32 %v1274, %v1600
        %v1665 = vld [vmem:[#allocation2 + $0x1] sm:$0xff]
        %v1666 = vld [vmem:[#allocation2 + $0x9] sm:$0xff]
        %v1667 = vlaneseq
        %v1668 = vshrl.u32 %v1667, 7
        %v1669 = vsub.s32 0, %v1668
        %v1670 = vrot.slane %v1665, %v1669
        %1672 = vbcast.lane.b32.xlu0 %v1670, 256
        %v1673 = vpop.permute.xlu0 %1672
        %s1675 = sor.u32 256, 8
        %1676 = vbcast.lane.b32.xlu0 %v1670, %s1675
        %v1677 = vpop.permute.xlu0 %1676
        %s1679 = sor.u32 256, 16
        %1680 = vbcast.lane.b32.xlu0 %v1670, %s1679
        %v1681 = vpop.permute.xlu0 %1680
        %s1683 = sor.u32 256, 24
        %1684 = vbcast.lane.b32.xlu0 %v1670, %s1683
        %v1685 = vpop.permute.xlu0 %1684
        %v1686 = vlaneseq
        %v1687 = vshrl.u32 %v1686, 7
        %v1688 = vsub.s32 1, %v1687
        %v1689 = vrot.slane %v1665, %v1688
        %1691 = vbcast.lane.b32.xlu0 %v1689, 256
        %v1692 = vpop.permute.xlu0 %1691
        %s1694 = sor.u32 256, 8
        %1695 = vbcast.lane.b32.xlu0 %v1689, %s1694
        %v1696 = vpop.permute.xlu0 %1695
        %s1698 = sor.u32 256, 16
        %1699 = vbcast.lane.b32.xlu0 %v1689, %s1698
        %v1700 = vpop.permute.xlu0 %1699
        %s1702 = sor.u32 256, 24
        %1703 = vbcast.lane.b32.xlu0 %v1689, %s1702
        %v1704 = vpop.permute.xlu0 %1703
        %v1705 = vlaneseq
        %v1706 = vshrl.u32 %v1705, 7
        %v1707 = vsub.s32 2, %v1706
        %v1708 = vrot.slane %v1665, %v1707
        %1710 = vbcast.lane.b32.xlu0 %v1708, 256
        %v1711 = vpop.permute.xlu0 %1710
        %s1713 = sor.u32 256, 8
        %1714 = vbcast.lane.b32.xlu0 %v1708, %s1713
        %v1715 = vpop.permute.xlu0 %1714
        %s1717 = sor.u32 256, 16
        %1718 = vbcast.lane.b32.xlu0 %v1708, %s1717
        %v1719 = vpop.permute.xlu0 %1718
        %s1721 = sor.u32 256, 24
        %1722 = vbcast.lane.b32.xlu0 %v1708, %s1721
        %v1723 = vpop.permute.xlu0 %1722
        %v1724 = vlaneseq
        %v1725 = vshrl.u32 %v1724, 7
        %v1726 = vsub.s32 3, %v1725
        %v1727 = vrot.slane %v1665, %v1726
        %1729 = vbcast.lane.b32.xlu0 %v1727, 256
        %v1730 = vpop.permute.xlu0 %1729
        %s1732 = sor.u32 256, 8
        %1733 = vbcast.lane.b32.xlu0 %v1727, %s1732
        %v1734 = vpop.permute.xlu0 %1733
        %s1736 = sor.u32 256, 16
        %1737 = vbcast.lane.b32.xlu0 %v1727, %s1736
        %v1738 = vpop.permute.xlu0 %1737
        %s1740 = sor.u32 256, 24
        %1741 = vbcast.lane.b32.xlu0 %v1727, %s1740
        %v1742 = vpop.permute.xlu0 %1741
        %v1743 = vlaneseq
        %v1744 = vshrl.u32 %v1743, 7
        %v1745 = vsub.s32 4, %v1744
        %v1746 = vrot.slane %v1665, %v1745
        %1748 = vbcast.lane.b32.xlu0 %v1746, 256
        %v1749 = vpop.permute.xlu0 %1748
        %s1751 = sor.u32 256, 8
        %1752 = vbcast.lane.b32.xlu0 %v1746, %s1751
        %v1753 = vpop.permute.xlu0 %1752
        %s1755 = sor.u32 256, 16
        %1756 = vbcast.lane.b32.xlu0 %v1746, %s1755
        %v1757 = vpop.permute.xlu0 %1756
        %s1759 = sor.u32 256, 24
        %1760 = vbcast.lane.b32.xlu0 %v1746, %s1759
        %v1761 = vpop.permute.xlu0 %1760
        %v1762 = vlaneseq
        %v1763 = vshrl.u32 %v1762, 7
        %v1764 = vsub.s32 5, %v1763
        %v1765 = vrot.slane %v1665, %v1764
        %1767 = vbcast.lane.b32.xlu0 %v1765, 256
        %v1768 = vpop.permute.xlu0 %1767
        %s1770 = sor.u32 256, 8
        %1771 = vbcast.lane.b32.xlu0 %v1765, %s1770
        %v1772 = vpop.permute.xlu0 %1771
        %s1774 = sor.u32 256, 16
        %1775 = vbcast.lane.b32.xlu0 %v1765, %s1774
        %v1776 = vpop.permute.xlu0 %1775
        %s1778 = sor.u32 256, 24
        %1779 = vbcast.lane.b32.xlu0 %v1765, %s1778
        %v1780 = vpop.permute.xlu0 %1779
        %v1781 = vlaneseq
        %v1782 = vshrl.u32 %v1781, 7
        %v1783 = vsub.s32 6, %v1782
        %v1784 = vrot.slane %v1665, %v1783
        %1786 = vbcast.lane.b32.xlu0 %v1784, 256
        %v1787 = vpop.permute.xlu0 %1786
        %s1789 = sor.u32 256, 8
        %1790 = vbcast.lane.b32.xlu0 %v1784, %s1789
        %v1791 = vpop.permute.xlu0 %1790
        %s1793 = sor.u32 256, 16
        %1794 = vbcast.lane.b32.xlu0 %v1784, %s1793
        %v1795 = vpop.permute.xlu0 %1794
        %s1797 = sor.u32 256, 24
        %1798 = vbcast.lane.b32.xlu0 %v1784, %s1797
        %v1799 = vpop.permute.xlu0 %1798
        %v1800 = vlaneseq
        %v1801 = vshrl.u32 %v1800, 7
        %v1802 = vsub.s32 7, %v1801
        %v1803 = vrot.slane %v1665, %v1802
        %1805 = vbcast.lane.b32.xlu0 %v1803, 256
        %v1806 = vpop.permute.xlu0 %1805
        %s1808 = sor.u32 256, 8
        %1809 = vbcast.lane.b32.xlu0 %v1803, %s1808
        %v1810 = vpop.permute.xlu0 %1809
        %s1812 = sor.u32 256, 16
        %1813 = vbcast.lane.b32.xlu0 %v1803, %s1812
        %v1814 = vpop.permute.xlu0 %1813
        %s1816 = sor.u32 256, 24
        %1817 = vbcast.lane.b32.xlu0 %v1803, %s1816
        %v1818 = vpop.permute.xlu0 %1817
        %v1819 = vlaneseq
        %v1820 = vshrl.u32 %v1819, 7
        %v1821 = vsub.s32 0, %v1820
        %v1822 = vrot.slane %v1666, %v1821
        %1824 = vbcast.lane.b32.xlu0 %v1822, 256
        %v1825 = vpop.permute.xlu0 %1824
        %s1827 = sor.u32 256, 8
        %1828 = vbcast.lane.b32.xlu0 %v1822, %s1827
        %v1829 = vpop.permute.xlu0 %1828
        %s1831 = sor.u32 256, 16
        %1832 = vbcast.lane.b32.xlu0 %v1822, %s1831
        %v1833 = vpop.permute.xlu0 %1832
        %s1835 = sor.u32 256, 24
        %1836 = vbcast.lane.b32.xlu0 %v1822, %s1835
        %v1837 = vpop.permute.xlu0 %1836
        %v1838 = vlaneseq
        %v1839 = vshrl.u32 %v1838, 7
        %v1840 = vsub.s32 1, %v1839
        %v1841 = vrot.slane %v1666, %v1840
        %1843 = vbcast.lane.b32.xlu0 %v1841, 256
        %v1844 = vpop.permute.xlu0 %1843
        %s1846 = sor.u32 256, 8
        %1847 = vbcast.lane.b32.xlu0 %v1841, %s1846
        %v1848 = vpop.permute.xlu0 %1847
        %s1850 = sor.u32 256, 16
        %1851 = vbcast.lane.b32.xlu0 %v1841, %s1850
        %v1852 = vpop.permute.xlu0 %1851
        %s1854 = sor.u32 256, 24
        %1855 = vbcast.lane.b32.xlu0 %v1841, %s1854
        %v1856 = vpop.permute.xlu0 %1855
        %v1857 = vlaneseq
        %v1858 = vshrl.u32 %v1857, 7
        %v1859 = vsub.s32 2, %v1858
        %v1860 = vrot.slane %v1666, %v1859
        %1862 = vbcast.lane.b32.xlu0 %v1860, 256
        %v1863 = vpop.permute.xlu0 %1862
        %s1865 = sor.u32 256, 8
        %1866 = vbcast.lane.b32.xlu0 %v1860, %s1865
        %v1867 = vpop.permute.xlu0 %1866
        %s1869 = sor.u32 256, 16
        %1870 = vbcast.lane.b32.xlu0 %v1860, %s1869
        %v1871 = vpop.permute.xlu0 %1870
        %s1873 = sor.u32 256, 24
        %1874 = vbcast.lane.b32.xlu0 %v1860, %s1873
        %v1875 = vpop.permute.xlu0 %1874
        %v1876 = vlaneseq
        %v1877 = vshrl.u32 %v1876, 7
        %v1878 = vsub.s32 3, %v1877
        %v1879 = vrot.slane %v1666, %v1878
        %1881 = vbcast.lane.b32.xlu0 %v1879, 256
        %v1882 = vpop.permute.xlu0 %1881
        %s1884 = sor.u32 256, 8
        %1885 = vbcast.lane.b32.xlu0 %v1879, %s1884
        %v1886 = vpop.permute.xlu0 %1885
        %s1888 = sor.u32 256, 16
        %1889 = vbcast.lane.b32.xlu0 %v1879, %s1888
        %v1890 = vpop.permute.xlu0 %1889
        %s1892 = sor.u32 256, 24
        %1893 = vbcast.lane.b32.xlu0 %v1879, %s1892
        %v1894 = vpop.permute.xlu0 %1893
        %v1895 = vlaneseq
        %v1896 = vshrl.u32 %v1895, 7
        %v1897 = vsub.s32 4, %v1896
        %v1898 = vrot.slane %v1666, %v1897
        %1900 = vbcast.lane.b32.xlu0 %v1898, 256
        %v1901 = vpop.permute.xlu0 %1900
        %s1903 = sor.u32 256, 8
        %1904 = vbcast.lane.b32.xlu0 %v1898, %s1903
        %v1905 = vpop.permute.xlu0 %1904
        %s1907 = sor.u32 256, 16
        %1908 = vbcast.lane.b32.xlu0 %v1898, %s1907
        %v1909 = vpop.permute.xlu0 %1908
        %s1911 = sor.u32 256, 24
        %1912 = vbcast.lane.b32.xlu0 %v1898, %s1911
        %v1913 = vpop.permute.xlu0 %1912
        %v1914 = vlaneseq
        %v1915 = vshrl.u32 %v1914, 7
        %v1916 = vsub.s32 5, %v1915
        %v1917 = vrot.slane %v1666, %v1916
        %1919 = vbcast.lane.b32.xlu0 %v1917, 256
        %v1920 = vpop.permute.xlu0 %1919
        %s1922 = sor.u32 256, 8
        %1923 = vbcast.lane.b32.xlu0 %v1917, %s1922
        %v1924 = vpop.permute.xlu0 %1923
        %s1926 = sor.u32 256, 16
        %1927 = vbcast.lane.b32.xlu0 %v1917, %s1926
        %v1928 = vpop.permute.xlu0 %1927
        %s1930 = sor.u32 256, 24
        %1931 = vbcast.lane.b32.xlu0 %v1917, %s1930
        %v1932 = vpop.permute.xlu0 %1931
        %v1933 = vlaneseq
        %v1934 = vshrl.u32 %v1933, 7
        %v1935 = vsub.s32 6, %v1934
        %v1936 = vrot.slane %v1666, %v1935
        %1938 = vbcast.lane.b32.xlu0 %v1936, 256
        %v1939 = vpop.permute.xlu0 %1938
        %s1941 = sor.u32 256, 8
        %1942 = vbcast.lane.b32.xlu0 %v1936, %s1941
        %v1943 = vpop.permute.xlu0 %1942
        %s1945 = sor.u32 256, 16
        %1946 = vbcast.lane.b32.xlu0 %v1936, %s1945
        %v1947 = vpop.permute.xlu0 %1946
        %s1949 = sor.u32 256, 24
        %1950 = vbcast.lane.b32.xlu0 %v1936, %s1949
        %v1951 = vpop.permute.xlu0 %1950
        %v1952 = vlaneseq
        %v1953 = vshrl.u32 %v1952, 7
        %v1954 = vsub.s32 7, %v1953
        %v1955 = vrot.slane %v1666, %v1954
        %1957 = vbcast.lane.b32.xlu0 %v1955, 256
        %v1958 = vpop.permute.xlu0 %1957
        %s1960 = sor.u32 256, 8
        %1961 = vbcast.lane.b32.xlu0 %v1955, %s1960
        %v1962 = vpop.permute.xlu0 %1961
        %s1964 = sor.u32 256, 16
        %1965 = vbcast.lane.b32.xlu0 %v1955, %s1964
        %v1966 = vpop.permute.xlu0 %1965
        %s1968 = sor.u32 256, 24
        %1969 = vbcast.lane.b32.xlu0 %v1955, %s1968
        %v1970 = vpop.permute.xlu0 %1969
        %v1971 = vlaneseq
        %v1972 = vshrl.u32 %v1971, 7
        %v1973 = vsub.s32 3, %v1972
        %v1974 = vrot.slane %v1276, %v1973
        %v1975 = vmul.f32 %v1673, %v1974
        %v1976 = vmul.f32 %v1677, %v1974
        %v1977 = vmul.f32 %v1681, %v1974
        %v1978 = vmul.f32 %v1685, %v1974
        %v1979 = vmul.f32 %v1692, %v1974
        %v1980 = vmul.f32 %v1696, %v1974
        %v1981 = vmul.f32 %v1700, %v1974
        %v1982 = vmul.f32 %v1704, %v1974
        %v1983 = vmul.f32 %v1711, %v1974
        %v1984 = vmul.f32 %v1715, %v1974
        %v1985 = vmul.f32 %v1719, %v1974
        %v1986 = vmul.f32 %v1723, %v1974
        %v1987 = vmul.f32 %v1730, %v1974
        %v1988 = vmul.f32 %v1734, %v1974
        %v1989 = vmul.f32 %v1738, %v1974
        %v1990 = vmul.f32 %v1742, %v1974
        %v1991 = vmul.f32 %v1749, %v1974
        %v1992 = vmul.f32 %v1753, %v1974
        %v1993 = vmul.f32 %v1757, %v1974
        %v1994 = vmul.f32 %v1761, %v1974
        %v1995 = vmul.f32 %v1768, %v1974
        %v1996 = vmul.f32 %v1772, %v1974
        %v1997 = vmul.f32 %v1776, %v1974
        %v1998 = vmul.f32 %v1780, %v1974
        %v1999 = vmul.f32 %v1787, %v1974
        %v2000 = vmul.f32 %v1791, %v1974
        %v2001 = vmul.f32 %v1795, %v1974
        %v2002 = vmul.f32 %v1799, %v1974
        %v2003 = vmul.f32 %v1806, %v1974
        %v2004 = vmul.f32 %v1810, %v1974
        %v2005 = vmul.f32 %v1814, %v1974
        %v2006 = vmul.f32 %v1818, %v1974
        %v2007 = vmul.f32 %v1825, %v1974
        %v2008 = vmul.f32 %v1829, %v1974
        %v2009 = vmul.f32 %v1833, %v1974
        %v2010 = vmul.f32 %v1837, %v1974
        %v2011 = vmul.f32 %v1844, %v1974
        %v2012 = vmul.f32 %v1848, %v1974
        %v2013 = vmul.f32 %v1852, %v1974
        %v2014 = vmul.f32 %v1856, %v1974
        %v2015 = vmul.f32 %v1863, %v1974
        %v2016 = vmul.f32 %v1867, %v1974
        %v2017 = vmul.f32 %v1871, %v1974
        %v2018 = vmul.f32 %v1875, %v1974
        %v2019 = vmul.f32 %v1882, %v1974
        %v2020 = vmul.f32 %v1886, %v1974
        %v2021 = vmul.f32 %v1890, %v1974
        %v2022 = vmul.f32 %v1894, %v1974
        %v2023 = vmul.f32 %v1901, %v1974
        %v2024 = vmul.f32 %v1905, %v1974
        %v2025 = vmul.f32 %v1909, %v1974
        %v2026 = vmul.f32 %v1913, %v1974
        %v2027 = vmul.f32 %v1920, %v1974
        %v2028 = vmul.f32 %v1924, %v1974
        %v2029 = vmul.f32 %v1928, %v1974
        %v2030 = vmul.f32 %v1932, %v1974
        %v2031 = vmul.f32 %v1939, %v1974
        %v2032 = vmul.f32 %v1943, %v1974
        %v2033 = vmul.f32 %v1947, %v1974
        %v2034 = vmul.f32 %v1951, %v1974
        %v2035 = vmul.f32 %v1958, %v1974
        %v2036 = vmul.f32 %v1962, %v1974
        %v2037 = vmul.f32 %v1966, %v1974
        %v2038 = vmul.f32 %v1970, %v1974
        %v2039 = vadd.f32 %v1601, %v1975
        %v2040 = vadd.f32 %v1602, %v1976
        %v2041 = vadd.f32 %v1603, %v1977
        %v2042 = vadd.f32 %v1604, %v1978
        %v2043 = vadd.f32 %v1605, %v1979
        %v2044 = vadd.f32 %v1606, %v1980
        %v2045 = vadd.f32 %v1607, %v1981
        %v2046 = vadd.f32 %v1608, %v1982
        %v2047 = vadd.f32 %v1609, %v1983
        %v2048 = vadd.f32 %v1610, %v1984
        %v2049 = vadd.f32 %v1611, %v1985
        %v2050 = vadd.f32 %v1612, %v1986
        %v2051 = vadd.f32 %v1613, %v1987
        %v2052 = vadd.f32 %v1614, %v1988
        %v2053 = vadd.f32 %v1615, %v1989
        %v2054 = vadd.f32 %v1616, %v1990
        %v2055 = vadd.f32 %v1617, %v1991
        %v2056 = vadd.f32 %v1618, %v1992
        %v2057 = vadd.f32 %v1619, %v1993
        %v2058 = vadd.f32 %v1620, %v1994
        %v2059 = vadd.f32 %v1621, %v1995
        %v2060 = vadd.f32 %v1622, %v1996
        %v2061 = vadd.f32 %v1623, %v1997
        %v2062 = vadd.f32 %v1624, %v1998
        %v2063 = vadd.f32 %v1625, %v1999
        %v2064 = vadd.f32 %v1626, %v2000
        %v2065 = vadd.f32 %v1627, %v2001
        %v2066 = vadd.f32 %v1628, %v2002
        %v2067 = vadd.f32 %v1629, %v2003
        %v2068 = vadd.f32 %v1630, %v2004
        %v2069 = vadd.f32 %v1631, %v2005
        %v2070 = vadd.f32 %v1632, %v2006
        %v2071 = vadd.f32 %v1633, %v2007
        %v2072 = vadd.f32 %v1634, %v2008
        %v2073 = vadd.f32 %v1635, %v2009
        %v2074 = vadd.f32 %v1636, %v2010
        %v2075 = vadd.f32 %v1637, %v2011
        %v2076 = vadd.f32 %v1638, %v2012
        %v2077 = vadd.f32 %v1639, %v2013
        %v2078 = vadd.f32 %v1640, %v2014
        %v2079 = vadd.f32 %v1641, %v2015
        %v2080 = vadd.f32 %v1642, %v2016
        %v2081 = vadd.f32 %v1643, %v2017
        %v2082 = vadd.f32 %v1644, %v2018
        %v2083 = vadd.f32 %v1645, %v2019
        %v2084 = vadd.f32 %v1646, %v2020
        %v2085 = vadd.f32 %v1647, %v2021
        %v2086 = vadd.f32 %v1648, %v2022
        %v2087 = vadd.f32 %v1649, %v2023
        %v2088 = vadd.f32 %v1650, %v2024
        %v2089 = vadd.f32 %v1651, %v2025
        %v2090 = vadd.f32 %v1652, %v2026
        %v2091 = vadd.f32 %v1653, %v2027
        %v2092 = vadd.f32 %v1654, %v2028
        %v2093 = vadd.f32 %v1655, %v2029
        %v2094 = vadd.f32 %v1656, %v2030
        %v2095 = vadd.f32 %v1657, %v2031
        %v2096 = vadd.f32 %v1658, %v2032
        %v2097 = vadd.f32 %v1659, %v2033
        %v2098 = vadd.f32 %v1660, %v2034
        %v2099 = vadd.f32 %v1661, %v2035
        %v2100 = vadd.f32 %v1662, %v2036
        %v2101 = vadd.f32 %v1663, %v2037
        %v2102 = vadd.f32 %v1664, %v2038
        %v2103 = vld [vmem:[%s3] sm:$0x4]
        %v2104 = vunpack.c.l.bf16 %v2103
        %s2106 = sor.u32 256, 1
        %2107 = vbcast.lane.b32.xlu0 %v1670, %s2106
        %v2108 = vpop.permute.xlu0 %2107
        %s2110 = sor.u32 256, 9
        %2111 = vbcast.lane.b32.xlu0 %v1670, %s2110
        %v2112 = vpop.permute.xlu0 %2111
        %s2114 = sor.u32 256, 17
        %2115 = vbcast.lane.b32.xlu0 %v1670, %s2114
        %v2116 = vpop.permute.xlu0 %2115
        %s2118 = sor.u32 256, 25
        %2119 = vbcast.lane.b32.xlu0 %v1670, %s2118
        %v2120 = vpop.permute.xlu0 %2119
        %s2122 = sor.u32 256, 1
        %2123 = vbcast.lane.b32.xlu0 %v1689, %s2122
        %v2124 = vpop.permute.xlu0 %2123
        %s2126 = sor.u32 256, 9
        %2127 = vbcast.lane.b32.xlu0 %v1689, %s2126
        %v2128 = vpop.permute.xlu0 %2127
        %s2130 = sor.u32 256, 17
        %2131 = vbcast.lane.b32.xlu0 %v1689, %s2130
        %v2132 = vpop.permute.xlu0 %2131
        %s2134 = sor.u32 256, 25
        %2135 = vbcast.lane.b32.xlu0 %v1689, %s2134
        %v2136 = vpop.permute.xlu0 %2135
        %s2138 = sor.u32 256, 1
        %2139 = vbcast.lane.b32.xlu0 %v1708, %s2138
        %v2140 = vpop.permute.xlu0 %2139
        %s2142 = sor.u32 256, 9
        %2143 = vbcast.lane.b32.xlu0 %v1708, %s2142
        %v2144 = vpop.permute.xlu0 %2143
        %s2146 = sor.u32 256, 17
        %2147 = vbcast.lane.b32.xlu0 %v1708, %s2146
        %v2148 = vpop.permute.xlu0 %2147
        %s2150 = sor.u32 256, 25
        %2151 = vbcast.lane.b32.xlu0 %v1708, %s2150
        %v2152 = vpop.permute.xlu0 %2151
        %s2154 = sor.u32 256, 1
        %2155 = vbcast.lane.b32.xlu0 %v1727, %s2154
        %v2156 = vpop.permute.xlu0 %2155
        %s2158 = sor.u32 256, 9
        %2159 = vbcast.lane.b32.xlu0 %v1727, %s2158
        %v2160 = vpop.permute.xlu0 %2159
        %s2162 = sor.u32 256, 17
        %2163 = vbcast.lane.b32.xlu0 %v1727, %s2162
        %v2164 = vpop.permute.xlu0 %2163
        %s2166 = sor.u32 256, 25
        %2167 = vbcast.lane.b32.xlu0 %v1727, %s2166
        %v2168 = vpop.permute.xlu0 %2167
        %s2170 = sor.u32 256, 1
        %2171 = vbcast.lane.b32.xlu0 %v1746, %s2170
        %v2172 = vpop.permute.xlu0 %2171
        %s2174 = sor.u32 256, 9
        %2175 = vbcast.lane.b32.xlu0 %v1746, %s2174
        %v2176 = vpop.permute.xlu0 %2175
        %s2178 = sor.u32 256, 17
        %2179 = vbcast.lane.b32.xlu0 %v1746, %s2178
        %v2180 = vpop.permute.xlu0 %2179
        %s2182 = sor.u32 256, 25
        %2183 = vbcast.lane.b32.xlu0 %v1746, %s2182
        %v2184 = vpop.permute.xlu0 %2183
        %s2186 = sor.u32 256, 1
        %2187 = vbcast.lane.b32.xlu0 %v1765, %s2186
        %v2188 = vpop.permute.xlu0 %2187
        %s2190 = sor.u32 256, 9
        %2191 = vbcast.lane.b32.xlu0 %v1765, %s2190
        %v2192 = vpop.permute.xlu0 %2191
        %s2194 = sor.u32 256, 17
        %2195 = vbcast.lane.b32.xlu0 %v1765, %s2194
        %v2196 = vpop.permute.xlu0 %2195
        %s2198 = sor.u32 256, 25
        %2199 = vbcast.lane.b32.xlu0 %v1765, %s2198
        %v2200 = vpop.permute.xlu0 %2199
        %s2202 = sor.u32 256, 1
        %2203 = vbcast.lane.b32.xlu0 %v1784, %s2202
        %v2204 = vpop.permute.xlu0 %2203
        %s2206 = sor.u32 256, 9
        %2207 = vbcast.lane.b32.xlu0 %v1784, %s2206
        %v2208 = vpop.permute.xlu0 %2207
        %s2210 = sor.u32 256, 17
        %2211 = vbcast.lane.b32.xlu0 %v1784, %s2210
        %v2212 = vpop.permute.xlu0 %2211
        %s2214 = sor.u32 256, 25
        %2215 = vbcast.lane.b32.xlu0 %v1784, %s2214
        %v2216 = vpop.permute.xlu0 %2215
        %s2218 = sor.u32 256, 1
        %2219 = vbcast.lane.b32.xlu0 %v1803, %s2218
        %v2220 = vpop.permute.xlu0 %2219
        %s2222 = sor.u32 256, 9
        %2223 = vbcast.lane.b32.xlu0 %v1803, %s2222
        %v2224 = vpop.permute.xlu0 %2223
        %s2226 = sor.u32 256, 17
        %2227 = vbcast.lane.b32.xlu0 %v1803, %s2226
        %v2228 = vpop.permute.xlu0 %2227
        %s2230 = sor.u32 256, 25
        %2231 = vbcast.lane.b32.xlu0 %v1803, %s2230
        %v2232 = vpop.permute.xlu0 %2231
        %s2234 = sor.u32 256, 1
        %2235 = vbcast.lane.b32.xlu0 %v1822, %s2234
        %v2236 = vpop.permute.xlu0 %2235
        %s2238 = sor.u32 256, 9
        %2239 = vbcast.lane.b32.xlu0 %v1822, %s2238
        %v2240 = vpop.permute.xlu0 %2239
        %s2242 = sor.u32 256, 17
        %2243 = vbcast.lane.b32.xlu0 %v1822, %s2242
        %v2244 = vpop.permute.xlu0 %2243
        %s2246 = sor.u32 256, 25
        %2247 = vbcast.lane.b32.xlu0 %v1822, %s2246
        %v2248 = vpop.permute.xlu0 %2247
        %s2250 = sor.u32 256, 1
        %2251 = vbcast.lane.b32.xlu0 %v1841, %s2250
        %v2252 = vpop.permute.xlu0 %2251
        %s2254 = sor.u32 256, 9
        %2255 = vbcast.lane.b32.xlu0 %v1841, %s2254
        %v2256 = vpop.permute.xlu0 %2255
        %s2258 = sor.u32 256, 17
        %2259 = vbcast.lane.b32.xlu0 %v1841, %s2258
        %v2260 = vpop.permute.xlu0 %2259
        %s2262 = sor.u32 256, 25
        %2263 = vbcast.lane.b32.xlu0 %v1841, %s2262
        %v2264 = vpop.permute.xlu0 %2263
        %s2266 = sor.u32 256, 1
        %2267 = vbcast.lane.b32.xlu0 %v1860, %s2266
        %v2268 = vpop.permute.xlu0 %2267
        %s2270 = sor.u32 256, 9
        %2271 = vbcast.lane.b32.xlu0 %v1860, %s2270
        %v2272 = vpop.permute.xlu0 %2271
        %s2274 = sor.u32 256, 17
        %2275 = vbcast.lane.b32.xlu0 %v1860, %s2274
        %v2276 = vpop.permute.xlu0 %2275
        %s2278 = sor.u32 256, 25
        %2279 = vbcast.lane.b32.xlu0 %v1860, %s2278
        %v2280 = vpop.permute.xlu0 %2279
        %s2282 = sor.u32 256, 1
        %2283 = vbcast.lane.b32.xlu0 %v1879, %s2282
        %v2284 = vpop.permute.xlu0 %2283
        %s2286 = sor.u32 256, 9
        %2287 = vbcast.lane.b32.xlu0 %v1879, %s2286
        %v2288 = vpop.permute.xlu0 %2287
        %s2290 = sor.u32 256, 17
        %2291 = vbcast.lane.b32.xlu0 %v1879, %s2290
        %v2292 = vpop.permute.xlu0 %2291
        %s2294 = sor.u32 256, 25
        %2295 = vbcast.lane.b32.xlu0 %v1879, %s2294
        %v2296 = vpop.permute.xlu0 %2295
        %s2298 = sor.u32 256, 1
        %2299 = vbcast.lane.b32.xlu0 %v1898, %s2298
        %v2300 = vpop.permute.xlu0 %2299
        %s2302 = sor.u32 256, 9
        %2303 = vbcast.lane.b32.xlu0 %v1898, %s2302
        %v2304 = vpop.permute.xlu0 %2303
        %s2306 = sor.u32 256, 17
        %2307 = vbcast.lane.b32.xlu0 %v1898, %s2306
        %v2308 = vpop.permute.xlu0 %2307
        %s2310 = sor.u32 256, 25
        %2311 = vbcast.lane.b32.xlu0 %v1898, %s2310
        %v2312 = vpop.permute.xlu0 %2311
        %s2314 = sor.u32 256, 1
        %2315 = vbcast.lane.b32.xlu0 %v1917, %s2314
        %v2316 = vpop.permute.xlu0 %2315
        %s2318 = sor.u32 256, 9
        %2319 = vbcast.lane.b32.xlu0 %v1917, %s2318
        %v2320 = vpop.permute.xlu0 %2319
        %s2322 = sor.u32 256, 17
        %2323 = vbcast.lane.b32.xlu0 %v1917, %s2322
        %v2324 = vpop.permute.xlu0 %2323
        %s2326 = sor.u32 256, 25
        %2327 = vbcast.lane.b32.xlu0 %v1917, %s2326
        %v2328 = vpop.permute.xlu0 %2327
        %s2330 = sor.u32 256, 1
        %2331 = vbcast.lane.b32.xlu0 %v1936, %s2330
        %v2332 = vpop.permute.xlu0 %2331
        %s2334 = sor.u32 256, 9
        %2335 = vbcast.lane.b32.xlu0 %v1936, %s2334
        %v2336 = vpop.permute.xlu0 %2335
        %s2338 = sor.u32 256, 17
        %2339 = vbcast.lane.b32.xlu0 %v1936, %s2338
        %v2340 = vpop.permute.xlu0 %2339
        %s2342 = sor.u32 256, 25
        %2343 = vbcast.lane.b32.xlu0 %v1936, %s2342
        %v2344 = vpop.permute.xlu0 %2343
        %s2346 = sor.u32 256, 1
        %2347 = vbcast.lane.b32.xlu0 %v1955, %s2346
        %v2348 = vpop.permute.xlu0 %2347
        %s2350 = sor.u32 256, 9
        %2351 = vbcast.lane.b32.xlu0 %v1955, %s2350
        %v2352 = vpop.permute.xlu0 %2351
        %s2354 = sor.u32 256, 17
        %2355 = vbcast.lane.b32.xlu0 %v1955, %s2354
        %v2356 = vpop.permute.xlu0 %2355
        %s2358 = sor.u32 256, 25
        %2359 = vbcast.lane.b32.xlu0 %v1955, %s2358
        %v2360 = vpop.permute.xlu0 %2359
        %v2361 = vlaneseq
        %v2362 = vshrl.u32 %v2361, 7
        %v2363 = vsub.s32 4, %v2362
        %v2364 = vrot.slane %v2104, %v2363
        %v2365 = vmul.f32 %v2108, %v2364
        %v2366 = vmul.f32 %v2112, %v2364
        %v2367 = vmul.f32 %v2116, %v2364
        %v2368 = vmul.f32 %v2120, %v2364
        %v2369 = vmul.f32 %v2124, %v2364
        %v2370 = vmul.f32 %v2128, %v2364
        %v2371 = vmul.f32 %v2132, %v2364
        %v2372 = vmul.f32 %v2136, %v2364
        %v2373 = vmul.f32 %v2140, %v2364
        %v2374 = vmul.f32 %v2144, %v2364
        %v2375 = vmul.f32 %v2148, %v2364
        %v2376 = vmul.f32 %v2152, %v2364
        %v2377 = vmul.f32 %v2156, %v2364
        %v2378 = vmul.f32 %v2160, %v2364
        %v2379 = vmul.f32 %v2164, %v2364
        %v2380 = vmul.f32 %v2168, %v2364
        %v2381 = vmul.f32 %v2172, %v2364
        %v2382 = vmul.f32 %v2176, %v2364
        %v2383 = vmul.f32 %v2180, %v2364
        %v2384 = vmul.f32 %v2184, %v2364
        %v2385 = vmul.f32 %v2188, %v2364
        %v2386 = vmul.f32 %v2192, %v2364
        %v2387 = vmul.f32 %v2196, %v2364
        %v2388 = vmul.f32 %v2200, %v2364
        %v2389 = vmul.f32 %v2204, %v2364
        %v2390 = vmul.f32 %v2208, %v2364
        %v2391 = vmul.f32 %v2212, %v2364
        %v2392 = vmul.f32 %v2216, %v2364
        %v2393 = vmul.f32 %v2220, %v2364
        %v2394 = vmul.f32 %v2224, %v2364
        %v2395 = vmul.f32 %v2228, %v2364
        %v2396 = vmul.f32 %v2232, %v2364
        %v2397 = vmul.f32 %v2236, %v2364
        %v2398 = vmul.f32 %v2240, %v2364
        %v2399 = vmul.f32 %v2244, %v2364
        %v2400 = vmul.f32 %v2248, %v2364
        %v2401 = vmul.f32 %v2252, %v2364
        %v2402 = vmul.f32 %v2256, %v2364
        %v2403 = vmul.f32 %v2260, %v2364
        %v2404 = vmul.f32 %v2264, %v2364
        %v2405 = vmul.f32 %v2268, %v2364
        %v2406 = vmul.f32 %v2272, %v2364
        %v2407 = vmul.f32 %v2276, %v2364
        %v2408 = vmul.f32 %v2280, %v2364
        %v2409 = vmul.f32 %v2284, %v2364
        %v2410 = vmul.f32 %v2288, %v2364
        %v2411 = vmul.f32 %v2292, %v2364
        %v2412 = vmul.f32 %v2296, %v2364
        %v2413 = vmul.f32 %v2300, %v2364
        %v2414 = vmul.f32 %v2304, %v2364
        %v2415 = vmul.f32 %v2308, %v2364
        %v2416 = vmul.f32 %v2312, %v2364
        %v2417 = vmul.f32 %v2316, %v2364
        %v2418 = vmul.f32 %v2320, %v2364
        %v2419 = vmul.f32 %v2324, %v2364
        %v2420 = vmul.f32 %v2328, %v2364
        %v2421 = vmul.f32 %v2332, %v2364
        %v2422 = vmul.f32 %v2336, %v2364
        %v2423 = vmul.f32 %v2340, %v2364
        %v2424 = vmul.f32 %v2344, %v2364
        %v2425 = vmul.f32 %v2348, %v2364
        %v2426 = vmul.f32 %v2352, %v2364
        %v2427 = vmul.f32 %v2356, %v2364
        %v2428 = vmul.f32 %v2360, %v2364
        %v2429 = vadd.f32 %v2039, %v2365
        %v2430 = vadd.f32 %v2040, %v2366
        %v2431 = vadd.f32 %v2041, %v2367
        %v2432 = vadd.f32 %v2042, %v2368
        %v2433 = vadd.f32 %v2043, %v2369
        %v2434 = vadd.f32 %v2044, %v2370
        %v2435 = vadd.f32 %v2045, %v2371
        %v2436 = vadd.f32 %v2046, %v2372
        %v2437 = vadd.f32 %v2047, %v2373
        %v2438 = vadd.f32 %v2048, %v2374
        %v2439 = vadd.f32 %v2049, %v2375
        %v2440 = vadd.f32 %v2050, %v2376
        %v2441 = vadd.f32 %v2051, %v2377
        %v2442 = vadd.f32 %v2052, %v2378
        %v2443 = vadd.f32 %v2053, %v2379
        %v2444 = vadd.f32 %v2054, %v2380
        %v2445 = vadd.f32 %v2055, %v2381
        %v2446 = vadd.f32 %v2056, %v2382
        %v2447 = vadd.f32 %v2057, %v2383
        %v2448 = vadd.f32 %v2058, %v2384
        %v2449 = vadd.f32 %v2059, %v2385
        %v2450 = vadd.f32 %v2060, %v2386
        %v2451 = vadd.f32 %v2061, %v2387
        %v2452 = vadd.f32 %v2062, %v2388
        %v2453 = vadd.f32 %v2063, %v2389
        %v2454 = vadd.f32 %v2064, %v2390
        %v2455 = vadd.f32 %v2065, %v2391
        %v2456 = vadd.f32 %v2066, %v2392
        %v2457 = vadd.f32 %v2067, %v2393
        %v2458 = vadd.f32 %v2068, %v2394
        %v2459 = vadd.f32 %v2069, %v2395
        %v2460 = vadd.f32 %v2070, %v2396
        %v2461 = vadd.f32 %v2071, %v2397
        %v2462 = vadd.f32 %v2072, %v2398
        %v2463 = vadd.f32 %v2073, %v2399
        %v2464 = vadd.f32 %v2074, %v2400
        %v2465 = vadd.f32 %v2075, %v2401
        %v2466 = vadd.f32 %v2076, %v2402
        %v2467 = vadd.f32 %v2077, %v2403
        %v2468 = vadd.f32 %v2078, %v2404
        %v2469 = vadd.f32 %v2079, %v2405
        %v2470 = vadd.f32 %v2080, %v2406
        %v2471 = vadd.f32 %v2081, %v2407
        %v2472 = vadd.f32 %v2082, %v2408
        %v2473 = vadd.f32 %v2083, %v2409
        %v2474 = vadd.f32 %v2084, %v2410
        %v2475 = vadd.f32 %v2085, %v2411
        %v2476 = vadd.f32 %v2086, %v2412
        %v2477 = vadd.f32 %v2087, %v2413
        %v2478 = vadd.f32 %v2088, %v2414
        %v2479 = vadd.f32 %v2089, %v2415
        %v2480 = vadd.f32 %v2090, %v2416
        %v2481 = vadd.f32 %v2091, %v2417
        %v2482 = vadd.f32 %v2092, %v2418
        %v2483 = vadd.f32 %v2093, %v2419
        %v2484 = vadd.f32 %v2094, %v2420
        %v2485 = vadd.f32 %v2095, %v2421
        %v2486 = vadd.f32 %v2096, %v2422
        %v2487 = vadd.f32 %v2097, %v2423
        %v2488 = vadd.f32 %v2098, %v2424
        %v2489 = vadd.f32 %v2099, %v2425
        %v2490 = vadd.f32 %v2100, %v2426
        %v2491 = vadd.f32 %v2101, %v2427
        %v2492 = vadd.f32 %v2102, %v2428
        %s2494 = sor.u32 256, 2
        %2495 = vbcast.lane.b32.xlu0 %v1670, %s2494
        %v2496 = vpop.permute.xlu0 %2495
        %s2498 = sor.u32 256, 10
        %2499 = vbcast.lane.b32.xlu0 %v1670, %s2498
        %v2500 = vpop.permute.xlu0 %2499
        %s2502 = sor.u32 256, 18
        %2503 = vbcast.lane.b32.xlu0 %v1670, %s2502
        %v2504 = vpop.permute.xlu0 %2503
        %s2506 = sor.u32 256, 26
        %2507 = vbcast.lane.b32.xlu0 %v1670, %s2506
        %v2508 = vpop.permute.xlu0 %2507
        %s2510 = sor.u32 256, 2
        %2511 = vbcast.lane.b32.xlu0 %v1689, %s2510
        %v2512 = vpop.permute.xlu0 %2511
        %s2514 = sor.u32 256, 10
        %2515 = vbcast.lane.b32.xlu0 %v1689, %s2514
        %v2516 = vpop.permute.xlu0 %2515
        %s2518 = sor.u32 256, 18
        %2519 = vbcast.lane.b32.xlu0 %v1689, %s2518
        %v2520 = vpop.permute.xlu0 %2519
        %s2522 = sor.u32 256, 26
        %2523 = vbcast.lane.b32.xlu0 %v1689, %s2522
        %v2524 = vpop.permute.xlu0 %2523
        %s2526 = sor.u32 256, 2
        %2527 = vbcast.lane.b32.xlu0 %v1708, %s2526
        %v2528 = vpop.permute.xlu0 %2527
        %s2530 = sor.u32 256, 10
        %2531 = vbcast.lane.b32.xlu0 %v1708, %s2530
        %v2532 = vpop.permute.xlu0 %2531
        %s2534 = sor.u32 256, 18
        %2535 = vbcast.lane.b32.xlu0 %v1708, %s2534
        %v2536 = vpop.permute.xlu0 %2535
        %s2538 = sor.u32 256, 26
        %2539 = vbcast.lane.b32.xlu0 %v1708, %s2538
        %v2540 = vpop.permute.xlu0 %2539
        %s2542 = sor.u32 256, 2
        %2543 = vbcast.lane.b32.xlu0 %v1727, %s2542
        %v2544 = vpop.permute.xlu0 %2543
        %s2546 = sor.u32 256, 10
        %2547 = vbcast.lane.b32.xlu0 %v1727, %s2546
        %v2548 = vpop.permute.xlu0 %2547
        %s2550 = sor.u32 256, 18
        %2551 = vbcast.lane.b32.xlu0 %v1727, %s2550
        %v2552 = vpop.permute.xlu0 %2551
        %s2554 = sor.u32 256, 26
        %2555 = vbcast.lane.b32.xlu0 %v1727, %s2554
        %v2556 = vpop.permute.xlu0 %2555
        %s2558 = sor.u32 256, 2
        %2559 = vbcast.lane.b32.xlu0 %v1746, %s2558
        %v2560 = vpop.permute.xlu0 %2559
        %s2562 = sor.u32 256, 10
        %2563 = vbcast.lane.b32.xlu0 %v1746, %s2562
        %v2564 = vpop.permute.xlu0 %2563
        %s2566 = sor.u32 256, 18
        %2567 = vbcast.lane.b32.xlu0 %v1746, %s2566
        %v2568 = vpop.permute.xlu0 %2567
        %s2570 = sor.u32 256, 26
        %2571 = vbcast.lane.b32.xlu0 %v1746, %s2570
        %v2572 = vpop.permute.xlu0 %2571
        %s2574 = sor.u32 256, 2
        %2575 = vbcast.lane.b32.xlu0 %v1765, %s2574
        %v2576 = vpop.permute.xlu0 %2575
        %s2578 = sor.u32 256, 10
        %2579 = vbcast.lane.b32.xlu0 %v1765, %s2578
        %v2580 = vpop.permute.xlu0 %2579
        %s2582 = sor.u32 256, 18
        %2583 = vbcast.lane.b32.xlu0 %v1765, %s2582
        %v2584 = vpop.permute.xlu0 %2583
        %s2586 = sor.u32 256, 26
        %2587 = vbcast.lane.b32.xlu0 %v1765, %s2586
        %v2588 = vpop.permute.xlu0 %2587
        %s2590 = sor.u32 256, 2
        %2591 = vbcast.lane.b32.xlu0 %v1784, %s2590
        %v2592 = vpop.permute.xlu0 %2591
        %s2594 = sor.u32 256, 10
        %2595 = vbcast.lane.b32.xlu0 %v1784, %s2594
        %v2596 = vpop.permute.xlu0 %2595
        %s2598 = sor.u32 256, 18
        %2599 = vbcast.lane.b32.xlu0 %v1784, %s2598
        %v2600 = vpop.permute.xlu0 %2599
        %s2602 = sor.u32 256, 26
        %2603 = vbcast.lane.b32.xlu0 %v1784, %s2602
        %v2604 = vpop.permute.xlu0 %2603
        %s2606 = sor.u32 256, 2
        %2607 = vbcast.lane.b32.xlu0 %v1803, %s2606
        %v2608 = vpop.permute.xlu0 %2607
        %s2610 = sor.u32 256, 10
        %2611 = vbcast.lane.b32.xlu0 %v1803, %s2610
        %v2612 = vpop.permute.xlu0 %2611
        %s2614 = sor.u32 256, 18
        %2615 = vbcast.lane.b32.xlu0 %v1803, %s2614
        %v2616 = vpop.permute.xlu0 %2615
        %s2618 = sor.u32 256, 26
        %2619 = vbcast.lane.b32.xlu0 %v1803, %s2618
        %v2620 = vpop.permute.xlu0 %2619
        %s2622 = sor.u32 256, 2
        %2623 = vbcast.lane.b32.xlu0 %v1822, %s2622
        %v2624 = vpop.permute.xlu0 %2623
        %s2626 = sor.u32 256, 10
        %2627 = vbcast.lane.b32.xlu0 %v1822, %s2626
        %v2628 = vpop.permute.xlu0 %2627
        %s2630 = sor.u32 256, 18
        %2631 = vbcast.lane.b32.xlu0 %v1822, %s2630
        %v2632 = vpop.permute.xlu0 %2631
        %s2634 = sor.u32 256, 26
        %2635 = vbcast.lane.b32.xlu0 %v1822, %s2634
        %v2636 = vpop.permute.xlu0 %2635
        %s2638 = sor.u32 256, 2
        %2639 = vbcast.lane.b32.xlu0 %v1841, %s2638
        %v2640 = vpop.permute.xlu0 %2639
        %s2642 = sor.u32 256, 10
        %2643 = vbcast.lane.b32.xlu0 %v1841, %s2642
        %v2644 = vpop.permute.xlu0 %2643
        %s2646 = sor.u32 256, 18
        %2647 = vbcast.lane.b32.xlu0 %v1841, %s2646
        %v2648 = vpop.permute.xlu0 %2647
        %s2650 = sor.u32 256, 26
        %2651 = vbcast.lane.b32.xlu0 %v1841, %s2650
        %v2652 = vpop.permute.xlu0 %2651
        %s2654 = sor.u32 256, 2
        %2655 = vbcast.lane.b32.xlu0 %v1860, %s2654
        %v2656 = vpop.permute.xlu0 %2655
        %s2658 = sor.u32 256, 10
        %2659 = vbcast.lane.b32.xlu0 %v1860, %s2658
        %v2660 = vpop.permute.xlu0 %2659
        %s2662 = sor.u32 256, 18
        %2663 = vbcast.lane.b32.xlu0 %v1860, %s2662
        %v2664 = vpop.permute.xlu0 %2663
        %s2666 = sor.u32 256, 26
        %2667 = vbcast.lane.b32.xlu0 %v1860, %s2666
        %v2668 = vpop.permute.xlu0 %2667
        %s2670 = sor.u32 256, 2
        %2671 = vbcast.lane.b32.xlu0 %v1879, %s2670
        %v2672 = vpop.permute.xlu0 %2671
        %s2674 = sor.u32 256, 10
        %2675 = vbcast.lane.b32.xlu0 %v1879, %s2674
        %v2676 = vpop.permute.xlu0 %2675
        %s2678 = sor.u32 256, 18
        %2679 = vbcast.lane.b32.xlu0 %v1879, %s2678
        %v2680 = vpop.permute.xlu0 %2679
        %s2682 = sor.u32 256, 26
        %2683 = vbcast.lane.b32.xlu0 %v1879, %s2682
        %v2684 = vpop.permute.xlu0 %2683
        %s2686 = sor.u32 256, 2
        %2687 = vbcast.lane.b32.xlu0 %v1898, %s2686
        %v2688 = vpop.permute.xlu0 %2687
        %s2690 = sor.u32 256, 10
        %2691 = vbcast.lane.b32.xlu0 %v1898, %s2690
        %v2692 = vpop.permute.xlu0 %2691
        %s2694 = sor.u32 256, 18
        %2695 = vbcast.lane.b32.xlu0 %v1898, %s2694
        %v2696 = vpop.permute.xlu0 %2695
        %s2698 = sor.u32 256, 26
        %2699 = vbcast.lane.b32.xlu0 %v1898, %s2698
        %v2700 = vpop.permute.xlu0 %2699
        %s2702 = sor.u32 256, 2
        %2703 = vbcast.lane.b32.xlu0 %v1917, %s2702
        %v2704 = vpop.permute.xlu0 %2703
        %s2706 = sor.u32 256, 10
        %2707 = vbcast.lane.b32.xlu0 %v1917, %s2706
        %v2708 = vpop.permute.xlu0 %2707
        %s2710 = sor.u32 256, 18
        %2711 = vbcast.lane.b32.xlu0 %v1917, %s2710
        %v2712 = vpop.permute.xlu0 %2711
        %s2714 = sor.u32 256, 26
        %2715 = vbcast.lane.b32.xlu0 %v1917, %s2714
        %v2716 = vpop.permute.xlu0 %2715
        %s2718 = sor.u32 256, 2
        %2719 = vbcast.lane.b32.xlu0 %v1936, %s2718
        %v2720 = vpop.permute.xlu0 %2719
        %s2722 = sor.u32 256, 10
        %2723 = vbcast.lane.b32.xlu0 %v1936, %s2722
        %v2724 = vpop.permute.xlu0 %2723
        %s2726 = sor.u32 256, 18
        %2727 = vbcast.lane.b32.xlu0 %v1936, %s2726
        %v2728 = vpop.permute.xlu0 %2727
        %s2730 = sor.u32 256, 26
        %2731 = vbcast.lane.b32.xlu0 %v1936, %s2730
        %v2732 = vpop.permute.xlu0 %2731
        %s2734 = sor.u32 256, 2
        %2735 = vbcast.lane.b32.xlu0 %v1955, %s2734
        %v2736 = vpop.permute.xlu0 %2735
        %s2738 = sor.u32 256, 10
        %2739 = vbcast.lane.b32.xlu0 %v1955, %s2738
        %v2740 = vpop.permute.xlu0 %2739
        %s2742 = sor.u32 256, 18
        %2743 = vbcast.lane.b32.xlu0 %v1955, %s2742
        %v2744 = vpop.permute.xlu0 %2743
        %s2746 = sor.u32 256, 26
        %2747 = vbcast.lane.b32.xlu0 %v1955, %s2746
        %v2748 = vpop.permute.xlu0 %2747
        %v2749 = vlaneseq
        %v2750 = vshrl.u32 %v2749, 7
        %v2751 = vsub.s32 5, %v2750
        %v2752 = vrot.slane %v2104, %v2751
        %v2753 = vmul.f32 %v2496, %v2752
        %v2754 = vmul.f32 %v2500, %v2752
        %v2755 = vmul.f32 %v2504, %v2752
        %v2756 = vmul.f32 %v2508, %v2752
        %v2757 = vmul.f32 %v2512, %v2752
        %v2758 = vmul.f32 %v2516, %v2752
        %v2759 = vmul.f32 %v2520, %v2752
        %v2760 = vmul.f32 %v2524, %v2752
        %v2761 = vmul.f32 %v2528, %v2752
        %v2762 = vmul.f32 %v2532, %v2752
        %v2763 = vmul.f32 %v2536, %v2752
        %v2764 = vmul.f32 %v2540, %v2752
        %v2765 = vmul.f32 %v2544, %v2752
        %v2766 = vmul.f32 %v2548, %v2752
        %v2767 = vmul.f32 %v2552, %v2752
        %v2768 = vmul.f32 %v2556, %v2752
        %v2769 = vmul.f32 %v2560, %v2752
        %v2770 = vmul.f32 %v2564, %v2752
        %v2771 = vmul.f32 %v2568, %v2752
        %v2772 = vmul.f32 %v2572, %v2752
        %v2773 = vmul.f32 %v2576, %v2752
        %v2774 = vmul.f32 %v2580, %v2752
        %v2775 = vmul.f32 %v2584, %v2752
        %v2776 = vmul.f32 %v2588, %v2752
        %v2777 = vmul.f32 %v2592, %v2752
        %v2778 = vmul.f32 %v2596, %v2752
        %v2779 = vmul.f32 %v2600, %v2752
        %v2780 = vmul.f32 %v2604, %v2752
        %v2781 = vmul.f32 %v2608, %v2752
        %v2782 = vmul.f32 %v2612, %v2752
        %v2783 = vmul.f32 %v2616, %v2752
        %v2784 = vmul.f32 %v2620, %v2752
        %v2785 = vmul.f32 %v2624, %v2752
        %v2786 = vmul.f32 %v2628, %v2752
        %v2787 = vmul.f32 %v2632, %v2752
        %v2788 = vmul.f32 %v2636, %v2752
        %v2789 = vmul.f32 %v2640, %v2752
        %v2790 = vmul.f32 %v2644, %v2752
        %v2791 = vmul.f32 %v2648, %v2752
        %v2792 = vmul.f32 %v2652, %v2752
        %v2793 = vmul.f32 %v2656, %v2752
        %v2794 = vmul.f32 %v2660, %v2752
        %v2795 = vmul.f32 %v2664, %v2752
        %v2796 = vmul.f32 %v2668, %v2752
        %v2797 = vmul.f32 %v2672, %v2752
        %v2798 = vmul.f32 %v2676, %v2752
        %v2799 = vmul.f32 %v2680, %v2752
        %v2800 = vmul.f32 %v2684, %v2752
        %v2801 = vmul.f32 %v2688, %v2752
        %v2802 = vmul.f32 %v2692, %v2752
        %v2803 = vmul.f32 %v2696, %v2752
        %v2804 = vmul.f32 %v2700, %v2752
        %v2805 = vmul.f32 %v2704, %v2752
        %v2806 = vmul.f32 %v2708, %v2752
        %v2807 = vmul.f32 %v2712, %v2752
        %v2808 = vmul.f32 %v2716, %v2752
        %v2809 = vmul.f32 %v2720, %v2752
        %v2810 = vmul.f32 %v2724, %v2752
        %v2811 = vmul.f32 %v2728, %v2752
        %v2812 = vmul.f32 %v2732, %v2752
        %v2813 = vmul.f32 %v2736, %v2752
        %v2814 = vmul.f32 %v2740, %v2752
        %v2815 = vmul.f32 %v2744, %v2752
        %v2816 = vmul.f32 %v2748, %v2752
        %v2817 = vadd.f32 %v2429, %v2753
        %v2818 = vadd.f32 %v2430, %v2754
        %v2819 = vadd.f32 %v2431, %v2755
        %v2820 = vadd.f32 %v2432, %v2756
        %v2821 = vadd.f32 %v2433, %v2757
        %v2822 = vadd.f32 %v2434, %v2758
        %v2823 = vadd.f32 %v2435, %v2759
        %v2824 = vadd.f32 %v2436, %v2760
        %v2825 = vadd.f32 %v2437, %v2761
        %v2826 = vadd.f32 %v2438, %v2762
        %v2827 = vadd.f32 %v2439, %v2763
        %v2828 = vadd.f32 %v2440, %v2764
        %v2829 = vadd.f32 %v2441, %v2765
        %v2830 = vadd.f32 %v2442, %v2766
        %v2831 = vadd.f32 %v2443, %v2767
        %v2832 = vadd.f32 %v2444, %v2768
        %v2833 = vadd.f32 %v2445, %v2769
        %v2834 = vadd.f32 %v2446, %v2770
        %v2835 = vadd.f32 %v2447, %v2771
        %v2836 = vadd.f32 %v2448, %v2772
        %v2837 = vadd.f32 %v2449, %v2773
        %v2838 = vadd.f32 %v2450, %v2774
        %v2839 = vadd.f32 %v2451, %v2775
        %v2840 = vadd.f32 %v2452, %v2776
        %v2841 = vadd.f32 %v2453, %v2777
        %v2842 = vadd.f32 %v2454, %v2778
        %v2843 = vadd.f32 %v2455, %v2779
        %v2844 = vadd.f32 %v2456, %v2780
        %v2845 = vadd.f32 %v2457, %v2781
        %v2846 = vadd.f32 %v2458, %v2782
        %v2847 = vadd.f32 %v2459, %v2783
        %v2848 = vadd.f32 %v2460, %v2784
        %v2849 = vadd.f32 %v2461, %v2785
        %v2850 = vadd.f32 %v2462, %v2786
        %v2851 = vadd.f32 %v2463, %v2787
        %v2852 = vadd.f32 %v2464, %v2788
        %v2853 = vadd.f32 %v2465, %v2789
        %v2854 = vadd.f32 %v2466, %v2790
        %v2855 = vadd.f32 %v2467, %v2791
        %v2856 = vadd.f32 %v2468, %v2792
        %v2857 = vadd.f32 %v2469, %v2793
        %v2858 = vadd.f32 %v2470, %v2794
        %v2859 = vadd.f32 %v2471, %v2795
        %v2860 = vadd.f32 %v2472, %v2796
        %v2861 = vadd.f32 %v2473, %v2797
        %v2862 = vadd.f32 %v2474, %v2798
        %v2863 = vadd.f32 %v2475, %v2799
        %v2864 = vadd.f32 %v2476, %v2800
        %v2865 = vadd.f32 %v2477, %v2801
        %v2866 = vadd.f32 %v2478, %v2802
        %v2867 = vadd.f32 %v2479, %v2803
        %v2868 = vadd.f32 %v2480, %v2804
        %v2869 = vadd.f32 %v2481, %v2805
        %v2870 = vadd.f32 %v2482, %v2806
        %v2871 = vadd.f32 %v2483, %v2807
        %v2872 = vadd.f32 %v2484, %v2808
        %v2873 = vadd.f32 %v2485, %v2809
        %v2874 = vadd.f32 %v2486, %v2810
        %v2875 = vadd.f32 %v2487, %v2811
        %v2876 = vadd.f32 %v2488, %v2812
        %v2877 = vadd.f32 %v2489, %v2813
        %v2878 = vadd.f32 %v2490, %v2814
        %v2879 = vadd.f32 %v2491, %v2815
        %v2880 = vadd.f32 %v2492, %v2816
        %v2881 = vld [vmem:[#allocation2 + $0x2] sm:$0xff]
        %v2882 = vld [vmem:[#allocation2 + $0xa] sm:$0xff]
        %v2883 = vld [vmem:[%s3] sm:$0x8]
        %v2884 = vunpack.c.l.bf16 %v2883
        %v2885 = vlaneseq
        %v2886 = vshrl.u32 %v2885, 7
        %v2887 = vsub.s32 0, %v2886
        %v2888 = vrot.slane %v2881, %v2887
        %2890 = vbcast.lane.b32.xlu0 %v2888, 256
        %v2891 = vpop.permute.xlu0 %2890
        %s2893 = sor.u32 256, 8
        %2894 = vbcast.lane.b32.xlu0 %v2888, %s2893
        %v2895 = vpop.permute.xlu0 %2894
        %s2897 = sor.u32 256, 16
        %2898 = vbcast.lane.b32.xlu0 %v2888, %s2897
        %v2899 = vpop.permute.xlu0 %2898
        %s2901 = sor.u32 256, 24
        %2902 = vbcast.lane.b32.xlu0 %v2888, %s2901
        %v2903 = vpop.permute.xlu0 %2902
        %v2904 = vlaneseq
        %v2905 = vshrl.u32 %v2904, 7
        %v2906 = vsub.s32 1, %v2905
        %v2907 = vrot.slane %v2881, %v2906
        %2909 = vbcast.lane.b32.xlu0 %v2907, 256
        %v2910 = vpop.permute.xlu0 %2909
        %s2912 = sor.u32 256, 8
        %2913 = vbcast.lane.b32.xlu0 %v2907, %s2912
        %v2914 = vpop.permute.xlu0 %2913
        %s2916 = sor.u32 256, 16
        %2917 = vbcast.lane.b32.xlu0 %v2907, %s2916
        %v2918 = vpop.permute.xlu0 %2917
        %s2920 = sor.u32 256, 24
        %2921 = vbcast.lane.b32.xlu0 %v2907, %s2920
        %v2922 = vpop.permute.xlu0 %2921
        %v2923 = vlaneseq
        %v2924 = vshrl.u32 %v2923, 7
        %v2925 = vsub.s32 2, %v2924
        %v2926 = vrot.slane %v2881, %v2925
        %2928 = vbcast.lane.b32.xlu0 %v2926, 256
        %v2929 = vpop.permute.xlu0 %2928
        %s2931 = sor.u32 256, 8
        %2932 = vbcast.lane.b32.xlu0 %v2926, %s2931
        %v2933 = vpop.permute.xlu0 %2932
        %s2935 = sor.u32 256, 16
        %2936 = vbcast.lane.b32.xlu0 %v2926, %s2935
        %v2937 = vpop.permute.xlu0 %2936
        %s2939 = sor.u32 256, 24
        %2940 = vbcast.lane.b32.xlu0 %v2926, %s2939
        %v2941 = vpop.permute.xlu0 %2940
        %v2942 = vlaneseq
        %v2943 = vshrl.u32 %v2942, 7
        %v2944 = vsub.s32 3, %v2943
        %v2945 = vrot.slane %v2881, %v2944
        %2947 = vbcast.lane.b32.xlu0 %v2945, 256
        %v2948 = vpop.permute.xlu0 %2947
        %s2950 = sor.u32 256, 8
        %2951 = vbcast.lane.b32.xlu0 %v2945, %s2950
        %v2952 = vpop.permute.xlu0 %2951
        %s2954 = sor.u32 256, 16
        %2955 = vbcast.lane.b32.xlu0 %v2945, %s2954
        %v2956 = vpop.permute.xlu0 %2955
        %s2958 = sor.u32 256, 24
        %2959 = vbcast.lane.b32.xlu0 %v2945, %s2958
        %v2960 = vpop.permute.xlu0 %2959
        %v2961 = vlaneseq
        %v2962 = vshrl.u32 %v2961, 7
        %v2963 = vsub.s32 4, %v2962
        %v2964 = vrot.slane %v2881, %v2963
        %2966 = vbcast.lane.b32.xlu0 %v2964, 256
        %v2967 = vpop.permute.xlu0 %2966
        %s2969 = sor.u32 256, 8
        %2970 = vbcast.lane.b32.xlu0 %v2964, %s2969
        %v2971 = vpop.permute.xlu0 %2970
        %s2973 = sor.u32 256, 16
        %2974 = vbcast.lane.b32.xlu0 %v2964, %s2973
        %v2975 = vpop.permute.xlu0 %2974
        %s2977 = sor.u32 256, 24
        %2978 = vbcast.lane.b32.xlu0 %v2964, %s2977
        %v2979 = vpop.permute.xlu0 %2978
        %v2980 = vlaneseq
        %v2981 = vshrl.u32 %v2980, 7
        %v2982 = vsub.s32 5, %v2981
        %v2983 = vrot.slane %v2881, %v2982
        %2985 = vbcast.lane.b32.xlu0 %v2983, 256
        %v2986 = vpop.permute.xlu0 %2985
        %s2988 = sor.u32 256, 8
        %2989 = vbcast.lane.b32.xlu0 %v2983, %s2988
        %v2990 = vpop.permute.xlu0 %2989
        %s2992 = sor.u32 256, 16
        %2993 = vbcast.lane.b32.xlu0 %v2983, %s2992
        %v2994 = vpop.permute.xlu0 %2993
        %s2996 = sor.u32 256, 24
        %2997 = vbcast.lane.b32.xlu0 %v2983, %s2996
        %v2998 = vpop.permute.xlu0 %2997
        %v2999 = vlaneseq
        %v3000 = vshrl.u32 %v2999, 7
        %v3001 = vsub.s32 6, %v3000
        %v3002 = vrot.slane %v2881, %v3001
        %3004 = vbcast.lane.b32.xlu0 %v3002, 256
        %v3005 = vpop.permute.xlu0 %3004
        %s3007 = sor.u32 256, 8
        %3008 = vbcast.lane.b32.xlu0 %v3002, %s3007
        %v3009 = vpop.permute.xlu0 %3008
        %s3011 = sor.u32 256, 16
        %3012 = vbcast.lane.b32.xlu0 %v3002, %s3011
        %v3013 = vpop.permute.xlu0 %3012
        %s3015 = sor.u32 256, 24
        %3016 = vbcast.lane.b32.xlu0 %v3002, %s3015
        %v3017 = vpop.permute.xlu0 %3016
        %v3018 = vlaneseq
        %v3019 = vshrl.u32 %v3018, 7
        %v3020 = vsub.s32 7, %v3019
        %v3021 = vrot.slane %v2881, %v3020
        %3023 = vbcast.lane.b32.xlu0 %v3021, 256
        %v3024 = vpop.permute.xlu0 %3023
        %s3026 = sor.u32 256, 8
        %3027 = vbcast.lane.b32.xlu0 %v3021, %s3026
        %v3028 = vpop.permute.xlu0 %3027
        %s3030 = sor.u32 256, 16
        %3031 = vbcast.lane.b32.xlu0 %v3021, %s3030
        %v3032 = vpop.permute.xlu0 %3031
        %s3034 = sor.u32 256, 24
        %3035 = vbcast.lane.b32.xlu0 %v3021, %s3034
        %v3036 = vpop.permute.xlu0 %3035
        %v3037 = vlaneseq
        %v3038 = vshrl.u32 %v3037, 7
        %v3039 = vsub.s32 0, %v3038
        %v3040 = vrot.slane %v2882, %v3039
        %3042 = vbcast.lane.b32.xlu0 %v3040, 256
        %v3043 = vpop.permute.xlu0 %3042
        %s3045 = sor.u32 256, 8
        %3046 = vbcast.lane.b32.xlu0 %v3040, %s3045
        %v3047 = vpop.permute.xlu0 %3046
        %s3049 = sor.u32 256, 16
        %3050 = vbcast.lane.b32.xlu0 %v3040, %s3049
        %v3051 = vpop.permute.xlu0 %3050
        %s3053 = sor.u32 256, 24
        %3054 = vbcast.lane.b32.xlu0 %v3040, %s3053
        %v3055 = vpop.permute.xlu0 %3054
        %v3056 = vlaneseq
        %v3057 = vshrl.u32 %v3056, 7
        %v3058 = vsub.s32 1, %v3057
        %v3059 = vrot.slane %v2882, %v3058
        %3061 = vbcast.lane.b32.xlu0 %v3059, 256
        %v3062 = vpop.permute.xlu0 %3061
        %s3064 = sor.u32 256, 8
        %3065 = vbcast.lane.b32.xlu0 %v3059, %s3064
        %v3066 = vpop.permute.xlu0 %3065
        %s3068 = sor.u32 256, 16
        %3069 = vbcast.lane.b32.xlu0 %v3059, %s3068
        %v3070 = vpop.permute.xlu0 %3069
        %s3072 = sor.u32 256, 24
        %3073 = vbcast.lane.b32.xlu0 %v3059, %s3072
        %v3074 = vpop.permute.xlu0 %3073
        %v3075 = vlaneseq
        %v3076 = vshrl.u32 %v3075, 7
        %v3077 = vsub.s32 2, %v3076
        %v3078 = vrot.slane %v2882, %v3077
        %3080 = vbcast.lane.b32.xlu0 %v3078, 256
        %v3081 = vpop.permute.xlu0 %3080
        %s3083 = sor.u32 256, 8
        %3084 = vbcast.lane.b32.xlu0 %v3078, %s3083
        %v3085 = vpop.permute.xlu0 %3084
        %s3087 = sor.u32 256, 16
        %3088 = vbcast.lane.b32.xlu0 %v3078, %s3087
        %v3089 = vpop.permute.xlu0 %3088
        %s3091 = sor.u32 256, 24
        %3092 = vbcast.lane.b32.xlu0 %v3078, %s3091
        %v3093 = vpop.permute.xlu0 %3092
        %v3094 = vlaneseq
        %v3095 = vshrl.u32 %v3094, 7
        %v3096 = vsub.s32 3, %v3095
        %v3097 = vrot.slane %v2882, %v3096
        %3099 = vbcast.lane.b32.xlu0 %v3097, 256
        %v3100 = vpop.permute.xlu0 %3099
        %s3102 = sor.u32 256, 8
        %3103 = vbcast.lane.b32.xlu0 %v3097, %s3102
        %v3104 = vpop.permute.xlu0 %3103
        %s3106 = sor.u32 256, 16
        %3107 = vbcast.lane.b32.xlu0 %v3097, %s3106
        %v3108 = vpop.permute.xlu0 %3107
        %s3110 = sor.u32 256, 24
        %3111 = vbcast.lane.b32.xlu0 %v3097, %s3110
        %v3112 = vpop.permute.xlu0 %3111
        %v3113 = vlaneseq
        %v3114 = vshrl.u32 %v3113, 7
        %v3115 = vsub.s32 4, %v3114
        %v3116 = vrot.slane %v2882, %v3115
        %3118 = vbcast.lane.b32.xlu0 %v3116, 256
        %v3119 = vpop.permute.xlu0 %3118
        %s3121 = sor.u32 256, 8
        %3122 = vbcast.lane.b32.xlu0 %v3116, %s3121
        %v3123 = vpop.permute.xlu0 %3122
        %s3125 = sor.u32 256, 16
        %3126 = vbcast.lane.b32.xlu0 %v3116, %s3125
        %v3127 = vpop.permute.xlu0 %3126
        %s3129 = sor.u32 256, 24
        %3130 = vbcast.lane.b32.xlu0 %v3116, %s3129
        %v3131 = vpop.permute.xlu0 %3130
        %v3132 = vlaneseq
        %v3133 = vshrl.u32 %v3132, 7
        %v3134 = vsub.s32 5, %v3133
        %v3135 = vrot.slane %v2882, %v3134
        %3137 = vbcast.lane.b32.xlu0 %v3135, 256
        %v3138 = vpop.permute.xlu0 %3137
        %s3140 = sor.u32 256, 8
        %3141 = vbcast.lane.b32.xlu0 %v3135, %s3140
        %v3142 = vpop.permute.xlu0 %3141
        %s3144 = sor.u32 256, 16
        %3145 = vbcast.lane.b32.xlu0 %v3135, %s3144
        %v3146 = vpop.permute.xlu0 %3145
        %s3148 = sor.u32 256, 24
        %3149 = vbcast.lane.b32.xlu0 %v3135, %s3148
        %v3150 = vpop.permute.xlu0 %3149
        %v3151 = vlaneseq
        %v3152 = vshrl.u32 %v3151, 7
        %v3153 = vsub.s32 6, %v3152
        %v3154 = vrot.slane %v2882, %v3153
        %3156 = vbcast.lane.b32.xlu0 %v3154, 256
        %v3157 = vpop.permute.xlu0 %3156
        %s3159 = sor.u32 256, 8
        %3160 = vbcast.lane.b32.xlu0 %v3154, %s3159
        %v3161 = vpop.permute.xlu0 %3160
        %s3163 = sor.u32 256, 16
        %3164 = vbcast.lane.b32.xlu0 %v3154, %s3163
        %v3165 = vpop.permute.xlu0 %3164
        %s3167 = sor.u32 256, 24
        %3168 = vbcast.lane.b32.xlu0 %v3154, %s3167
        %v3169 = vpop.permute.xlu0 %3168
        %v3170 = vlaneseq
        %v3171 = vshrl.u32 %v3170, 7
        %v3172 = vsub.s32 7, %v3171
        %v3173 = vrot.slane %v2882, %v3172
        %3175 = vbcast.lane.b32.xlu0 %v3173, 256
        %v3176 = vpop.permute.xlu0 %3175
        %s3178 = sor.u32 256, 8
        %3179 = vbcast.lane.b32.xlu0 %v3173, %s3178
        %v3180 = vpop.permute.xlu0 %3179
        %s3182 = sor.u32 256, 16
        %3183 = vbcast.lane.b32.xlu0 %v3173, %s3182
        %v3184 = vpop.permute.xlu0 %3183
        %s3186 = sor.u32 256, 24
        %3187 = vbcast.lane.b32.xlu0 %v3173, %s3186
        %v3188 = vpop.permute.xlu0 %3187
        %v3189 = vlaneseq
        %v3190 = vshrl.u32 %v3189, 7
        %v3191 = vsub.s32 6, %v3190
        %v3192 = vrot.slane %v2884, %v3191
        %v3193 = vmul.f32 %v2891, %v3192
        %v3194 = vmul.f32 %v2895, %v3192
        %v3195 = vmul.f32 %v2899, %v3192
        %v3196 = vmul.f32 %v2903, %v3192
        %v3197 = vmul.f32 %v2910, %v3192
        %v3198 = vmul.f32 %v2914, %v3192
        %v3199 = vmul.f32 %v2918, %v3192
        %v3200 = vmul.f32 %v2922, %v3192
        %v3201 = vmul.f32 %v2929, %v3192
        %v3202 = vmul.f32 %v2933, %v3192
        %v3203 = vmul.f32 %v2937, %v3192
        %v3204 = vmul.f32 %v2941, %v3192
        %v3205 = vmul.f32 %v2948, %v3192
        %v3206 = vmul.f32 %v2952, %v3192
        %v3207 = vmul.f32 %v2956, %v3192
        %v3208 = vmul.f32 %v2960, %v3192
        %v3209 = vmul.f32 %v2967, %v3192
        %v3210 = vmul.f32 %v2971, %v3192
        %v3211 = vmul.f32 %v2975, %v3192
        %v3212 = vmul.f32 %v2979, %v3192
        %v3213 = vmul.f32 %v2986, %v3192
        %v3214 = vmul.f32 %v2990, %v3192
        %v3215 = vmul.f32 %v2994, %v3192
        %v3216 = vmul.f32 %v2998, %v3192
        %v3217 = vmul.f32 %v3005, %v3192
        %v3218 = vmul.f32 %v3009, %v3192
        %v3219 = vmul.f32 %v3013, %v3192
        %v3220 = vmul.f32 %v3017, %v3192
        %v3221 = vmul.f32 %v3024, %v3192
        %v3222 = vmul.f32 %v3028, %v3192
        %v3223 = vmul.f32 %v3032, %v3192
        %v3224 = vmul.f32 %v3036, %v3192
        %v3225 = vmul.f32 %v3043, %v3192
        %v3226 = vmul.f32 %v3047, %v3192
        %v3227 = vmul.f32 %v3051, %v3192
        %v3228 = vmul.f32 %v3055, %v3192
        %v3229 = vmul.f32 %v3062, %v3192
        %v3230 = vmul.f32 %v3066, %v3192
        %v3231 = vmul.f32 %v3070, %v3192
        %v3232 = vmul.f32 %v3074, %v3192
        %v3233 = vmul.f32 %v3081, %v3192
        %v3234 = vmul.f32 %v3085, %v3192
        %v3235 = vmul.f32 %v3089, %v3192
        %v3236 = vmul.f32 %v3093, %v3192
        %v3237 = vmul.f32 %v3100, %v3192
        %v3238 = vmul.f32 %v3104, %v3192
        %v3239 = vmul.f32 %v3108, %v3192
        %v3240 = vmul.f32 %v3112, %v3192
        %v3241 = vmul.f32 %v3119, %v3192
        %v3242 = vmul.f32 %v3123, %v3192
        %v3243 = vmul.f32 %v3127, %v3192
        %v3244 = vmul.f32 %v3131, %v3192
        %v3245 = vmul.f32 %v3138, %v3192
        %v3246 = vmul.f32 %v3142, %v3192
        %v3247 = vmul.f32 %v3146, %v3192
        %v3248 = vmul.f32 %v3150, %v3192
        %v3249 = vmul.f32 %v3157, %v3192
        %v3250 = vmul.f32 %v3161, %v3192
        %v3251 = vmul.f32 %v3165, %v3192
        %v3252 = vmul.f32 %v3169, %v3192
        %v3253 = vmul.f32 %v3176, %v3192
        %v3254 = vmul.f32 %v3180, %v3192
        %v3255 = vmul.f32 %v3184, %v3192
        %v3256 = vmul.f32 %v3188, %v3192
        %v3257 = vadd.f32 %v2817, %v3193
        %v3258 = vadd.f32 %v2818, %v3194
        %v3259 = vadd.f32 %v2819, %v3195
        %v3260 = vadd.f32 %v2820, %v3196
        %v3261 = vadd.f32 %v2821, %v3197
        %v3262 = vadd.f32 %v2822, %v3198
        %v3263 = vadd.f32 %v2823, %v3199
        %v3264 = vadd.f32 %v2824, %v3200
        %v3265 = vadd.f32 %v2825, %v3201
        %v3266 = vadd.f32 %v2826, %v3202
        %v3267 = vadd.f32 %v2827, %v3203
        %v3268 = vadd.f32 %v2828, %v3204
        %v3269 = vadd.f32 %v2829, %v3205
        %v3270 = vadd.f32 %v2830, %v3206
        %v3271 = vadd.f32 %v2831, %v3207
        %v3272 = vadd.f32 %v2832, %v3208
        %v3273 = vadd.f32 %v2833, %v3209
        %v3274 = vadd.f32 %v2834, %v3210
        %v3275 = vadd.f32 %v2835, %v3211
        %v3276 = vadd.f32 %v2836, %v3212
        %v3277 = vadd.f32 %v2837, %v3213
        %v3278 = vadd.f32 %v2838, %v3214
        %v3279 = vadd.f32 %v2839, %v3215
        %v3280 = vadd.f32 %v2840, %v3216
        %v3281 = vadd.f32 %v2841, %v3217
        %v3282 = vadd.f32 %v2842, %v3218
        %v3283 = vadd.f32 %v2843, %v3219
        %v3284 = vadd.f32 %v2844, %v3220
        %v3285 = vadd.f32 %v2845, %v3221
        %v3286 = vadd.f32 %v2846, %v3222
        %v3287 = vadd.f32 %v2847, %v3223
        %v3288 = vadd.f32 %v2848, %v3224
        %v3289 = vadd.f32 %v2849, %v3225
        %v3290 = vadd.f32 %v2850, %v3226
        %v3291 = vadd.f32 %v2851, %v3227
        %v3292 = vadd.f32 %v2852, %v3228
        %v3293 = vadd.f32 %v2853, %v3229
        %v3294 = vadd.f32 %v2854, %v3230
        %v3295 = vadd.f32 %v2855, %v3231
        %v3296 = vadd.f32 %v2856, %v3232
        %v3297 = vadd.f32 %v2857, %v3233
        %v3298 = vadd.f32 %v2858, %v3234
        %v3299 = vadd.f32 %v2859, %v3235
        %v3300 = vadd.f32 %v2860, %v3236
        %v3301 = vadd.f32 %v2861, %v3237
        %v3302 = vadd.f32 %v2862, %v3238
        %v3303 = vadd.f32 %v2863, %v3239
        %v3304 = vadd.f32 %v2864, %v3240
        %v3305 = vadd.f32 %v2865, %v3241
        %v3306 = vadd.f32 %v2866, %v3242
        %v3307 = vadd.f32 %v2867, %v3243
        %v3308 = vadd.f32 %v2868, %v3244
        %v3309 = vadd.f32 %v2869, %v3245
        %v3310 = vadd.f32 %v2870, %v3246
        %v3311 = vadd.f32 %v2871, %v3247
        %v3312 = vadd.f32 %v2872, %v3248
        %v3313 = vadd.f32 %v2873, %v3249
        %v3314 = vadd.f32 %v2874, %v3250
        %v3315 = vadd.f32 %v2875, %v3251
        %v3316 = vadd.f32 %v2876, %v3252
        %v3317 = vadd.f32 %v2877, %v3253
        %v3318 = vadd.f32 %v2878, %v3254
        %v3319 = vadd.f32 %v2879, %v3255
        %v3320 = vadd.f32 %v2880, %v3256
        %s3322 = sor.u32 256, 1
        %3323 = vbcast.lane.b32.xlu0 %v2888, %s3322
        %v3324 = vpop.permute.xlu0 %3323
        %s3326 = sor.u32 256, 9
        %3327 = vbcast.lane.b32.xlu0 %v2888, %s3326
        %v3328 = vpop.permute.xlu0 %3327
        %s3330 = sor.u32 256, 17
        %3331 = vbcast.lane.b32.xlu0 %v2888, %s3330
        %v3332 = vpop.permute.xlu0 %3331
        %s3334 = sor.u32 256, 25
        %3335 = vbcast.lane.b32.xlu0 %v2888, %s3334
        %v3336 = vpop.permute.xlu0 %3335
        %s3338 = sor.u32 256, 1
        %3339 = vbcast.lane.b32.xlu0 %v2907, %s3338
        %v3340 = vpop.permute.xlu0 %3339
        %s3342 = sor.u32 256, 9
        %3343 = vbcast.lane.b32.xlu0 %v2907, %s3342
        %v3344 = vpop.permute.xlu0 %3343
        %s3346 = sor.u32 256, 17
        %3347 = vbcast.lane.b32.xlu0 %v2907, %s3346
        %v3348 = vpop.permute.xlu0 %3347
        %s3350 = sor.u32 256, 25
        %3351 = vbcast.lane.b32.xlu0 %v2907, %s3350
        %v3352 = vpop.permute.xlu0 %3351
        %s3354 = sor.u32 256, 1
        %3355 = vbcast.lane.b32.xlu0 %v2926, %s3354
        %v3356 = vpop.permute.xlu0 %3355
        %s3358 = sor.u32 256, 9
        %3359 = vbcast.lane.b32.xlu0 %v2926, %s3358
        %v3360 = vpop.permute.xlu0 %3359
        %s3362 = sor.u32 256, 17
        %3363 = vbcast.lane.b32.xlu0 %v2926, %s3362
        %v3364 = vpop.permute.xlu0 %3363
        %s3366 = sor.u32 256, 25
        %3367 = vbcast.lane.b32.xlu0 %v2926, %s3366
        %v3368 = vpop.permute.xlu0 %3367
        %s3370 = sor.u32 256, 1
        %3371 = vbcast.lane.b32.xlu0 %v2945, %s3370
        %v3372 = vpop.permute.xlu0 %3371
        %s3374 = sor.u32 256, 9
        %3375 = vbcast.lane.b32.xlu0 %v2945, %s3374
        %v3376 = vpop.permute.xlu0 %3375
        %s3378 = sor.u32 256, 17
        %3379 = vbcast.lane.b32.xlu0 %v2945, %s3378
        %v3380 = vpop.permute.xlu0 %3379
        %s3382 = sor.u32 256, 25
        %3383 = vbcast.lane.b32.xlu0 %v2945, %s3382
        %v3384 = vpop.permute.xlu0 %3383
        %s3386 = sor.u32 256, 1
        %3387 = vbcast.lane.b32.xlu0 %v2964, %s3386
        %v3388 = vpop.permute.xlu0 %3387
        %s3390 = sor.u32 256, 9
        %3391 = vbcast.lane.b32.xlu0 %v2964, %s3390
        %v3392 = vpop.permute.xlu0 %3391
        %s3394 = sor.u32 256, 17
        %3395 = vbcast.lane.b32.xlu0 %v2964, %s3394
        %v3396 = vpop.permute.xlu0 %3395
        %s3398 = sor.u32 256, 25
        %3399 = vbcast.lane.b32.xlu0 %v2964, %s3398
        %v3400 = vpop.permute.xlu0 %3399
        %s3402 = sor.u32 256, 1
        %3403 = vbcast.lane.b32.xlu0 %v2983, %s3402
        %v3404 = vpop.permute.xlu0 %3403
        %s3406 = sor.u32 256, 9
        %3407 = vbcast.lane.b32.xlu0 %v2983, %s3406
        %v3408 = vpop.permute.xlu0 %3407
        %s3410 = sor.u32 256, 17
        %3411 = vbcast.lane.b32.xlu0 %v2983, %s3410
        %v3412 = vpop.permute.xlu0 %3411
        %s3414 = sor.u32 256, 25
        %3415 = vbcast.lane.b32.xlu0 %v2983, %s3414
        %v3416 = vpop.permute.xlu0 %3415
        %s3418 = sor.u32 256, 1
        %3419 = vbcast.lane.b32.xlu0 %v3002, %s3418
        %v3420 = vpop.permute.xlu0 %3419
        %s3422 = sor.u32 256, 9
        %3423 = vbcast.lane.b32.xlu0 %v3002, %s3422
        %v3424 = vpop.permute.xlu0 %3423
        %s3426 = sor.u32 256, 17
        %3427 = vbcast.lane.b32.xlu0 %v3002, %s3426
        %v3428 = vpop.permute.xlu0 %3427
        %s3430 = sor.u32 256, 25
        %3431 = vbcast.lane.b32.xlu0 %v3002, %s3430
        %v3432 = vpop.permute.xlu0 %3431
        %s3434 = sor.u32 256, 1
        %3435 = vbcast.lane.b32.xlu0 %v3021, %s3434
        %v3436 = vpop.permute.xlu0 %3435
        %s3438 = sor.u32 256, 9
        %3439 = vbcast.lane.b32.xlu0 %v3021, %s3438
        %v3440 = vpop.permute.xlu0 %3439
        %s3442 = sor.u32 256, 17
        %3443 = vbcast.lane.b32.xlu0 %v3021, %s3442
        %v3444 = vpop.permute.xlu0 %3443
        %s3446 = sor.u32 256, 25
        %3447 = vbcast.lane.b32.xlu0 %v3021, %s3446
        %v3448 = vpop.permute.xlu0 %3447
        %s3450 = sor.u32 256, 1
        %3451 = vbcast.lane.b32.xlu0 %v3040, %s3450
        %v3452 = vpop.permute.xlu0 %3451
        %s3454 = sor.u32 256, 9
        %3455 = vbcast.lane.b32.xlu0 %v3040, %s3454
        %v3456 = vpop.permute.xlu0 %3455
        %s3458 = sor.u32 256, 17
        %3459 = vbcast.lane.b32.xlu0 %v3040, %s3458
        %v3460 = vpop.permute.xlu0 %3459
        %s3462 = sor.u32 256, 25
        %3463 = vbcast.lane.b32.xlu0 %v3040, %s3462
        %v3464 = vpop.permute.xlu0 %3463
        %s3466 = sor.u32 256, 1
        %3467 = vbcast.lane.b32.xlu0 %v3059, %s3466
        %v3468 = vpop.permute.xlu0 %3467
        %s3470 = sor.u32 256, 9
        %3471 = vbcast.lane.b32.xlu0 %v3059, %s3470
        %v3472 = vpop.permute.xlu0 %3471
        %s3474 = sor.u32 256, 17
        %3475 = vbcast.lane.b32.xlu0 %v3059, %s3474
        %v3476 = vpop.permute.xlu0 %3475
        %s3478 = sor.u32 256, 25
        %3479 = vbcast.lane.b32.xlu0 %v3059, %s3478
        %v3480 = vpop.permute.xlu0 %3479
        %s3482 = sor.u32 256, 1
        %3483 = vbcast.lane.b32.xlu0 %v3078, %s3482
        %v3484 = vpop.permute.xlu0 %3483
        %s3486 = sor.u32 256, 9
        %3487 = vbcast.lane.b32.xlu0 %v3078, %s3486
        %v3488 = vpop.permute.xlu0 %3487
        %s3490 = sor.u32 256, 17
        %3491 = vbcast.lane.b32.xlu0 %v3078, %s3490
        %v3492 = vpop.permute.xlu0 %3491
        %s3494 = sor.u32 256, 25
        %3495 = vbcast.lane.b32.xlu0 %v3078, %s3494
        %v3496 = vpop.permute.xlu0 %3495
        %s3498 = sor.u32 256, 1
        %3499 = vbcast.lane.b32.xlu0 %v3097, %s3498
        %v3500 = vpop.permute.xlu0 %3499
        %s3502 = sor.u32 256, 9
        %3503 = vbcast.lane.b32.xlu0 %v3097, %s3502
        %v3504 = vpop.permute.xlu0 %3503
        %s3506 = sor.u32 256, 17
        %3507 = vbcast.lane.b32.xlu0 %v3097, %s3506
        %v3508 = vpop.permute.xlu0 %3507
        %s3510 = sor.u32 256, 25
        %3511 = vbcast.lane.b32.xlu0 %v3097, %s3510
        %v3512 = vpop.permute.xlu0 %3511
        %s3514 = sor.u32 256, 1
        %3515 = vbcast.lane.b32.xlu0 %v3116, %s3514
        %v3516 = vpop.permute.xlu0 %3515
        %s3518 = sor.u32 256, 9
        %3519 = vbcast.lane.b32.xlu0 %v3116, %s3518
        %v3520 = vpop.permute.xlu0 %3519
        %s3522 = sor.u32 256, 17
        %3523 = vbcast.lane.b32.xlu0 %v3116, %s3522
        %v3524 = vpop.permute.xlu0 %3523
        %s3526 = sor.u32 256, 25
        %3527 = vbcast.lane.b32.xlu0 %v3116, %s3526
        %v3528 = vpop.permute.xlu0 %3527
        %s3530 = sor.u32 256, 1
        %3531 = vbcast.lane.b32.xlu0 %v3135, %s3530
        %v3532 = vpop.permute.xlu0 %3531
        %s3534 = sor.u32 256, 9
        %3535 = vbcast.lane.b32.xlu0 %v3135, %s3534
        %v3536 = vpop.permute.xlu0 %3535
        %s3538 = sor.u32 256, 17
        %3539 = vbcast.lane.b32.xlu0 %v3135, %s3538
        %v3540 = vpop.permute.xlu0 %3539
        %s3542 = sor.u32 256, 25
        %3543 = vbcast.lane.b32.xlu0 %v3135, %s3542
        %v3544 = vpop.permute.xlu0 %3543
        %s3546 = sor.u32 256, 1
        %3547 = vbcast.lane.b32.xlu0 %v3154, %s3546
        %v3548 = vpop.permute.xlu0 %3547
        %s3550 = sor.u32 256, 9
        %3551 = vbcast.lane.b32.xlu0 %v3154, %s3550
        %v3552 = vpop.permute.xlu0 %3551
        %s3554 = sor.u32 256, 17
        %3555 = vbcast.lane.b32.xlu0 %v3154, %s3554
        %v3556 = vpop.permute.xlu0 %3555
        %s3558 = sor.u32 256, 25
        %3559 = vbcast.lane.b32.xlu0 %v3154, %s3558
        %v3560 = vpop.permute.xlu0 %3559
        %s3562 = sor.u32 256, 1
        %3563 = vbcast.lane.b32.xlu0 %v3173, %s3562
        %v3564 = vpop.permute.xlu0 %3563
        %s3566 = sor.u32 256, 9
        %3567 = vbcast.lane.b32.xlu0 %v3173, %s3566
        %v3568 = vpop.permute.xlu0 %3567
        %s3570 = sor.u32 256, 17
        %3571 = vbcast.lane.b32.xlu0 %v3173, %s3570
        %v3572 = vpop.permute.xlu0 %3571
        %s3574 = sor.u32 256, 25
        %3575 = vbcast.lane.b32.xlu0 %v3173, %s3574
        %v3576 = vpop.permute.xlu0 %3575
        %v3577 = vlaneseq
        %v3578 = vshrl.u32 %v3577, 7
        %v3579 = vsub.s32 7, %v3578
        %v3580 = vrot.slane %v2884, %v3579
        %v3581 = vmul.f32 %v3324, %v3580
        %v3582 = vmul.f32 %v3328, %v3580
        %v3583 = vmul.f32 %v3332, %v3580
        %v3584 = vmul.f32 %v3336, %v3580
        %v3585 = vmul.f32 %v3340, %v3580
        %v3586 = vmul.f32 %v3344, %v3580
        %v3587 = vmul.f32 %v3348, %v3580
        %v3588 = vmul.f32 %v3352, %v3580
        %v3589 = vmul.f32 %v3356, %v3580
        %v3590 = vmul.f32 %v3360, %v3580
        %v3591 = vmul.f32 %v3364, %v3580
        %v3592 = vmul.f32 %v3368, %v3580
        %v3593 = vmul.f32 %v3372, %v3580
        %v3594 = vmul.f32 %v3376, %v3580
        %v3595 = vmul.f32 %v3380, %v3580
        %v3596 = vmul.f32 %v3384, %v3580
        %v3597 = vmul.f32 %v3388, %v3580
        %v3598 = vmul.f32 %v3392, %v3580
        %v3599 = vmul.f32 %v3396, %v3580
        %v3600 = vmul.f32 %v3400, %v3580
        %v3601 = vmul.f32 %v3404, %v3580
        %v3602 = vmul.f32 %v3408, %v3580
        %v3603 = vmul.f32 %v3412, %v3580
        %v3604 = vmul.f32 %v3416, %v3580
        %v3605 = vmul.f32 %v3420, %v3580
        %v3606 = vmul.f32 %v3424, %v3580
        %v3607 = vmul.f32 %v3428, %v3580
        %v3608 = vmul.f32 %v3432, %v3580
        %v3609 = vmul.f32 %v3436, %v3580
        %v3610 = vmul.f32 %v3440, %v3580
        %v3611 = vmul.f32 %v3444, %v3580
        %v3612 = vmul.f32 %v3448, %v3580
        %v3613 = vmul.f32 %v3452, %v3580
        %v3614 = vmul.f32 %v3456, %v3580
        %v3615 = vmul.f32 %v3460, %v3580
        %v3616 = vmul.f32 %v3464, %v3580
        %v3617 = vmul.f32 %v3468, %v3580
        %v3618 = vmul.f32 %v3472, %v3580
        %v3619 = vmul.f32 %v3476, %v3580
        %v3620 = vmul.f32 %v3480, %v3580
        %v3621 = vmul.f32 %v3484, %v3580
        %v3622 = vmul.f32 %v3488, %v3580
        %v3623 = vmul.f32 %v3492, %v3580
        %v3624 = vmul.f32 %v3496, %v3580
        %v3625 = vmul.f32 %v3500, %v3580
        %v3626 = vmul.f32 %v3504, %v3580
        %v3627 = vmul.f32 %v3508, %v3580
        %v3628 = vmul.f32 %v3512, %v3580
        %v3629 = vmul.f32 %v3516, %v3580
        %v3630 = vmul.f32 %v3520, %v3580
        %v3631 = vmul.f32 %v3524, %v3580
        %v3632 = vmul.f32 %v3528, %v3580
        %v3633 = vmul.f32 %v3532, %v3580
        %v3634 = vmul.f32 %v3536, %v3580
        %v3635 = vmul.f32 %v3540, %v3580
        %v3636 = vmul.f32 %v3544, %v3580
        %v3637 = vmul.f32 %v3548, %v3580
        %v3638 = vmul.f32 %v3552, %v3580
        %v3639 = vmul.f32 %v3556, %v3580
        %v3640 = vmul.f32 %v3560, %v3580
        %v3641 = vmul.f32 %v3564, %v3580
        %v3642 = vmul.f32 %v3568, %v3580
        %v3643 = vmul.f32 %v3572, %v3580
        %v3644 = vmul.f32 %v3576, %v3580
        %v3645 = vadd.f32 %v3257, %v3581
        %v3646 = vadd.f32 %v3258, %v3582
        %v3647 = vadd.f32 %v3259, %v3583
        %v3648 = vadd.f32 %v3260, %v3584
        %v3649 = vadd.f32 %v3261, %v3585
        %v3650 = vadd.f32 %v3262, %v3586
        %v3651 = vadd.f32 %v3263, %v3587
        %v3652 = vadd.f32 %v3264, %v3588
        %v3653 = vadd.f32 %v3265, %v3589
        %v3654 = vadd.f32 %v3266, %v3590
        %v3655 = vadd.f32 %v3267, %v3591
        %v3656 = vadd.f32 %v3268, %v3592
        %v3657 = vadd.f32 %v3269, %v3593
        %v3658 = vadd.f32 %v3270, %v3594
        %v3659 = vadd.f32 %v3271, %v3595
        %v3660 = vadd.f32 %v3272, %v3596
        %v3661 = vadd.f32 %v3273, %v3597
        %v3662 = vadd.f32 %v3274, %v3598
        %v3663 = vadd.f32 %v3275, %v3599
        %v3664 = vadd.f32 %v3276, %v3600
        %v3665 = vadd.f32 %v3277, %v3601
        %v3666 = vadd.f32 %v3278, %v3602
        %v3667 = vadd.f32 %v3279, %v3603
        %v3668 = vadd.f32 %v3280, %v3604
        %v3669 = vadd.f32 %v3281, %v3605
        %v3670 = vadd.f32 %v3282, %v3606
        %v3671 = vadd.f32 %v3283, %v3607
        %v3672 = vadd.f32 %v3284, %v3608
        %v3673 = vadd.f32 %v3285, %v3609
        %v3674 = vadd.f32 %v3286, %v3610
        %v3675 = vadd.f32 %v3287, %v3611
        %v3676 = vadd.f32 %v3288, %v3612
        %v3677 = vadd.f32 %v3289, %v3613
        %v3678 = vadd.f32 %v3290, %v3614
        %v3679 = vadd.f32 %v3291, %v3615
        %v3680 = vadd.f32 %v3292, %v3616
        %v3681 = vadd.f32 %v3293, %v3617
        %v3682 = vadd.f32 %v3294, %v3618
        %v3683 = vadd.f32 %v3295, %v3619
        %v3684 = vadd.f32 %v3296, %v3620
        %v3685 = vadd.f32 %v3297, %v3621
        %v3686 = vadd.f32 %v3298, %v3622
        %v3687 = vadd.f32 %v3299, %v3623
        %v3688 = vadd.f32 %v3300, %v3624
        %v3689 = vadd.f32 %v3301, %v3625
        %v3690 = vadd.f32 %v3302, %v3626
        %v3691 = vadd.f32 %v3303, %v3627
        %v3692 = vadd.f32 %v3304, %v3628
        %v3693 = vadd.f32 %v3305, %v3629
        %v3694 = vadd.f32 %v3306, %v3630
        %v3695 = vadd.f32 %v3307, %v3631
        %v3696 = vadd.f32 %v3308, %v3632
        %v3697 = vadd.f32 %v3309, %v3633
        %v3698 = vadd.f32 %v3310, %v3634
        %v3699 = vadd.f32 %v3311, %v3635
        %v3700 = vadd.f32 %v3312, %v3636
        %v3701 = vadd.f32 %v3313, %v3637
        %v3702 = vadd.f32 %v3314, %v3638
        %v3703 = vadd.f32 %v3315, %v3639
        %v3704 = vadd.f32 %v3316, %v3640
        %v3705 = vadd.f32 %v3317, %v3641
        %v3706 = vadd.f32 %v3318, %v3642
        %v3707 = vadd.f32 %v3319, %v3643
        %v3708 = vadd.f32 %v3320, %v3644
        %v3709 = vld [vmem:[%s3 + $0x4] sm:$0x1]
        %v3710 = vunpack.c.l.bf16 %v3709
        %s3712 = sor.u32 256, 2
        %3713 = vbcast.lane.b32.xlu0 %v2888, %s3712
        %v3714 = vpop.permute.xlu0 %3713
        %s3716 = sor.u32 256, 10
        %3717 = vbcast.lane.b32.xlu0 %v2888, %s3716
        %v3718 = vpop.permute.xlu0 %3717
        %s3720 = sor.u32 256, 18
        %3721 = vbcast.lane.b32.xlu0 %v2888, %s3720
        %v3722 = vpop.permute.xlu0 %3721
        %s3724 = sor.u32 256, 26
        %3725 = vbcast.lane.b32.xlu0 %v2888, %s3724
        %v3726 = vpop.permute.xlu0 %3725
        %s3728 = sor.u32 256, 2
        %3729 = vbcast.lane.b32.xlu0 %v2907, %s3728
        %v3730 = vpop.permute.xlu0 %3729
        %s3732 = sor.u32 256, 10
        %3733 = vbcast.lane.b32.xlu0 %v2907, %s3732
        %v3734 = vpop.permute.xlu0 %3733
        %s3736 = sor.u32 256, 18
        %3737 = vbcast.lane.b32.xlu0 %v2907, %s3736
        %v3738 = vpop.permute.xlu0 %3737
        %s3740 = sor.u32 256, 26
        %3741 = vbcast.lane.b32.xlu0 %v2907, %s3740
        %v3742 = vpop.permute.xlu0 %3741
        %s3744 = sor.u32 256, 2
        %3745 = vbcast.lane.b32.xlu0 %v2926, %s3744
        %v3746 = vpop.permute.xlu0 %3745
        %s3748 = sor.u32 256, 10
        %3749 = vbcast.lane.b32.xlu0 %v2926, %s3748
        %v3750 = vpop.permute.xlu0 %3749
        %s3752 = sor.u32 256, 18
        %3753 = vbcast.lane.b32.xlu0 %v2926, %s3752
        %v3754 = vpop.permute.xlu0 %3753
        %s3756 = sor.u32 256, 26
        %3757 = vbcast.lane.b32.xlu0 %v2926, %s3756
        %v3758 = vpop.permute.xlu0 %3757
        %s3760 = sor.u32 256, 2
        %3761 = vbcast.lane.b32.xlu0 %v2945, %s3760
        %v3762 = vpop.permute.xlu0 %3761
        %s3764 = sor.u32 256, 10
        %3765 = vbcast.lane.b32.xlu0 %v2945, %s3764
        %v3766 = vpop.permute.xlu0 %3765
        %s3768 = sor.u32 256, 18
        %3769 = vbcast.lane.b32.xlu0 %v2945, %s3768
        %v3770 = vpop.permute.xlu0 %3769
        %s3772 = sor.u32 256, 26
        %3773 = vbcast.lane.b32.xlu0 %v2945, %s3772
        %v3774 = vpop.permute.xlu0 %3773
        %s3776 = sor.u32 256, 2
        %3777 = vbcast.lane.b32.xlu0 %v2964, %s3776
        %v3778 = vpop.permute.xlu0 %3777
        %s3780 = sor.u32 256, 10
        %3781 = vbcast.lane.b32.xlu0 %v2964, %s3780
        %v3782 = vpop.permute.xlu0 %3781
        %s3784 = sor.u32 256, 18
        %3785 = vbcast.lane.b32.xlu0 %v2964, %s3784
        %v3786 = vpop.permute.xlu0 %3785
        %s3788 = sor.u32 256, 26
        %3789 = vbcast.lane.b32.xlu0 %v2964, %s3788
        %v3790 = vpop.permute.xlu0 %3789
        %s3792 = sor.u32 256, 2
        %3793 = vbcast.lane.b32.xlu0 %v2983, %s3792
        %v3794 = vpop.permute.xlu0 %3793
        %s3796 = sor.u32 256, 10
        %3797 = vbcast.lane.b32.xlu0 %v2983, %s3796
        %v3798 = vpop.permute.xlu0 %3797
        %s3800 = sor.u32 256, 18
        %3801 = vbcast.lane.b32.xlu0 %v2983, %s3800
        %v3802 = vpop.permute.xlu0 %3801
        %s3804 = sor.u32 256, 26
        %3805 = vbcast.lane.b32.xlu0 %v2983, %s3804
        %v3806 = vpop.permute.xlu0 %3805
        %s3808 = sor.u32 256, 2
        %3809 = vbcast.lane.b32.xlu0 %v3002, %s3808
        %v3810 = vpop.permute.xlu0 %3809
        %s3812 = sor.u32 256, 10
        %3813 = vbcast.lane.b32.xlu0 %v3002, %s3812
        %v3814 = vpop.permute.xlu0 %3813
        %s3816 = sor.u32 256, 18
        %3817 = vbcast.lane.b32.xlu0 %v3002, %s3816
        %v3818 = vpop.permute.xlu0 %3817
        %s3820 = sor.u32 256, 26
        %3821 = vbcast.lane.b32.xlu0 %v3002, %s3820
        %v3822 = vpop.permute.xlu0 %3821
        %s3824 = sor.u32 256, 2
        %3825 = vbcast.lane.b32.xlu0 %v3021, %s3824
        %v3826 = vpop.permute.xlu0 %3825
        %s3828 = sor.u32 256, 10
        %3829 = vbcast.lane.b32.xlu0 %v3021, %s3828
        %v3830 = vpop.permute.xlu0 %3829
        %s3832 = sor.u32 256, 18
        %3833 = vbcast.lane.b32.xlu0 %v3021, %s3832
        %v3834 = vpop.permute.xlu0 %3833
        %s3836 = sor.u32 256, 26
        %3837 = vbcast.lane.b32.xlu0 %v3021, %s3836
        %v3838 = vpop.permute.xlu0 %3837
        %s3840 = sor.u32 256, 2
        %3841 = vbcast.lane.b32.xlu0 %v3040, %s3840
        %v3842 = vpop.permute.xlu0 %3841
        %s3844 = sor.u32 256, 10
        %3845 = vbcast.lane.b32.xlu0 %v3040, %s3844
        %v3846 = vpop.permute.xlu0 %3845
        %s3848 = sor.u32 256, 18
        %3849 = vbcast.lane.b32.xlu0 %v3040, %s3848
        %v3850 = vpop.permute.xlu0 %3849
        %s3852 = sor.u32 256, 26
        %3853 = vbcast.lane.b32.xlu0 %v3040, %s3852
        %v3854 = vpop.permute.xlu0 %3853
        %s3856 = sor.u32 256, 2
        %3857 = vbcast.lane.b32.xlu0 %v3059, %s3856
        %v3858 = vpop.permute.xlu0 %3857
        %s3860 = sor.u32 256, 10
        %3861 = vbcast.lane.b32.xlu0 %v3059, %s3860
        %v3862 = vpop.permute.xlu0 %3861
        %s3864 = sor.u32 256, 18
        %3865 = vbcast.lane.b32.xlu0 %v3059, %s3864
        %v3866 = vpop.permute.xlu0 %3865
        %s3868 = sor.u32 256, 26
        %3869 = vbcast.lane.b32.xlu0 %v3059, %s3868
        %v3870 = vpop.permute.xlu0 %3869
        %s3872 = sor.u32 256, 2
        %3873 = vbcast.lane.b32.xlu0 %v3078, %s3872
        %v3874 = vpop.permute.xlu0 %3873
        %s3876 = sor.u32 256, 10
        %3877 = vbcast.lane.b32.xlu0 %v3078, %s3876
        %v3878 = vpop.permute.xlu0 %3877
        %s3880 = sor.u32 256, 18
        %3881 = vbcast.lane.b32.xlu0 %v3078, %s3880
        %v3882 = vpop.permute.xlu0 %3881
        %s3884 = sor.u32 256, 26
        %3885 = vbcast.lane.b32.xlu0 %v3078, %s3884
        %v3886 = vpop.permute.xlu0 %3885
        %s3888 = sor.u32 256, 2
        %3889 = vbcast.lane.b32.xlu0 %v3097, %s3888
        %v3890 = vpop.permute.xlu0 %3889
        %s3892 = sor.u32 256, 10
        %3893 = vbcast.lane.b32.xlu0 %v3097, %s3892
        %v3894 = vpop.permute.xlu0 %3893
        %s3896 = sor.u32 256, 18
        %3897 = vbcast.lane.b32.xlu0 %v3097, %s3896
        %v3898 = vpop.permute.xlu0 %3897
        %s3900 = sor.u32 256, 26
        %3901 = vbcast.lane.b32.xlu0 %v3097, %s3900
        %v3902 = vpop.permute.xlu0 %3901
        %s3904 = sor.u32 256, 2
        %3905 = vbcast.lane.b32.xlu0 %v3116, %s3904
        %v3906 = vpop.permute.xlu0 %3905
        %s3908 = sor.u32 256, 10
        %3909 = vbcast.lane.b32.xlu0 %v3116, %s3908
        %v3910 = vpop.permute.xlu0 %3909
        %s3912 = sor.u32 256, 18
        %3913 = vbcast.lane.b32.xlu0 %v3116, %s3912
        %v3914 = vpop.permute.xlu0 %3913
        %s3916 = sor.u32 256, 26
        %3917 = vbcast.lane.b32.xlu0 %v3116, %s3916
        %v3918 = vpop.permute.xlu0 %3917
        %s3920 = sor.u32 256, 2
        %3921 = vbcast.lane.b32.xlu0 %v3135, %s3920
        %v3922 = vpop.permute.xlu0 %3921
        %s3924 = sor.u32 256, 10
        %3925 = vbcast.lane.b32.xlu0 %v3135, %s3924
        %v3926 = vpop.permute.xlu0 %3925
        %s3928 = sor.u32 256, 18
        %3929 = vbcast.lane.b32.xlu0 %v3135, %s3928
        %v3930 = vpop.permute.xlu0 %3929
        %s3932 = sor.u32 256, 26
        %3933 = vbcast.lane.b32.xlu0 %v3135, %s3932
        %v3934 = vpop.permute.xlu0 %3933
        %s3936 = sor.u32 256, 2
        %3937 = vbcast.lane.b32.xlu0 %v3154, %s3936
        %v3938 = vpop.permute.xlu0 %3937
        %s3940 = sor.u32 256, 10
        %3941 = vbcast.lane.b32.xlu0 %v3154, %s3940
        %v3942 = vpop.permute.xlu0 %3941
        %s3944 = sor.u32 256, 18
        %3945 = vbcast.lane.b32.xlu0 %v3154, %s3944
        %v3946 = vpop.permute.xlu0 %3945
        %s3948 = sor.u32 256, 26
        %3949 = vbcast.lane.b32.xlu0 %v3154, %s3948
        %v3950 = vpop.permute.xlu0 %3949
        %s3952 = sor.u32 256, 2
        %3953 = vbcast.lane.b32.xlu0 %v3173, %s3952
        %v3954 = vpop.permute.xlu0 %3953
        %s3956 = sor.u32 256, 10
        %3957 = vbcast.lane.b32.xlu0 %v3173, %s3956
        %v3958 = vpop.permute.xlu0 %3957
        %s3960 = sor.u32 256, 18
        %3961 = vbcast.lane.b32.xlu0 %v3173, %s3960
        %v3962 = vpop.permute.xlu0 %3961
        %s3964 = sor.u32 256, 26
        %3965 = vbcast.lane.b32.xlu0 %v3173, %s3964
        %v3966 = vpop.permute.xlu0 %3965
        %v3967 = vlaneseq
        %v3968 = vshrl.u32 %v3967, 7
        %v3969 = vsub.s32 0, %v3968
        %v3970 = vrot.slane %v3710, %v3969
        %v3971 = vmul.f32 %v3714, %v3970
        %v3972 = vmul.f32 %v3718, %v3970
        %v3973 = vmul.f32 %v3722, %v3970
        %v3974 = vmul.f32 %v3726, %v3970
        %v3975 = vmul.f32 %v3730, %v3970
        %v3976 = vmul.f32 %v3734, %v3970
        %v3977 = vmul.f32 %v3738, %v3970
        %v3978 = vmul.f32 %v3742, %v3970
        %v3979 = vmul.f32 %v3746, %v3970
        %v3980 = vmul.f32 %v3750, %v3970
        %v3981 = vmul.f32 %v3754, %v3970
        %v3982 = vmul.f32 %v3758, %v3970
        %v3983 = vmul.f32 %v3762, %v3970
        %v3984 = vmul.f32 %v3766, %v3970
        %v3985 = vmul.f32 %v3770, %v3970
        %v3986 = vmul.f32 %v3774, %v3970
        %v3987 = vmul.f32 %v3778, %v3970
        %v3988 = vmul.f32 %v3782, %v3970
        %v3989 = vmul.f32 %v3786, %v3970
        %v3990 = vmul.f32 %v3790, %v3970
        %v3991 = vmul.f32 %v3794, %v3970
        %v3992 = vmul.f32 %v3798, %v3970
        %v3993 = vmul.f32 %v3802, %v3970
        %v3994 = vmul.f32 %v3806, %v3970
        %v3995 = vmul.f32 %v3810, %v3970
        %v3996 = vmul.f32 %v3814, %v3970
        %v3997 = vmul.f32 %v3818, %v3970
        %v3998 = vmul.f32 %v3822, %v3970
        %v3999 = vmul.f32 %v3826, %v3970
        %v4000 = vmul.f32 %v3830, %v3970
        %v4001 = vmul.f32 %v3834, %v3970
        %v4002 = vmul.f32 %v3838, %v3970
        %v4003 = vmul.f32 %v3842, %v3970
        %v4004 = vmul.f32 %v3846, %v3970
        %v4005 = vmul.f32 %v3850, %v3970
        %v4006 = vmul.f32 %v3854, %v3970
        %v4007 = vmul.f32 %v3858, %v3970
        %v4008 = vmul.f32 %v3862, %v3970
        %v4009 = vmul.f32 %v3866, %v3970
        %v4010 = vmul.f32 %v3870, %v3970
        %v4011 = vmul.f32 %v3874, %v3970
        %v4012 = vmul.f32 %v3878, %v3970
        %v4013 = vmul.f32 %v3882, %v3970
        %v4014 = vmul.f32 %v3886, %v3970
        %v4015 = vmul.f32 %v3890, %v3970
        %v4016 = vmul.f32 %v3894, %v3970
        %v4017 = vmul.f32 %v3898, %v3970
        %v4018 = vmul.f32 %v3902, %v3970
        %v4019 = vmul.f32 %v3906, %v3970
        %v4020 = vmul.f32 %v3910, %v3970
        %v4021 = vmul.f32 %v3914, %v3970
        %v4022 = vmul.f32 %v3918, %v3970
        %v4023 = vmul.f32 %v3922, %v3970
        %v4024 = vmul.f32 %v3926, %v3970
        %v4025 = vmul.f32 %v3930, %v3970
        %v4026 = vmul.f32 %v3934, %v3970
        %v4027 = vmul.f32 %v3938, %v3970
        %v4028 = vmul.f32 %v3942, %v3970
        %v4029 = vmul.f32 %v3946, %v3970
        %v4030 = vmul.f32 %v3950, %v3970
        %v4031 = vmul.f32 %v3954, %v3970
        %v4032 = vmul.f32 %v3958, %v3970
        %v4033 = vmul.f32 %v3962, %v3970
        %v4034 = vmul.f32 %v3966, %v3970
        %v4035 = vadd.f32 %v3645, %v3971
        %v4036 = vadd.f32 %v3646, %v3972
        %v4037 = vadd.f32 %v3647, %v3973
        %v4038 = vadd.f32 %v3648, %v3974
        %v4039 = vadd.f32 %v3649, %v3975
        %v4040 = vadd.f32 %v3650, %v3976
        %v4041 = vadd.f32 %v3651, %v3977
        %v4042 = vadd.f32 %v3652, %v3978
        %v4043 = vadd.f32 %v3653, %v3979
        %v4044 = vadd.f32 %v3654, %v3980
        %v4045 = vadd.f32 %v3655, %v3981
        %v4046 = vadd.f32 %v3656, %v3982
        %v4047 = vadd.f32 %v3657, %v3983
        %v4048 = vadd.f32 %v3658, %v3984
        %v4049 = vadd.f32 %v3659, %v3985
        %v4050 = vadd.f32 %v3660, %v3986
        %v4051 = vadd.f32 %v3661, %v3987
        %v4052 = vadd.f32 %v3662, %v3988
        %v4053 = vadd.f32 %v3663, %v3989
        %v4054 = vadd.f32 %v3664, %v3990
        %v4055 = vadd.f32 %v3665, %v3991
        %v4056 = vadd.f32 %v3666, %v3992
        %v4057 = vadd.f32 %v3667, %v3993
        %v4058 = vadd.f32 %v3668, %v3994
        %v4059 = vadd.f32 %v3669, %v3995
        %v4060 = vadd.f32 %v3670, %v3996
        %v4061 = vadd.f32 %v3671, %v3997
        %v4062 = vadd.f32 %v3672, %v3998
        %v4063 = vadd.f32 %v3673, %v3999
        %v4064 = vadd.f32 %v3674, %v4000
        %v4065 = vadd.f32 %v3675, %v4001
        %v4066 = vadd.f32 %v3676, %v4002
        %v4067 = vadd.f32 %v3677, %v4003
        %v4068 = vadd.f32 %v3678, %v4004
        %v4069 = vadd.f32 %v3679, %v4005
        %v4070 = vadd.f32 %v3680, %v4006
        %v4071 = vadd.f32 %v3681, %v4007
        %v4072 = vadd.f32 %v3682, %v4008
        %v4073 = vadd.f32 %v3683, %v4009
        %v4074 = vadd.f32 %v3684, %v4010
        %v4075 = vadd.f32 %v3685, %v4011
        %v4076 = vadd.f32 %v3686, %v4012
        %v4077 = vadd.f32 %v3687, %v4013
        %v4078 = vadd.f32 %v3688, %v4014
        %v4079 = vadd.f32 %v3689, %v4015
        %v4080 = vadd.f32 %v3690, %v4016
        %v4081 = vadd.f32 %v3691, %v4017
        %v4082 = vadd.f32 %v3692, %v4018
        %v4083 = vadd.f32 %v3693, %v4019
        %v4084 = vadd.f32 %v3694, %v4020
        %v4085 = vadd.f32 %v3695, %v4021
        %v4086 = vadd.f32 %v3696, %v4022
        %v4087 = vadd.f32 %v3697, %v4023
        %v4088 = vadd.f32 %v3698, %v4024
        %v4089 = vadd.f32 %v3699, %v4025
        %v4090 = vadd.f32 %v3700, %v4026
        %v4091 = vadd.f32 %v3701, %v4027
        %v4092 = vadd.f32 %v3702, %v4028
        %v4093 = vadd.f32 %v3703, %v4029
        %v4094 = vadd.f32 %v3704, %v4030
        %v4095 = vadd.f32 %v3705, %v4031
        %v4096 = vadd.f32 %v3706, %v4032
        %v4097 = vadd.f32 %v3707, %v4033
        %v4098 = vadd.f32 %v3708, %v4034
        %v4099 = vld [vmem:[%s4] sm:$0x1]
        %v4101 = vlaneseq
        %v4102 = vshrl.u32 %v4101, 7
        %v4103 = vsub.s32 0, %v4102
        %v4104 = vrot.slane %v4099, %v4103
        %v4106 = vmul.f32 %v4035, %v4104
        %v4107 = vmul.f32 %v4036, %v4104
        %v4108 = vmul.f32 %v4037, %v4104
        %v4109 = vmul.f32 %v4038, %v4104
        %v4110 = vmul.f32 %v4039, %v4104
        %v4111 = vmul.f32 %v4040, %v4104
        %v4112 = vmul.f32 %v4041, %v4104
        %v4113 = vmul.f32 %v4042, %v4104
        %v4114 = vmul.f32 %v4043, %v4104
        %v4115 = vmul.f32 %v4044, %v4104
        %v4116 = vmul.f32 %v4045, %v4104
        %v4117 = vmul.f32 %v4046, %v4104
        %v4118 = vmul.f32 %v4047, %v4104
        %v4119 = vmul.f32 %v4048, %v4104
        %v4120 = vmul.f32 %v4049, %v4104
        %v4121 = vmul.f32 %v4050, %v4104
        %v4122 = vmul.f32 %v4051, %v4104
        %v4123 = vmul.f32 %v4052, %v4104
        %v4124 = vmul.f32 %v4053, %v4104
        %v4125 = vmul.f32 %v4054, %v4104
        %v4126 = vmul.f32 %v4055, %v4104
        %v4127 = vmul.f32 %v4056, %v4104
        %v4128 = vmul.f32 %v4057, %v4104
        %v4129 = vmul.f32 %v4058, %v4104
        %v4130 = vmul.f32 %v4059, %v4104
        %v4131 = vmul.f32 %v4060, %v4104
        %v4132 = vmul.f32 %v4061, %v4104
        %v4133 = vmul.f32 %v4062, %v4104
        %v4134 = vmul.f32 %v4063, %v4104
        %v4135 = vmul.f32 %v4064, %v4104
        %v4136 = vmul.f32 %v4065, %v4104
        %v4137 = vmul.f32 %v4066, %v4104
        %v4138 = vmul.f32 %v4067, %v4104
        %v4139 = vmul.f32 %v4068, %v4104
        %v4140 = vmul.f32 %v4069, %v4104
        %v4141 = vmul.f32 %v4070, %v4104
        %v4142 = vmul.f32 %v4071, %v4104
        %v4143 = vmul.f32 %v4072, %v4104
        %v4144 = vmul.f32 %v4073, %v4104
        %v4145 = vmul.f32 %v4074, %v4104
        %v4146 = vmul.f32 %v4075, %v4104
        %v4147 = vmul.f32 %v4076, %v4104
        %v4148 = vmul.f32 %v4077, %v4104
        %v4149 = vmul.f32 %v4078, %v4104
        %v4150 = vmul.f32 %v4079, %v4104
        %v4151 = vmul.f32 %v4080, %v4104
        %v4152 = vmul.f32 %v4081, %v4104
        %v4153 = vmul.f32 %v4082, %v4104
        %v4154 = vmul.f32 %v4083, %v4104
        %v4155 = vmul.f32 %v4084, %v4104
        %v4156 = vmul.f32 %v4085, %v4104
        %v4157 = vmul.f32 %v4086, %v4104
        %v4158 = vmul.f32 %v4087, %v4104
        %v4159 = vmul.f32 %v4088, %v4104
        %v4160 = vmul.f32 %v4089, %v4104
        %v4161 = vmul.f32 %v4090, %v4104
        %v4162 = vmul.f32 %v4091, %v4104
        %v4163 = vmul.f32 %v4092, %v4104
        %v4164 = vmul.f32 %v4093, %v4104
        %v4165 = vmul.f32 %v4094, %v4104
        %v4166 = vmul.f32 %v4095, %v4104
        %v4167 = vmul.f32 %v4096, %v4104
        %v4168 = vmul.f32 %v4097, %v4104
        %v4169 = vmul.f32 %v4098, %v4104
        %v4170 = vld [vmem:[%s5] sm:$0x1]
        %v4172 = vlaneseq
        %v4173 = vshrl.u32 %v4172, 7
        %v4174 = vsub.s32 0, %v4173
        %v4175 = vrot.slane %v4170, %v4174
        %v4177 = vadd.f32 %v4106, %v4175
        %v4178 = vadd.f32 %v4107, %v4175
        %v4179 = vadd.f32 %v4108, %v4175
        %v4180 = vadd.f32 %v4109, %v4175
        %v4181 = vadd.f32 %v4110, %v4175
        %v4182 = vadd.f32 %v4111, %v4175
        %v4183 = vadd.f32 %v4112, %v4175
        %v4184 = vadd.f32 %v4113, %v4175
        %v4185 = vadd.f32 %v4114, %v4175
        %v4186 = vadd.f32 %v4115, %v4175
        %v4187 = vadd.f32 %v4116, %v4175
        %v4188 = vadd.f32 %v4117, %v4175
        %v4189 = vadd.f32 %v4118, %v4175
        %v4190 = vadd.f32 %v4119, %v4175
        %v4191 = vadd.f32 %v4120, %v4175
        %v4192 = vadd.f32 %v4121, %v4175
        %v4193 = vadd.f32 %v4122, %v4175
        %v4194 = vadd.f32 %v4123, %v4175
        %v4195 = vadd.f32 %v4124, %v4175
        %v4196 = vadd.f32 %v4125, %v4175
        %v4197 = vadd.f32 %v4126, %v4175
        %v4198 = vadd.f32 %v4127, %v4175
        %v4199 = vadd.f32 %v4128, %v4175
        %v4200 = vadd.f32 %v4129, %v4175
        %v4201 = vadd.f32 %v4130, %v4175
        %v4202 = vadd.f32 %v4131, %v4175
        %v4203 = vadd.f32 %v4132, %v4175
        %v4204 = vadd.f32 %v4133, %v4175
        %v4205 = vadd.f32 %v4134, %v4175
        %v4206 = vadd.f32 %v4135, %v4175
        %v4207 = vadd.f32 %v4136, %v4175
        %v4208 = vadd.f32 %v4137, %v4175
        %v4209 = vadd.f32 %v4138, %v4175
        %v4210 = vadd.f32 %v4139, %v4175
        %v4211 = vadd.f32 %v4140, %v4175
        %v4212 = vadd.f32 %v4141, %v4175
        %v4213 = vadd.f32 %v4142, %v4175
        %v4214 = vadd.f32 %v4143, %v4175
        %v4215 = vadd.f32 %v4144, %v4175
        %v4216 = vadd.f32 %v4145, %v4175
        %v4217 = vadd.f32 %v4146, %v4175
        %v4218 = vadd.f32 %v4147, %v4175
        %v4219 = vadd.f32 %v4148, %v4175
        %v4220 = vadd.f32 %v4149, %v4175
        %v4221 = vadd.f32 %v4150, %v4175
        %v4222 = vadd.f32 %v4151, %v4175
        %v4223 = vadd.f32 %v4152, %v4175
        %v4224 = vadd.f32 %v4153, %v4175
        %v4225 = vadd.f32 %v4154, %v4175
        %v4226 = vadd.f32 %v4155, %v4175
        %v4227 = vadd.f32 %v4156, %v4175
        %v4228 = vadd.f32 %v4157, %v4175
        %v4229 = vadd.f32 %v4158, %v4175
        %v4230 = vadd.f32 %v4159, %v4175
        %v4231 = vadd.f32 %v4160, %v4175
        %v4232 = vadd.f32 %v4161, %v4175
        %v4233 = vadd.f32 %v4162, %v4175
        %v4234 = vadd.f32 %v4163, %v4175
        %v4235 = vadd.f32 %v4164, %v4175
        %v4236 = vadd.f32 %v4165, %v4175
        %v4237 = vadd.f32 %v4166, %v4175
        %v4238 = vadd.f32 %v4167, %v4175
        %v4239 = vadd.f32 %v4168, %v4175
        %v4240 = vadd.f32 %v4169, %v4175
        %v4241 = vmax.f32 %v4177, 0.0
        %v4242 = vmax.f32 %v4178, 0.0
        %v4243 = vmax.f32 %v4179, 0.0
        %v4244 = vmax.f32 %v4180, 0.0
        %v4245 = vmax.f32 %v4181, 0.0
        %v4246 = vmax.f32 %v4182, 0.0
        %v4247 = vmax.f32 %v4183, 0.0
        %v4248 = vmax.f32 %v4184, 0.0
        %v4249 = vmax.f32 %v4185, 0.0
        %v4250 = vmax.f32 %v4186, 0.0
        %v4251 = vmax.f32 %v4187, 0.0
        %v4252 = vmax.f32 %v4188, 0.0
        %v4253 = vmax.f32 %v4189, 0.0
        %v4254 = vmax.f32 %v4190, 0.0
        %v4255 = vmax.f32 %v4191, 0.0
        %v4256 = vmax.f32 %v4192, 0.0
        %v4257 = vmax.f32 %v4193, 0.0
        %v4258 = vmax.f32 %v4194, 0.0
        %v4259 = vmax.f32 %v4195, 0.0
        %v4260 = vmax.f32 %v4196, 0.0
        %v4261 = vmax.f32 %v4197, 0.0
        %v4262 = vmax.f32 %v4198, 0.0
        %v4263 = vmax.f32 %v4199, 0.0
        %v4264 = vmax.f32 %v4200, 0.0
        %v4265 = vmax.f32 %v4201, 0.0
        %v4266 = vmax.f32 %v4202, 0.0
        %v4267 = vmax.f32 %v4203, 0.0
        %v4268 = vmax.f32 %v4204, 0.0
        %v4269 = vmax.f32 %v4205, 0.0
        %v4270 = vmax.f32 %v4206, 0.0
        %v4271 = vmax.f32 %v4207, 0.0
        %v4272 = vmax.f32 %v4208, 0.0
        %v4273 = vmax.f32 %v4209, 0.0
        %v4274 = vmax.f32 %v4210, 0.0
        %v4275 = vmax.f32 %v4211, 0.0
        %v4276 = vmax.f32 %v4212, 0.0
        %v4277 = vmax.f32 %v4213, 0.0
        %v4278 = vmax.f32 %v4214, 0.0
        %v4279 = vmax.f32 %v4215, 0.0
        %v4280 = vmax.f32 %v4216, 0.0
        %v4281 = vmax.f32 %v4217, 0.0
        %v4282 = vmax.f32 %v4218, 0.0
        %v4283 = vmax.f32 %v4219, 0.0
        %v4284 = vmax.f32 %v4220, 0.0
        %v4285 = vmax.f32 %v4221, 0.0
        %v4286 = vmax.f32 %v4222, 0.0
        %v4287 = vmax.f32 %v4223, 0.0
        %v4288 = vmax.f32 %v4224, 0.0
        %v4289 = vmax.f32 %v4225, 0.0
        %v4290 = vmax.f32 %v4226, 0.0
        %v4291 = vmax.f32 %v4227, 0.0
        %v4292 = vmax.f32 %v4228, 0.0
        %v4293 = vmax.f32 %v4229, 0.0
        %v4294 = vmax.f32 %v4230, 0.0
        %v4295 = vmax.f32 %v4231, 0.0
        %v4296 = vmax.f32 %v4232, 0.0
        %v4297 = vmax.f32 %v4233, 0.0
        %v4298 = vmax.f32 %v4234, 0.0
        %v4299 = vmax.f32 %v4235, 0.0
        %v4300 = vmax.f32 %v4236, 0.0
        %v4301 = vmax.f32 %v4237, 0.0
        %v4302 = vmax.f32 %v4238, 0.0
        %v4303 = vmax.f32 %v4239, 0.0
        %v4304 = vmax.f32 %v4240, 0.0
        %v4305 = vcombine.low %v4241, %v4249
        %v4306 = vcombine.high %v4241, %v4249
        %v4308 = vunpack.c.l.s4 1983009808
        %v4309 = vunpack.c.0.s8 %v4308
        %v4310 = vlaneseq
        %v4311 = vshrl.u32 %v4310, 7
        %v4312 = vsub.s32 %v4309, %v4311
        %v4313 = vrot.slane %v4305, %v4312
        %v4315 = vunpack.c.l.s4 1983009808
        %v4316 = vunpack.c.0.s8 %v4315
        %v4317 = vlaneseq
        %v4318 = vshrl.u32 %v4317, 7
        %v4319 = vsub.s32 %v4316, %v4318
        %v4320 = vrot.slane %v4306, %v4319
        %v4321 = vcombine.low %v4245, %v4253
        %v4322 = vcombine.high %v4245, %v4253
        %v4324 = vunpack.c.l.s4 1983009808
        %v4325 = vunpack.c.0.s8 %v4324
        %v4326 = vlaneseq
        %v4327 = vshrl.u32 %v4326, 7
        %v4328 = vsub.s32 %v4325, %v4327
        %v4329 = vrot.slane %v4321, %v4328
        %v4331 = vunpack.c.l.s4 1983009808
        %v4332 = vunpack.c.0.s8 %v4331
        %v4333 = vlaneseq
        %v4334 = vshrl.u32 %v4333, 7
        %v4335 = vsub.s32 %v4332, %v4334
        %v4336 = vrot.slane %v4322, %v4335
        %v4337 = vcombine.low %v4257, %v4265
        %v4338 = vcombine.high %v4257, %v4265
        %v4340 = vunpack.c.l.s4 1983009808
        %v4341 = vunpack.c.0.s8 %v4340
        %v4342 = vlaneseq
        %v4343 = vshrl.u32 %v4342, 7
        %v4344 = vsub.s32 %v4341, %v4343
        %v4345 = vrot.slane %v4337, %v4344
        %v4347 = vunpack.c.l.s4 1983009808
        %v4348 = vunpack.c.0.s8 %v4347
        %v4349 = vlaneseq
        %v4350 = vshrl.u32 %v4349, 7
        %v4351 = vsub.s32 %v4348, %v4350
        %v4352 = vrot.slane %v4338, %v4351
        %v4353 = vcombine.low %v4261, %v4269
        %v4354 = vcombine.high %v4261, %v4269
        %v4356 = vunpack.c.l.s4 1983009808
        %v4357 = vunpack.c.0.s8 %v4356
        %v4358 = vlaneseq
        %v4359 = vshrl.u32 %v4358, 7
        %v4360 = vsub.s32 %v4357, %v4359
        %v4361 = vrot.slane %v4353, %v4360
        %v4363 = vunpack.c.l.s4 1983009808
        %v4364 = vunpack.c.0.s8 %v4363
        %v4365 = vlaneseq
        %v4366 = vshrl.u32 %v4365, 7
        %v4367 = vsub.s32 %v4364, %v4366
        %v4368 = vrot.slane %v4354, %v4367
        %v4369 = vcombine.low %v4313, %v4329
        %v4370 = vcombine.high %v4313, %v4329
        %v4372 = vunpack.c.l.s4 1934713408
        %v4373 = vunpack.c.0.s8 %v4372
        %v4374 = vlaneseq
        %v4375 = vshrl.u32 %v4374, 7
        %v4376 = vsub.s32 %v4373, %v4375
        %v4377 = vrot.slane %v4369, %v4376
        %v4379 = vunpack.c.l.s4 1934713408
        %v4380 = vunpack.c.0.s8 %v4379
        %v4381 = vlaneseq
        %v4382 = vshrl.u32 %v4381, 7
        %v4383 = vsub.s32 %v4380, %v4382
        %v4384 = vrot.slane %v4370, %v4383
        %v4385 = vcombine.low %v4320, %v4336
        %v4386 = vcombine.high %v4320, %v4336
        %v4388 = vunpack.c.l.s4 1934713408
        %v4389 = vunpack.c.0.s8 %v4388
        %v4390 = vlaneseq
        %v4391 = vshrl.u32 %v4390, 7
        %v4392 = vsub.s32 %v4389, %v4391
        %v4393 = vrot.slane %v4385, %v4392
        %v4395 = vunpack.c.l.s4 1934713408
        %v4396 = vunpack.c.0.s8 %v4395
        %v4397 = vlaneseq
        %v4398 = vshrl.u32 %v4397, 7
        %v4399 = vsub.s32 %v4396, %v4398
        %v4400 = vrot.slane %v4386, %v4399
        %v4401 = vcombine.low %v4345, %v4361
        %v4402 = vcombine.high %v4345, %v4361
        %v4404 = vunpack.c.l.s4 1934713408
        %v4405 = vunpack.c.0.s8 %v4404
        %v4406 = vlaneseq
        %v4407 = vshrl.u32 %v4406, 7
        %v4408 = vsub.s32 %v4405, %v4407
        %v4409 = vrot.slane %v4401, %v4408
        %v4411 = vunpack.c.l.s4 1934713408
        %v4412 = vunpack.c.0.s8 %v4411
        %v4413 = vlaneseq
        %v4414 = vshrl.u32 %v4413, 7
        %v4415 = vsub.s32 %v4412, %v4414
        %v4416 = vrot.slane %v4402, %v4415
        %v4417 = vcombine.low %v4352, %v4368
        %v4418 = vcombine.high %v4352, %v4368
        %v4420 = vunpack.c.l.s4 1934713408
        %v4421 = vunpack.c.0.s8 %v4420
        %v4422 = vlaneseq
        %v4423 = vshrl.u32 %v4422, 7
        %v4424 = vsub.s32 %v4421, %v4423
        %v4425 = vrot.slane %v4417, %v4424
        %v4427 = vunpack.c.l.s4 1934713408
        %v4428 = vunpack.c.0.s8 %v4427
        %v4429 = vlaneseq
        %v4430 = vshrl.u32 %v4429, 7
        %v4431 = vsub.s32 %v4428, %v4430
        %v4432 = vrot.slane %v4418, %v4431
        %v4433 = vcombine.low %v4377, %v4409
        %v4434 = vcombine.high %v4377, %v4409
        %v4435 = vcombine.low %v4384, %v4416
        %v4436 = vcombine.high %v4384, %v4416
        %v4437 = vcombine.low %v4393, %v4425
        %v4438 = vcombine.high %v4393, %v4425
        %v4439 = vcombine.low %v4400, %v4432
        %v4440 = vcombine.high %v4400, %v4432
        %v4441 = vcombine.low %v4273, %v4281
        %v4442 = vcombine.high %v4273, %v4281
        %v4444 = vunpack.c.l.s4 1983009808
        %v4445 = vunpack.c.0.s8 %v4444
        %v4446 = vlaneseq
        %v4447 = vshrl.u32 %v4446, 7
        %v4448 = vsub.s32 %v4445, %v4447
        %v4449 = vrot.slane %v4441, %v4448
        %v4451 = vunpack.c.l.s4 1983009808
        %v4452 = vunpack.c.0.s8 %v4451
        %v4453 = vlaneseq
        %v4454 = vshrl.u32 %v4453, 7
        %v4455 = vsub.s32 %v4452, %v4454
        %v4456 = vrot.slane %v4442, %v4455
        %v4457 = vcombine.low %v4277, %v4285
        %v4458 = vcombine.high %v4277, %v4285
        %v4460 = vunpack.c.l.s4 1983009808
        %v4461 = vunpack.c.0.s8 %v4460
        %v4462 = vlaneseq
        %v4463 = vshrl.u32 %v4462, 7
        %v4464 = vsub.s32 %v4461, %v4463
        %v4465 = vrot.slane %v4457, %v4464
        %v4467 = vunpack.c.l.s4 1983009808
        %v4468 = vunpack.c.0.s8 %v4467
        %v4469 = vlaneseq
        %v4470 = vshrl.u32 %v4469, 7
        %v4471 = vsub.s32 %v4468, %v4470
        %v4472 = vrot.slane %v4458, %v4471
        %v4473 = vcombine.low %v4289, %v4297
        %v4474 = vcombine.high %v4289, %v4297
        %v4476 = vunpack.c.l.s4 1983009808
        %v4477 = vunpack.c.0.s8 %v4476
        %v4478 = vlaneseq
        %v4479 = vshrl.u32 %v4478, 7
        %v4480 = vsub.s32 %v4477, %v4479
        %v4481 = vrot.slane %v4473, %v4480
        %v4483 = vunpack.c.l.s4 1983009808
        %v4484 = vunpack.c.0.s8 %v4483
        %v4485 = vlaneseq
        %v4486 = vshrl.u32 %v4485, 7
        %v4487 = vsub.s32 %v4484, %v4486
        %v4488 = vrot.slane %v4474, %v4487
        %v4489 = vcombine.low %v4293, %v4301
        %v4490 = vcombine.high %v4293, %v4301
        %v4492 = vunpack.c.l.s4 1983009808
        %v4493 = vunpack.c.0.s8 %v4492
        %v4494 = vlaneseq
        %v4495 = vshrl.u32 %v4494, 7
        %v4496 = vsub.s32 %v4493, %v4495
        %v4497 = vrot.slane %v4489, %v4496
        %v4499 = vunpack.c.l.s4 1983009808
        %v4500 = vunpack.c.0.s8 %v4499
        %v4501 = vlaneseq
        %v4502 = vshrl.u32 %v4501, 7
        %v4503 = vsub.s32 %v4500, %v4502
        %v4504 = vrot.slane %v4490, %v4503
        %v4505 = vcombine.low %v4449, %v4465
        %v4506 = vcombine.high %v4449, %v4465
        %v4508 = vunpack.c.l.s4 1934713408
        %v4509 = vunpack.c.0.s8 %v4508
        %v4510 = vlaneseq
        %v4511 = vshrl.u32 %v4510, 7
        %v4512 = vsub.s32 %v4509, %v4511
        %v4513 = vrot.slane %v4505, %v4512
        %v4515 = vunpack.c.l.s4 1934713408
        %v4516 = vunpack.c.0.s8 %v4515
        %v4517 = vlaneseq
        %v4518 = vshrl.u32 %v4517, 7
        %v4519 = vsub.s32 %v4516, %v4518
        %v4520 = vrot.slane %v4506, %v4519
        %v4521 = vcombine.low %v4456, %v4472
        %v4522 = vcombine.high %v4456, %v4472
        %v4524 = vunpack.c.l.s4 1934713408
        %v4525 = vunpack.c.0.s8 %v4524
        %v4526 = vlaneseq
        %v4527 = vshrl.u32 %v4526, 7
        %v4528 = vsub.s32 %v4525, %v4527
        %v4529 = vrot.slane %v4521, %v4528
        %v4531 = vunpack.c.l.s4 1934713408
        %v4532 = vunpack.c.0.s8 %v4531
        %v4533 = vlaneseq
        %v4534 = vshrl.u32 %v4533, 7
        %v4535 = vsub.s32 %v4532, %v4534
        %v4536 = vrot.slane %v4522, %v4535
        %v4537 = vcombine.low %v4481, %v4497
        %v4538 = vcombine.high %v4481, %v4497
        %v4540 = vunpack.c.l.s4 1934713408
        %v4541 = vunpack.c.0.s8 %v4540
        %v4542 = vlaneseq
        %v4543 = vshrl.u32 %v4542, 7
        %v4544 = vsub.s32 %v4541, %v4543
        %v4545 = vrot.slane %v4537, %v4544
        %v4547 = vunpack.c.l.s4 1934713408
        %v4548 = vunpack.c.0.s8 %v4547
        %v4549 = vlaneseq
        %v4550 = vshrl.u32 %v4549, 7
        %v4551 = vsub.s32 %v4548, %v4550
        %v4552 = vrot.slane %v4538, %v4551
        %v4553 = vcombine.low %v4488, %v4504
        %v4554 = vcombine.high %v4488, %v4504
        %v4556 = vunpack.c.l.s4 1934713408
        %v4557 = vunpack.c.0.s8 %v4556
        %v4558 = vlaneseq
        %v4559 = vshrl.u32 %v4558, 7
        %v4560 = vsub.s32 %v4557, %v4559
        %v4561 = vrot.slane %v4553, %v4560
        %v4563 = vunpack.c.l.s4 1934713408
        %v4564 = vunpack.c.0.s8 %v4563
        %v4565 = vlaneseq
        %v4566 = vshrl.u32 %v4565, 7
        %v4567 = vsub.s32 %v4564, %v4566
        %v4568 = vrot.slane %v4554, %v4567
        %v4569 = vcombine.low %v4513, %v4545
        %v4570 = vcombine.high %v4513, %v4545
        %v4571 = vcombine.low %v4520, %v4552
        %v4572 = vcombine.high %v4520, %v4552
        %v4573 = vcombine.low %v4529, %v4561
        %v4574 = vcombine.high %v4529, %v4561
        %v4575 = vcombine.low %v4536, %v4568
        %v4576 = vcombine.high %v4536, %v4568
        %v4577 = vcombine.low %v4242, %v4250
        %v4578 = vcombine.high %v4242, %v4250
        %v4580 = vunpack.c.l.s4 1983009808
        %v4581 = vunpack.c.0.s8 %v4580
        %v4582 = vlaneseq
        %v4583 = vshrl.u32 %v4582, 7
        %v4584 = vsub.s32 %v4581, %v4583
        %v4585 = vrot.slane %v4577, %v4584
        %v4587 = vunpack.c.l.s4 1983009808
        %v4588 = vunpack.c.0.s8 %v4587
        %v4589 = vlaneseq
        %v4590 = vshrl.u32 %v4589, 7
        %v4591 = vsub.s32 %v4588, %v4590
        %v4592 = vrot.slane %v4578, %v4591
        %v4593 = vcombine.low %v4246, %v4254
        %v4594 = vcombine.high %v4246, %v4254
        %v4596 = vunpack.c.l.s4 1983009808
        %v4597 = vunpack.c.0.s8 %v4596
        %v4598 = vlaneseq
        %v4599 = vshrl.u32 %v4598, 7
        %v4600 = vsub.s32 %v4597, %v4599
        %v4601 = vrot.slane %v4593, %v4600
        %v4603 = vunpack.c.l.s4 1983009808
        %v4604 = vunpack.c.0.s8 %v4603
        %v4605 = vlaneseq
        %v4606 = vshrl.u32 %v4605, 7
        %v4607 = vsub.s32 %v4604, %v4606
        %v4608 = vrot.slane %v4594, %v4607
        %v4609 = vcombine.low %v4258, %v4266
        %v4610 = vcombine.high %v4258, %v4266
        %v4612 = vunpack.c.l.s4 1983009808
        %v4613 = vunpack.c.0.s8 %v4612
        %v4614 = vlaneseq
        %v4615 = vshrl.u32 %v4614, 7
        %v4616 = vsub.s32 %v4613, %v4615
        %v4617 = vrot.slane %v4609, %v4616
        %v4619 = vunpack.c.l.s4 1983009808
        %v4620 = vunpack.c.0.s8 %v4619
        %v4621 = vlaneseq
        %v4622 = vshrl.u32 %v4621, 7
        %v4623 = vsub.s32 %v4620, %v4622
        %v4624 = vrot.slane %v4610, %v4623
        %v4625 = vcombine.low %v4262, %v4270
        %v4626 = vcombine.high %v4262, %v4270
        %v4628 = vunpack.c.l.s4 1983009808
        %v4629 = vunpack.c.0.s8 %v4628
        %v4630 = vlaneseq
        %v4631 = vshrl.u32 %v4630, 7
        %v4632 = vsub.s32 %v4629, %v4631
        %v4633 = vrot.slane %v4625, %v4632
        %v4635 = vunpack.c.l.s4 1983009808
        %v4636 = vunpack.c.0.s8 %v4635
        %v4637 = vlaneseq
        %v4638 = vshrl.u32 %v4637, 7
        %v4639 = vsub.s32 %v4636, %v4638
        %v4640 = vrot.slane %v4626, %v4639
        %v4641 = vcombine.low %v4585, %v4601
        %v4642 = vcombine.high %v4585, %v4601
        %v4644 = vunpack.c.l.s4 1934713408
        %v4645 = vunpack.c.0.s8 %v4644
        %v4646 = vlaneseq
        %v4647 = vshrl.u32 %v4646, 7
        %v4648 = vsub.s32 %v4645, %v4647
        %v4649 = vrot.slane %v4641, %v4648
        %v4651 = vunpack.c.l.s4 1934713408
        %v4652 = vunpack.c.0.s8 %v4651
        %v4653 = vlaneseq
        %v4654 = vshrl.u32 %v4653, 7
        %v4655 = vsub.s32 %v4652, %v4654
        %v4656 = vrot.slane %v4642, %v4655
        %v4657 = vcombine.low %v4592, %v4608
        %v4658 = vcombine.high %v4592, %v4608
        %v4660 = vunpack.c.l.s4 1934713408
        %v4661 = vunpack.c.0.s8 %v4660
        %v4662 = vlaneseq
        %v4663 = vshrl.u32 %v4662, 7
        %v4664 = vsub.s32 %v4661, %v4663
        %v4665 = vrot.slane %v4657, %v4664
        %v4667 = vunpack.c.l.s4 1934713408
        %v4668 = vunpack.c.0.s8 %v4667
        %v4669 = vlaneseq
        %v4670 = vshrl.u32 %v4669, 7
        %v4671 = vsub.s32 %v4668, %v4670
        %v4672 = vrot.slane %v4658, %v4671
        %v4673 = vcombine.low %v4617, %v4633
        %v4674 = vcombine.high %v4617, %v4633
        %v4676 = vunpack.c.l.s4 1934713408
        %v4677 = vunpack.c.0.s8 %v4676
        %v4678 = vlaneseq
        %v4679 = vshrl.u32 %v4678, 7
        %v4680 = vsub.s32 %v4677, %v4679
        %v4681 = vrot.slane %v4673, %v4680
        %v4683 = vunpack.c.l.s4 1934713408
        %v4684 = vunpack.c.0.s8 %v4683
        %v4685 = vlaneseq
        %v4686 = vshrl.u32 %v4685, 7
        %v4687 = vsub.s32 %v4684, %v4686
        %v4688 = vrot.slane %v4674, %v4687
        %v4689 = vcombine.low %v4624, %v4640
        %v4690 = vcombine.high %v4624, %v4640
        %v4692 = vunpack.c.l.s4 1934713408
        %v4693 = vunpack.c.0.s8 %v4692
        %v4694 = vlaneseq
        %v4695 = vshrl.u32 %v4694, 7
        %v4696 = vsub.s32 %v4693, %v4695
        %v4697 = vrot.slane %v4689, %v4696
        %v4699 = vunpack.c.l.s4 1934713408
        %v4700 = vunpack.c.0.s8 %v4699
        %v4701 = vlaneseq
        %v4702 = vshrl.u32 %v4701, 7
        %v4703 = vsub.s32 %v4700, %v4702
        %v4704 = vrot.slane %v4690, %v4703
        %v4705 = vcombine.low %v4649, %v4681
        %v4706 = vcombine.high %v4649, %v4681
        %v4707 = vcombine.low %v4656, %v4688
        %v4708 = vcombine.high %v4656, %v4688
        %v4709 = vcombine.low %v4665, %v4697
        %v4710 = vcombine.high %v4665, %v4697
        %v4711 = vcombine.low %v4672, %v4704
        %v4712 = vcombine.high %v4672, %v4704
        %v4713 = vcombine.low %v4274, %v4282
        %v4714 = vcombine.high %v4274, %v4282
        %v4716 = vunpack.c.l.s4 1983009808
        %v4717 = vunpack.c.0.s8 %v4716
        %v4718 = vlaneseq
        %v4719 = vshrl.u32 %v4718, 7
        %v4720 = vsub.s32 %v4717, %v4719
        %v4721 = vrot.slane %v4713, %v4720
        %v4723 = vunpack.c.l.s4 1983009808
        %v4724 = vunpack.c.0.s8 %v4723
        %v4725 = vlaneseq
        %v4726 = vshrl.u32 %v4725, 7
        %v4727 = vsub.s32 %v4724, %v4726
        %v4728 = vrot.slane %v4714, %v4727
        %v4729 = vcombine.low %v4278, %v4286
        %v4730 = vcombine.high %v4278, %v4286
        %v4732 = vunpack.c.l.s4 1983009808
        %v4733 = vunpack.c.0.s8 %v4732
        %v4734 = vlaneseq
        %v4735 = vshrl.u32 %v4734, 7
        %v4736 = vsub.s32 %v4733, %v4735
        %v4737 = vrot.slane %v4729, %v4736
        %v4739 = vunpack.c.l.s4 1983009808
        %v4740 = vunpack.c.0.s8 %v4739
        %v4741 = vlaneseq
        %v4742 = vshrl.u32 %v4741, 7
        %v4743 = vsub.s32 %v4740, %v4742
        %v4744 = vrot.slane %v4730, %v4743
        %v4745 = vcombine.low %v4290, %v4298
        %v4746 = vcombine.high %v4290, %v4298
        %v4748 = vunpack.c.l.s4 1983009808
        %v4749 = vunpack.c.0.s8 %v4748
        %v4750 = vlaneseq
        %v4751 = vshrl.u32 %v4750, 7
        %v4752 = vsub.s32 %v4749, %v4751
        %v4753 = vrot.slane %v4745, %v4752
        %v4755 = vunpack.c.l.s4 1983009808
        %v4756 = vunpack.c.0.s8 %v4755
        %v4757 = vlaneseq
        %v4758 = vshrl.u32 %v4757, 7
        %v4759 = vsub.s32 %v4756, %v4758
        %v4760 = vrot.slane %v4746, %v4759
        %v4761 = vcombine.low %v4294, %v4302
        %v4762 = vcombine.high %v4294, %v4302
        %v4764 = vunpack.c.l.s4 1983009808
        %v4765 = vunpack.c.0.s8 %v4764
        %v4766 = vlaneseq
        %v4767 = vshrl.u32 %v4766, 7
        %v4768 = vsub.s32 %v4765, %v4767
        %v4769 = vrot.slane %v4761, %v4768
        %v4771 = vunpack.c.l.s4 1983009808
        %v4772 = vunpack.c.0.s8 %v4771
        %v4773 = vlaneseq
        %v4774 = vshrl.u32 %v4773, 7
        %v4775 = vsub.s32 %v4772, %v4774
        %v4776 = vrot.slane %v4762, %v4775
        %v4777 = vcombine.low %v4721, %v4737
        %v4778 = vcombine.high %v4721, %v4737
        %v4780 = vunpack.c.l.s4 1934713408
        %v4781 = vunpack.c.0.s8 %v4780
        %v4782 = vlaneseq
        %v4783 = vshrl.u32 %v4782, 7
        %v4784 = vsub.s32 %v4781, %v4783
        %v4785 = vrot.slane %v4777, %v4784
        %v4787 = vunpack.c.l.s4 1934713408
        %v4788 = vunpack.c.0.s8 %v4787
        %v4789 = vlaneseq
        %v4790 = vshrl.u32 %v4789, 7
        %v4791 = vsub.s32 %v4788, %v4790
        %v4792 = vrot.slane %v4778, %v4791
        %v4793 = vcombine.low %v4728, %v4744
        %v4794 = vcombine.high %v4728, %v4744
        %v4796 = vunpack.c.l.s4 1934713408
        %v4797 = vunpack.c.0.s8 %v4796
        %v4798 = vlaneseq
        %v4799 = vshrl.u32 %v4798, 7
        %v4800 = vsub.s32 %v4797, %v4799
        %v4801 = vrot.slane %v4793, %v4800
        %v4803 = vunpack.c.l.s4 1934713408
        %v4804 = vunpack.c.0.s8 %v4803
        %v4805 = vlaneseq
        %v4806 = vshrl.u32 %v4805, 7
        %v4807 = vsub.s32 %v4804, %v4806
        %v4808 = vrot.slane %v4794, %v4807
        %v4809 = vcombine.low %v4753, %v4769
        %v4810 = vcombine.high %v4753, %v4769
        %v4812 = vunpack.c.l.s4 1934713408
        %v4813 = vunpack.c.0.s8 %v4812
        %v4814 = vlaneseq
        %v4815 = vshrl.u32 %v4814, 7
        %v4816 = vsub.s32 %v4813, %v4815
        %v4817 = vrot.slane %v4809, %v4816
        %v4819 = vunpack.c.l.s4 1934713408
        %v4820 = vunpack.c.0.s8 %v4819
        %v4821 = vlaneseq
        %v4822 = vshrl.u32 %v4821, 7
        %v4823 = vsub.s32 %v4820, %v4822
        %v4824 = vrot.slane %v4810, %v4823
        %v4825 = vcombine.low %v4760, %v4776
        %v4826 = vcombine.high %v4760, %v4776
        %v4828 = vunpack.c.l.s4 1934713408
        %v4829 = vunpack.c.0.s8 %v4828
        %v4830 = vlaneseq
        %v4831 = vshrl.u32 %v4830, 7
        %v4832 = vsub.s32 %v4829, %v4831
        %v4833 = vrot.slane %v4825, %v4832
        %v4835 = vunpack.c.l.s4 1934713408
        %v4836 = vunpack.c.0.s8 %v4835
        %v4837 = vlaneseq
        %v4838 = vshrl.u32 %v4837, 7
        %v4839 = vsub.s32 %v4836, %v4838
        %v4840 = vrot.slane %v4826, %v4839
        %v4841 = vcombine.low %v4785, %v4817
        %v4842 = vcombine.high %v4785, %v4817
        %v4843 = vcombine.low %v4792, %v4824
        %v4844 = vcombine.high %v4792, %v4824
        %v4845 = vcombine.low %v4801, %v4833
        %v4846 = vcombine.high %v4801, %v4833
        %v4847 = vcombine.low %v4808, %v4840
        %v4848 = vcombine.high %v4808, %v4840
        %v4849 = vcombine.low %v4243, %v4251
        %v4850 = vcombine.high %v4243, %v4251
        %v4852 = vunpack.c.l.s4 1983009808
        %v4853 = vunpack.c.0.s8 %v4852
        %v4854 = vlaneseq
        %v4855 = vshrl.u32 %v4854, 7
        %v4856 = vsub.s32 %v4853, %v4855
        %v4857 = vrot.slane %v4849, %v4856
        %v4859 = vunpack.c.l.s4 1983009808
        %v4860 = vunpack.c.0.s8 %v4859
        %v4861 = vlaneseq
        %v4862 = vshrl.u32 %v4861, 7
        %v4863 = vsub.s32 %v4860, %v4862
        %v4864 = vrot.slane %v4850, %v4863
        %v4865 = vcombine.low %v4247, %v4255
        %v4866 = vcombine.high %v4247, %v4255
        %v4868 = vunpack.c.l.s4 1983009808
        %v4869 = vunpack.c.0.s8 %v4868
        %v4870 = vlaneseq
        %v4871 = vshrl.u32 %v4870, 7
        %v4872 = vsub.s32 %v4869, %v4871
        %v4873 = vrot.slane %v4865, %v4872
        %v4875 = vunpack.c.l.s4 1983009808
        %v4876 = vunpack.c.0.s8 %v4875
        %v4877 = vlaneseq
        %v4878 = vshrl.u32 %v4877, 7
        %v4879 = vsub.s32 %v4876, %v4878
        %v4880 = vrot.slane %v4866, %v4879
        %v4881 = vcombine.low %v4259, %v4267
        %v4882 = vcombine.high %v4259, %v4267
        %v4884 = vunpack.c.l.s4 1983009808
        %v4885 = vunpack.c.0.s8 %v4884
        %v4886 = vlaneseq
        %v4887 = vshrl.u32 %v4886, 7
        %v4888 = vsub.s32 %v4885, %v4887
        %v4889 = vrot.slane %v4881, %v4888
        %v4891 = vunpack.c.l.s4 1983009808
        %v4892 = vunpack.c.0.s8 %v4891
        %v4893 = vlaneseq
        %v4894 = vshrl.u32 %v4893, 7
        %v4895 = vsub.s32 %v4892, %v4894
        %v4896 = vrot.slane %v4882, %v4895
        %v4897 = vcombine.low %v4263, %v4271
        %v4898 = vcombine.high %v4263, %v4271
        %v4900 = vunpack.c.l.s4 1983009808
        %v4901 = vunpack.c.0.s8 %v4900
        %v4902 = vlaneseq
        %v4903 = vshrl.u32 %v4902, 7
        %v4904 = vsub.s32 %v4901, %v4903
        %v4905 = vrot.slane %v4897, %v4904
        %v4907 = vunpack.c.l.s4 1983009808
        %v4908 = vunpack.c.0.s8 %v4907
        %v4909 = vlaneseq
        %v4910 = vshrl.u32 %v4909, 7
        %v4911 = vsub.s32 %v4908, %v4910
        %v4912 = vrot.slane %v4898, %v4911
        %v4913 = vcombine.low %v4857, %v4873
        %v4914 = vcombine.high %v4857, %v4873
        %v4916 = vunpack.c.l.s4 1934713408
        %v4917 = vunpack.c.0.s8 %v4916
        %v4918 = vlaneseq
        %v4919 = vshrl.u32 %v4918, 7
        %v4920 = vsub.s32 %v4917, %v4919
        %v4921 = vrot.slane %v4913, %v4920
        %v4923 = vunpack.c.l.s4 1934713408
        %v4924 = vunpack.c.0.s8 %v4923
        %v4925 = vlaneseq
        %v4926 = vshrl.u32 %v4925, 7
        %v4927 = vsub.s32 %v4924, %v4926
        %v4928 = vrot.slane %v4914, %v4927
        %v4929 = vcombine.low %v4864, %v4880
        %v4930 = vcombine.high %v4864, %v4880
        %v4932 = vunpack.c.l.s4 1934713408
        %v4933 = vunpack.c.0.s8 %v4932
        %v4934 = vlaneseq
        %v4935 = vshrl.u32 %v4934, 7
        %v4936 = vsub.s32 %v4933, %v4935
        %v4937 = vrot.slane %v4929, %v4936
        %v4939 = vunpack.c.l.s4 1934713408
        %v4940 = vunpack.c.0.s8 %v4939
        %v4941 = vlaneseq
        %v4942 = vshrl.u32 %v4941, 7
        %v4943 = vsub.s32 %v4940, %v4942
        %v4944 = vrot.slane %v4930, %v4943
        %v4945 = vcombine.low %v4889, %v4905
        %v4946 = vcombine.high %v4889, %v4905
        %v4948 = vunpack.c.l.s4 1934713408
        %v4949 = vunpack.c.0.s8 %v4948
        %v4950 = vlaneseq
        %v4951 = vshrl.u32 %v4950, 7
        %v4952 = vsub.s32 %v4949, %v4951
        %v4953 = vrot.slane %v4945, %v4952
        %v4955 = vunpack.c.l.s4 1934713408
        %v4956 = vunpack.c.0.s8 %v4955
        %v4957 = vlaneseq
        %v4958 = vshrl.u32 %v4957, 7
        %v4959 = vsub.s32 %v4956, %v4958
        %v4960 = vrot.slane %v4946, %v4959
        %v4961 = vcombine.low %v4896, %v4912
        %v4962 = vcombine.high %v4896, %v4912
        %v4964 = vunpack.c.l.s4 1934713408
        %v4965 = vunpack.c.0.s8 %v4964
        %v4966 = vlaneseq
        %v4967 = vshrl.u32 %v4966, 7
        %v4968 = vsub.s32 %v4965, %v4967
        %v4969 = vrot.slane %v4961, %v4968
        %v4971 = vunpack.c.l.s4 1934713408
        %v4972 = vunpack.c.0.s8 %v4971
        %v4973 = vlaneseq
        %v4974 = vshrl.u32 %v4973, 7
        %v4975 = vsub.s32 %v4972, %v4974
        %v4976 = vrot.slane %v4962, %v4975
        %v4977 = vcombine.low %v4921, %v4953
        %v4978 = vcombine.high %v4921, %v4953
        %v4979 = vcombine.low %v4928, %v4960
        %v4980 = vcombine.high %v4928, %v4960
        %v4981 = vcombine.low %v4937, %v4969
        %v4982 = vcombine.high %v4937, %v4969
        %v4983 = vcombine.low %v4944, %v4976
        %v4984 = vcombine.high %v4944, %v4976
        %v4985 = vcombine.low %v4275, %v4283
        %v4986 = vcombine.high %v4275, %v4283
        %v4988 = vunpack.c.l.s4 1983009808
        %v4989 = vunpack.c.0.s8 %v4988
        %v4990 = vlaneseq
        %v4991 = vshrl.u32 %v4990, 7
        %v4992 = vsub.s32 %v4989, %v4991
        %v4993 = vrot.slane %v4985, %v4992
        %v4995 = vunpack.c.l.s4 1983009808
        %v4996 = vunpack.c.0.s8 %v4995
        %v4997 = vlaneseq
        %v4998 = vshrl.u32 %v4997, 7
        %v4999 = vsub.s32 %v4996, %v4998
        %v5000 = vrot.slane %v4986, %v4999
        %v5001 = vcombine.low %v4279, %v4287
        %v5002 = vcombine.high %v4279, %v4287
        %v5004 = vunpack.c.l.s4 1983009808
        %v5005 = vunpack.c.0.s8 %v5004
        %v5006 = vlaneseq
        %v5007 = vshrl.u32 %v5006, 7
        %v5008 = vsub.s32 %v5005, %v5007
        %v5009 = vrot.slane %v5001, %v5008
        %v5011 = vunpack.c.l.s4 1983009808
        %v5012 = vunpack.c.0.s8 %v5011
        %v5013 = vlaneseq
        %v5014 = vshrl.u32 %v5013, 7
        %v5015 = vsub.s32 %v5012, %v5014
        %v5016 = vrot.slane %v5002, %v5015
        %v5017 = vcombine.low %v4291, %v4299
        %v5018 = vcombine.high %v4291, %v4299
        %v5020 = vunpack.c.l.s4 1983009808
        %v5021 = vunpack.c.0.s8 %v5020
        %v5022 = vlaneseq
        %v5023 = vshrl.u32 %v5022, 7
        %v5024 = vsub.s32 %v5021, %v5023
        %v5025 = vrot.slane %v5017, %v5024
        %v5027 = vunpack.c.l.s4 1983009808
        %v5028 = vunpack.c.0.s8 %v5027
        %v5029 = vlaneseq
        %v5030 = vshrl.u32 %v5029, 7
        %v5031 = vsub.s32 %v5028, %v5030
        %v5032 = vrot.slane %v5018, %v5031
        %v5033 = vcombine.low %v4295, %v4303
        %v5034 = vcombine.high %v4295, %v4303
        %v5036 = vunpack.c.l.s4 1983009808
        %v5037 = vunpack.c.0.s8 %v5036
        %v5038 = vlaneseq
        %v5039 = vshrl.u32 %v5038, 7
        %v5040 = vsub.s32 %v5037, %v5039
        %v5041 = vrot.slane %v5033, %v5040
        %v5043 = vunpack.c.l.s4 1983009808
        %v5044 = vunpack.c.0.s8 %v5043
        %v5045 = vlaneseq
        %v5046 = vshrl.u32 %v5045, 7
        %v5047 = vsub.s32 %v5044, %v5046
        %v5048 = vrot.slane %v5034, %v5047
        %v5049 = vcombine.low %v4993, %v5009
        %v5050 = vcombine.high %v4993, %v5009
        %v5052 = vunpack.c.l.s4 1934713408
        %v5053 = vunpack.c.0.s8 %v5052
        %v5054 = vlaneseq
        %v5055 = vshrl.u32 %v5054, 7
        %v5056 = vsub.s32 %v5053, %v5055
        %v5057 = vrot.slane %v5049, %v5056
        %v5059 = vunpack.c.l.s4 1934713408
        %v5060 = vunpack.c.0.s8 %v5059
        %v5061 = vlaneseq
        %v5062 = vshrl.u32 %v5061, 7
        %v5063 = vsub.s32 %v5060, %v5062
        %v5064 = vrot.slane %v5050, %v5063
        %v5065 = vcombine.low %v5000, %v5016
        %v5066 = vcombine.high %v5000, %v5016
        %v5068 = vunpack.c.l.s4 1934713408
        %v5069 = vunpack.c.0.s8 %v5068
        %v5070 = vlaneseq
        %v5071 = vshrl.u32 %v5070, 7
        %v5072 = vsub.s32 %v5069, %v5071
        %v5073 = vrot.slane %v5065, %v5072
        %v5075 = vunpack.c.l.s4 1934713408
        %v5076 = vunpack.c.0.s8 %v5075
        %v5077 = vlaneseq
        %v5078 = vshrl.u32 %v5077, 7
        %v5079 = vsub.s32 %v5076, %v5078
        %v5080 = vrot.slane %v5066, %v5079
        %v5081 = vcombine.low %v5025, %v5041
        %v5082 = vcombine.high %v5025, %v5041
        %v5084 = vunpack.c.l.s4 1934713408
        %v5085 = vunpack.c.0.s8 %v5084
        %v5086 = vlaneseq
        %v5087 = vshrl.u32 %v5086, 7
        %v5088 = vsub.s32 %v5085, %v5087
        %v5089 = vrot.slane %v5081, %v5088
        %v5091 = vunpack.c.l.s4 1934713408
        %v5092 = vunpack.c.0.s8 %v5091
        %v5093 = vlaneseq
        %v5094 = vshrl.u32 %v5093, 7
        %v5095 = vsub.s32 %v5092, %v5094
        %v5096 = vrot.slane %v5082, %v5095
        %v5097 = vcombine.low %v5032, %v5048
        %v5098 = vcombine.high %v5032, %v5048
        %v5100 = vunpack.c.l.s4 1934713408
        %v5101 = vunpack.c.0.s8 %v5100
        %v5102 = vlaneseq
        %v5103 = vshrl.u32 %v5102, 7
        %v5104 = vsub.s32 %v5101, %v5103
        %v5105 = vrot.slane %v5097, %v5104
        %v5107 = vunpack.c.l.s4 1934713408
        %v5108 = vunpack.c.0.s8 %v5107
        %v5109 = vlaneseq
        %v5110 = vshrl.u32 %v5109, 7
        %v5111 = vsub.s32 %v5108, %v5110
        %v5112 = vrot.slane %v5098, %v5111
        %v5113 = vcombine.low %v5057, %v5089
        %v5114 = vcombine.high %v5057, %v5089
        %v5115 = vcombine.low %v5064, %v5096
        %v5116 = vcombine.high %v5064, %v5096
        %v5117 = vcombine.low %v5073, %v5105
        %v5118 = vcombine.high %v5073, %v5105
        %v5119 = vcombine.low %v5080, %v5112
        %v5120 = vcombine.high %v5080, %v5112
        %v5121 = vcombine.low %v4244, %v4252
        %v5122 = vcombine.high %v4244, %v4252
        %v5124 = vunpack.c.l.s4 1983009808
        %v5125 = vunpack.c.0.s8 %v5124
        %v5126 = vlaneseq
        %v5127 = vshrl.u32 %v5126, 7
        %v5128 = vsub.s32 %v5125, %v5127
        %v5129 = vrot.slane %v5121, %v5128
        %v5131 = vunpack.c.l.s4 1983009808
        %v5132 = vunpack.c.0.s8 %v5131
        %v5133 = vlaneseq
        %v5134 = vshrl.u32 %v5133, 7
        %v5135 = vsub.s32 %v5132, %v5134
        %v5136 = vrot.slane %v5122, %v5135
        %v5137 = vcombine.low %v4248, %v4256
        %v5138 = vcombine.high %v4248, %v4256
        %v5140 = vunpack.c.l.s4 1983009808
        %v5141 = vunpack.c.0.s8 %v5140
        %v5142 = vlaneseq
        %v5143 = vshrl.u32 %v5142, 7
        %v5144 = vsub.s32 %v5141, %v5143
        %v5145 = vrot.slane %v5137, %v5144
        %v5147 = vunpack.c.l.s4 1983009808
        %v5148 = vunpack.c.0.s8 %v5147
        %v5149 = vlaneseq
        %v5150 = vshrl.u32 %v5149, 7
        %v5151 = vsub.s32 %v5148, %v5150
        %v5152 = vrot.slane %v5138, %v5151
        %v5153 = vcombine.low %v4260, %v4268
        %v5154 = vcombine.high %v4260, %v4268
        %v5156 = vunpack.c.l.s4 1983009808
        %v5157 = vunpack.c.0.s8 %v5156
        %v5158 = vlaneseq
        %v5159 = vshrl.u32 %v5158, 7
        %v5160 = vsub.s32 %v5157, %v5159
        %v5161 = vrot.slane %v5153, %v5160
        %v5163 = vunpack.c.l.s4 1983009808
        %v5164 = vunpack.c.0.s8 %v5163
        %v5165 = vlaneseq
        %v5166 = vshrl.u32 %v5165, 7
        %v5167 = vsub.s32 %v5164, %v5166
        %v5168 = vrot.slane %v5154, %v5167
        %v5169 = vcombine.low %v4264, %v4272
        %v5170 = vcombine.high %v4264, %v4272
        %v5172 = vunpack.c.l.s4 1983009808
        %v5173 = vunpack.c.0.s8 %v5172
        %v5174 = vlaneseq
        %v5175 = vshrl.u32 %v5174, 7
        %v5176 = vsub.s32 %v5173, %v5175
        %v5177 = vrot.slane %v5169, %v5176
        %v5179 = vunpack.c.l.s4 1983009808
        %v5180 = vunpack.c.0.s8 %v5179
        %v5181 = vlaneseq
        %v5182 = vshrl.u32 %v5181, 7
        %v5183 = vsub.s32 %v5180, %v5182
        %v5184 = vrot.slane %v5170, %v5183
        %v5185 = vcombine.low %v5129, %v5145
        %v5186 = vcombine.high %v5129, %v5145
        %v5188 = vunpack.c.l.s4 1934713408
        %v5189 = vunpack.c.0.s8 %v5188
        %v5190 = vlaneseq
        %v5191 = vshrl.u32 %v5190, 7
        %v5192 = vsub.s32 %v5189, %v5191
        %v5193 = vrot.slane %v5185, %v5192
        %v5195 = vunpack.c.l.s4 1934713408
        %v5196 = vunpack.c.0.s8 %v5195
        %v5197 = vlaneseq
        %v5198 = vshrl.u32 %v5197, 7
        %v5199 = vsub.s32 %v5196, %v5198
        %v5200 = vrot.slane %v5186, %v5199
        %v5201 = vcombine.low %v5136, %v5152
        %v5202 = vcombine.high %v5136, %v5152
        %v5204 = vunpack.c.l.s4 1934713408
        %v5205 = vunpack.c.0.s8 %v5204
        %v5206 = vlaneseq
        %v5207 = vshrl.u32 %v5206, 7
        %v5208 = vsub.s32 %v5205, %v5207
        %v5209 = vrot.slane %v5201, %v5208
        %v5211 = vunpack.c.l.s4 1934713408
        %v5212 = vunpack.c.0.s8 %v5211
        %v5213 = vlaneseq
        %v5214 = vshrl.u32 %v5213, 7
        %v5215 = vsub.s32 %v5212, %v5214
        %v5216 = vrot.slane %v5202, %v5215
        %v5217 = vcombine.low %v5161, %v5177
        %v5218 = vcombine.high %v5161, %v5177
        %v5220 = vunpack.c.l.s4 1934713408
        %v5221 = vunpack.c.0.s8 %v5220
        %v5222 = vlaneseq
        %v5223 = vshrl.u32 %v5222, 7
        %v5224 = vsub.s32 %v5221, %v5223
        %v5225 = vrot.slane %v5217, %v5224
        %v5227 = vunpack.c.l.s4 1934713408
        %v5228 = vunpack.c.0.s8 %v5227
        %v5229 = vlaneseq
        %v5230 = vshrl.u32 %v5229, 7
        %v5231 = vsub.s32 %v5228, %v5230
        %v5232 = vrot.slane %v5218, %v5231
        %v5233 = vcombine.low %v5168, %v5184
        %v5234 = vcombine.high %v5168, %v5184
        %v5236 = vunpack.c.l.s4 1934713408
        %v5237 = vunpack.c.0.s8 %v5236
        %v5238 = vlaneseq
        %v5239 = vshrl.u32 %v5238, 7
        %v5240 = vsub.s32 %v5237, %v5239
        %v5241 = vrot.slane %v5233, %v5240
        %v5243 = vunpack.c.l.s4 1934713408
        %v5244 = vunpack.c.0.s8 %v5243
        %v5245 = vlaneseq
        %v5246 = vshrl.u32 %v5245, 7
        %v5247 = vsub.s32 %v5244, %v5246
        %v5248 = vrot.slane %v5234, %v5247
        %v5249 = vcombine.low %v5193, %v5225
        %v5250 = vcombine.high %v5193, %v5225
        %v5251 = vcombine.low %v5200, %v5232
        %v5252 = vcombine.high %v5200, %v5232
        %v5253 = vcombine.low %v5209, %v5241
        %v5254 = vcombine.high %v5209, %v5241
        %v5255 = vcombine.low %v5216, %v5248
        %v5256 = vcombine.high %v5216, %v5248
        %v5257 = vcombine.low %v4276, %v4284
        %v5258 = vcombine.high %v4276, %v4284
        %v5260 = vunpack.c.l.s4 1983009808
        %v5261 = vunpack.c.0.s8 %v5260
        %v5262 = vlaneseq
        %v5263 = vshrl.u32 %v5262, 7
        %v5264 = vsub.s32 %v5261, %v5263
        %v5265 = vrot.slane %v5257, %v5264
        %v5267 = vunpack.c.l.s4 1983009808
        %v5268 = vunpack.c.0.s8 %v5267
        %v5269 = vlaneseq
        %v5270 = vshrl.u32 %v5269, 7
        %v5271 = vsub.s32 %v5268, %v5270
        %v5272 = vrot.slane %v5258, %v5271
        %v5273 = vcombine.low %v4280, %v4288
        %v5274 = vcombine.high %v4280, %v4288
        %v5276 = vunpack.c.l.s4 1983009808
        %v5277 = vunpack.c.0.s8 %v5276
        %v5278 = vlaneseq
        %v5279 = vshrl.u32 %v5278, 7
        %v5280 = vsub.s32 %v5277, %v5279
        %v5281 = vrot.slane %v5273, %v5280
        %v5283 = vunpack.c.l.s4 1983009808
        %v5284 = vunpack.c.0.s8 %v5283
        %v5285 = vlaneseq
        %v5286 = vshrl.u32 %v5285, 7
        %v5287 = vsub.s32 %v5284, %v5286
        %v5288 = vrot.slane %v5274, %v5287
        %v5289 = vcombine.low %v4292, %v4300
        %v5290 = vcombine.high %v4292, %v4300
        %v5292 = vunpack.c.l.s4 1983009808
        %v5293 = vunpack.c.0.s8 %v5292
        %v5294 = vlaneseq
        %v5295 = vshrl.u32 %v5294, 7
        %v5296 = vsub.s32 %v5293, %v5295
        %v5297 = vrot.slane %v5289, %v5296
        %v5299 = vunpack.c.l.s4 1983009808
        %v5300 = vunpack.c.0.s8 %v5299
        %v5301 = vlaneseq
        %v5302 = vshrl.u32 %v5301, 7
        %v5303 = vsub.s32 %v5300, %v5302
        %v5304 = vrot.slane %v5290, %v5303
        %v5305 = vcombine.low %v4296, %v4304
        %v5306 = vcombine.high %v4296, %v4304
        %v5308 = vunpack.c.l.s4 1983009808
        %v5309 = vunpack.c.0.s8 %v5308
        %v5310 = vlaneseq
        %v5311 = vshrl.u32 %v5310, 7
        %v5312 = vsub.s32 %v5309, %v5311
        %v5313 = vrot.slane %v5305, %v5312
        %v5315 = vunpack.c.l.s4 1983009808
        %v5316 = vunpack.c.0.s8 %v5315
        %v5317 = vlaneseq
        %v5318 = vshrl.u32 %v5317, 7
        %v5319 = vsub.s32 %v5316, %v5318
        %v5320 = vrot.slane %v5306, %v5319
        %v5321 = vcombine.low %v5265, %v5281
        %v5322 = vcombine.high %v5265, %v5281
        %v5324 = vunpack.c.l.s4 1934713408
        %v5325 = vunpack.c.0.s8 %v5324
        %v5326 = vlaneseq
        %v5327 = vshrl.u32 %v5326, 7
        %v5328 = vsub.s32 %v5325, %v5327
        %v5329 = vrot.slane %v5321, %v5328
        %v5331 = vunpack.c.l.s4 1934713408
        %v5332 = vunpack.c.0.s8 %v5331
        %v5333 = vlaneseq
        %v5334 = vshrl.u32 %v5333, 7
        %v5335 = vsub.s32 %v5332, %v5334
        %v5336 = vrot.slane %v5322, %v5335
        %v5337 = vcombine.low %v5272, %v5288
        %v5338 = vcombine.high %v5272, %v5288
        %v5340 = vunpack.c.l.s4 1934713408
        %v5341 = vunpack.c.0.s8 %v5340
        %v5342 = vlaneseq
        %v5343 = vshrl.u32 %v5342, 7
        %v5344 = vsub.s32 %v5341, %v5343
        %v5345 = vrot.slane %v5337, %v5344
        %v5347 = vunpack.c.l.s4 1934713408
        %v5348 = vunpack.c.0.s8 %v5347
        %v5349 = vlaneseq
        %v5350 = vshrl.u32 %v5349, 7
        %v5351 = vsub.s32 %v5348, %v5350
        %v5352 = vrot.slane %v5338, %v5351
        %v5353 = vcombine.low %v5297, %v5313
        %v5354 = vcombine.high %v5297, %v5313
        %v5356 = vunpack.c.l.s4 1934713408
        %v5357 = vunpack.c.0.s8 %v5356
        %v5358 = vlaneseq
        %v5359 = vshrl.u32 %v5358, 7
        %v5360 = vsub.s32 %v5357, %v5359
        %v5361 = vrot.slane %v5353, %v5360
        %v5363 = vunpack.c.l.s4 1934713408
        %v5364 = vunpack.c.0.s8 %v5363
        %v5365 = vlaneseq
        %v5366 = vshrl.u32 %v5365, 7
        %v5367 = vsub.s32 %v5364, %v5366
        %v5368 = vrot.slane %v5354, %v5367
        %v5369 = vcombine.low %v5304, %v5320
        %v5370 = vcombine.high %v5304, %v5320
        %v5372 = vunpack.c.l.s4 1934713408
        %v5373 = vunpack.c.0.s8 %v5372
        %v5374 = vlaneseq
        %v5375 = vshrl.u32 %v5374, 7
        %v5376 = vsub.s32 %v5373, %v5375
        %v5377 = vrot.slane %v5369, %v5376
        %v5379 = vunpack.c.l.s4 1934713408
        %v5380 = vunpack.c.0.s8 %v5379
        %v5381 = vlaneseq
        %v5382 = vshrl.u32 %v5381, 7
        %v5383 = vsub.s32 %v5380, %v5382
        %v5384 = vrot.slane %v5370, %v5383
        %v5385 = vcombine.low %v5329, %v5361
        %v5386 = vcombine.high %v5329, %v5361
        %v5387 = vcombine.low %v5336, %v5368
        %v5388 = vcombine.high %v5336, %v5368
        %v5389 = vcombine.low %v5345, %v5377
        %v5390 = vcombine.high %v5345, %v5377
        %v5391 = vcombine.low %v5352, %v5384
        %v5392 = vcombine.high %v5352, %v5384
        %5395 = vrot.lane.b32.xlu0 %v4434, 16
        %v5396 = vpop.permute.xlu0 %5395
        %5397 = vrot.lane.b32.xlu0 %v4570, 16
        %v5398 = vpop.permute.xlu0 %5397
        %5403 = vrot.lane.b32.xlu0 %v4435, 32
        %v5404 = vpop.permute.xlu0 %5403
        %5405 = vrot.lane.b32.xlu0 %v4571, 32
        %v5406 = vpop.permute.xlu0 %5405
        %5411 = vrot.lane.b32.xlu0 %v4436, 48
        %v5412 = vpop.permute.xlu0 %5411
        %5413 = vrot.lane.b32.xlu0 %v4572, 48
        %v5414 = vpop.permute.xlu0 %5413
        %5419 = vrot.lane.b32.xlu0 %v4437, 64
        %v5420 = vpop.permute.xlu0 %5419
        %5421 = vrot.lane.b32.xlu0 %v4573, 64
        %v5422 = vpop.permute.xlu0 %5421
        %5427 = vrot.lane.b32.xlu0 %v4438, 80
        %v5428 = vpop.permute.xlu0 %5427
        %5429 = vrot.lane.b32.xlu0 %v4574, 80
        %v5430 = vpop.permute.xlu0 %5429
        %5435 = vrot.lane.b32.xlu0 %v4439, 96
        %v5436 = vpop.permute.xlu0 %5435
        %5437 = vrot.lane.b32.xlu0 %v4575, 96
        %v5438 = vpop.permute.xlu0 %5437
        %5443 = vrot.lane.b32.xlu0 %v4440, 112
        %v5444 = vpop.permute.xlu0 %5443
        %5445 = vrot.lane.b32.xlu0 %v4576, 112
        %v5446 = vpop.permute.xlu0 %5445
        %5451 = vrot.lane.b32.xlu0 %v4706, 16
        %v5452 = vpop.permute.xlu0 %5451
        %5453 = vrot.lane.b32.xlu0 %v4842, 16
        %v5454 = vpop.permute.xlu0 %5453
        %5459 = vrot.lane.b32.xlu0 %v4707, 32
        %v5460 = vpop.permute.xlu0 %5459
        %5461 = vrot.lane.b32.xlu0 %v4843, 32
        %v5462 = vpop.permute.xlu0 %5461
        %5467 = vrot.lane.b32.xlu0 %v4708, 48
        %v5468 = vpop.permute.xlu0 %5467
        %5469 = vrot.lane.b32.xlu0 %v4844, 48
        %v5470 = vpop.permute.xlu0 %5469
        %5475 = vrot.lane.b32.xlu0 %v4709, 64
        %v5476 = vpop.permute.xlu0 %5475
        %5477 = vrot.lane.b32.xlu0 %v4845, 64
        %v5478 = vpop.permute.xlu0 %5477
        %5483 = vrot.lane.b32.xlu0 %v4710, 80
        %v5484 = vpop.permute.xlu0 %5483
        %5485 = vrot.lane.b32.xlu0 %v4846, 80
        %v5486 = vpop.permute.xlu0 %5485
        %5491 = vrot.lane.b32.xlu0 %v4711, 96
        %v5492 = vpop.permute.xlu0 %5491
        %5493 = vrot.lane.b32.xlu0 %v4847, 96
        %v5494 = vpop.permute.xlu0 %5493
        %5499 = vrot.lane.b32.xlu0 %v4712, 112
        %v5500 = vpop.permute.xlu0 %5499
        %5501 = vrot.lane.b32.xlu0 %v4848, 112
        %v5502 = vpop.permute.xlu0 %5501
        %5507 = vrot.lane.b32.xlu0 %v4978, 16
        %v5508 = vpop.permute.xlu0 %5507
        %5509 = vrot.lane.b32.xlu0 %v5114, 16
        %v5510 = vpop.permute.xlu0 %5509
        %5515 = vrot.lane.b32.xlu0 %v4979, 32
        %v5516 = vpop.permute.xlu0 %5515
        %5517 = vrot.lane.b32.xlu0 %v5115, 32
        %v5518 = vpop.permute.xlu0 %5517
        %5523 = vrot.lane.b32.xlu0 %v4980, 48
        %v5524 = vpop.permute.xlu0 %5523
        %5525 = vrot.lane.b32.xlu0 %v5116, 48
        %v5526 = vpop.permute.xlu0 %5525
        %5531 = vrot.lane.b32.xlu0 %v4981, 64
        %v5532 = vpop.permute.xlu0 %5531
        %5533 = vrot.lane.b32.xlu0 %v5117, 64
        %v5534 = vpop.permute.xlu0 %5533
        %5539 = vrot.lane.b32.xlu0 %v4982, 80
        %v5540 = vpop.permute.xlu0 %5539
        %5541 = vrot.lane.b32.xlu0 %v5118, 80
        %v5542 = vpop.permute.xlu0 %5541
        %5547 = vrot.lane.b32.xlu0 %v4983, 96
        %v5548 = vpop.permute.xlu0 %5547
        %5549 = vrot.lane.b32.xlu0 %v5119, 96
        %v5550 = vpop.permute.xlu0 %5549
        %5555 = vrot.lane.b32.xlu0 %v4984, 112
        %v5556 = vpop.permute.xlu0 %5555
        %5557 = vrot.lane.b32.xlu0 %v5120, 112
        %v5558 = vpop.permute.xlu0 %5557
        %5563 = vrot.lane.b32.xlu0 %v5250, 16
        %v5564 = vpop.permute.xlu0 %5563
        %5565 = vrot.lane.b32.xlu0 %v5386, 16
        %v5566 = vpop.permute.xlu0 %5565
        %5571 = vrot.lane.b32.xlu0 %v5251, 32
        %v5572 = vpop.permute.xlu0 %5571
        %5573 = vrot.lane.b32.xlu0 %v5387, 32
        %v5574 = vpop.permute.xlu0 %5573
        %5579 = vrot.lane.b32.xlu0 %v5252, 48
        %v5580 = vpop.permute.xlu0 %5579
        %5581 = vrot.lane.b32.xlu0 %v5388, 48
        %v5582 = vpop.permute.xlu0 %5581
        %5587 = vrot.lane.b32.xlu0 %v5253, 64
        %v5588 = vpop.permute.xlu0 %5587
        %5589 = vrot.lane.b32.xlu0 %v5389, 64
        %v5590 = vpop.permute.xlu0 %5589
        %5595 = vrot.lane.b32.xlu0 %v5254, 80
        %v5596 = vpop.permute.xlu0 %5595
        %5597 = vrot.lane.b32.xlu0 %v5390, 80
        %v5598 = vpop.permute.xlu0 %5597
        %5603 = vrot.lane.b32.xlu0 %v5255, 96
        %v5604 = vpop.permute.xlu0 %5603
        %5605 = vrot.lane.b32.xlu0 %v5391, 96
        %v5606 = vpop.permute.xlu0 %5605
        %5611 = vrot.lane.b32.xlu0 %v5256, 112
        %v5612 = vpop.permute.xlu0 %5611
        %5613 = vrot.lane.b32.xlu0 %v5392, 112
        %v5614 = vpop.permute.xlu0 %5613
        %vm5617 = vcmask 130048
        %v5618 = vsel %vm5617, %v4433, %v5396
        %v5619 = vsel %vm5617, %v4569, %v5398
        %vm5620 = vcmask 261120
        %v5621 = vsel %vm5620, %v5618, %v5404
        %v5622 = vsel %vm5620, %v5619, %v5406
        %vm5623 = vcmask 392192
        %v5624 = vsel %vm5623, %v5621, %v5412
        %v5625 = vsel %vm5623, %v5622, %v5414
        %vm5626 = vcmask 523264
        %v5627 = vsel %vm5626, %v5624, %v5420
        %v5628 = vsel %vm5626, %v5625, %v5422
        %vm5629 = vcmask 654336
        %v5630 = vsel %vm5629, %v5627, %v5428
        %v5631 = vsel %vm5629, %v5628, %v5430
        %vm5632 = vcmask 785408
        %v5633 = vsel %vm5632, %v5630, %v5436
        %v5634 = vsel %vm5632, %v5631, %v5438
        %vm5635 = vcmask 916480
        %v5636 = vsel %vm5635, %v5633, %v5444
        %v5637 = vsel %vm5635, %v5634, %v5446
        %v5638 = vsel %vm5617, %v4705, %v5452
        %v5639 = vsel %vm5617, %v4841, %v5454
        %v5640 = vsel %vm5620, %v5638, %v5460
        %v5641 = vsel %vm5620, %v5639, %v5462
        %v5642 = vsel %vm5623, %v5640, %v5468
        %v5643 = vsel %vm5623, %v5641, %v5470
        %v5644 = vsel %vm5626, %v5642, %v5476
        %v5645 = vsel %vm5626, %v5643, %v5478
        %v5646 = vsel %vm5629, %v5644, %v5484
        %v5647 = vsel %vm5629, %v5645, %v5486
        %v5648 = vsel %vm5632, %v5646, %v5492
        %v5649 = vsel %vm5632, %v5647, %v5494
        %v5650 = vsel %vm5635, %v5648, %v5500
        %v5651 = vsel %vm5635, %v5649, %v5502
        %v5652 = vsel %vm5617, %v4977, %v5508
        %v5653 = vsel %vm5617, %v5113, %v5510
        %v5654 = vsel %vm5620, %v5652, %v5516
        %v5655 = vsel %vm5620, %v5653, %v5518
        %v5656 = vsel %vm5623, %v5654, %v5524
        %v5657 = vsel %vm5623, %v5655, %v5526
        %v5658 = vsel %vm5626, %v5656, %v5532
        %v5659 = vsel %vm5626, %v5657, %v5534
        %v5660 = vsel %vm5629, %v5658, %v5540
        %v5661 = vsel %vm5629, %v5659, %v5542
        %v5662 = vsel %vm5632, %v5660, %v5548
        %v5663 = vsel %vm5632, %v5661, %v5550
        %v5664 = vsel %vm5635, %v5662, %v5556
        %v5665 = vsel %vm5635, %v5663, %v5558
        %v5666 = vsel %vm5617, %v5249, %v5564
        %v5667 = vsel %vm5617, %v5385, %v5566
        %v5668 = vsel %vm5620, %v5666, %v5572
        %v5669 = vsel %vm5620, %v5667, %v5574
        %v5670 = vsel %vm5623, %v5668, %v5580
        %v5671 = vsel %vm5623, %v5669, %v5582
        %v5672 = vsel %vm5626, %v5670, %v5588
        %v5673 = vsel %vm5626, %v5671, %v5590
        %v5674 = vsel %vm5629, %v5672, %v5596
        %v5675 = vsel %vm5629, %v5673, %v5598
        %v5676 = vsel %vm5632, %v5674, %v5604
        %v5677 = vsel %vm5632, %v5675, %v5606
        %v5678 = vsel %vm5635, %v5676, %v5612
        %v5679 = vsel %vm5635, %v5677, %v5614
        %v5680 = vpack.c.bf16 %v5637, %v5636
        %v5681 = vpack.c.bf16 %v5651, %v5650
        %v5682 = vpack.c.bf16 %v5665, %v5664
        %v5683 = vpack.c.bf16 %v5679, %v5678
        %v5688 = vunpack.c.l.b16 %v5680
        %v5689 = vunpack.c.l.b16 %v5681
        %v5690 = vunpack.c.l.b16 %v5682
        %v5691 = vunpack.c.l.b16 %v5683
        %v5692 = vunpack.c.h.b16 %v5680
        %v5693 = vunpack.c.h.b16 %v5681
        %v5694 = vunpack.c.h.b16 %v5682
        %v5695 = vunpack.c.h.b16 %v5683
        %v5696 = vpack.c.b16 %v5689, %v5688
        %v5697 = vpack.c.b16 %v5691, %v5690
        %v5698 = vpack.c.b16 %v5693, %v5692
        %v5699 = vpack.c.b16 %v5695, %v5694
        %5704 = vst [vmem:[%s390] sm:$0xff] %v5696
        %5705 = vst [vmem:[%s390 + $0x8] sm:$0xff] %v5697
        %5706 = vst [vmem:[%s390 + $0x10] sm:$0xff] %v5698
        %5707 = vst [vmem:[%s390 + $0x18] sm:$0xff] %v5699
        %s5708 = sand.u32 %s207, 1
        %s5709 = scalar_lea.sflag [#allocation5], %s5708
        %s5710 = sand.u32 %s207, 1
        %s5711 = smul.addr %s5710, 32
        %s5712 = scalar_lea.vmem [#allocation9], %s5711
        // Predicated region
        $region57: #{tpu_custom_call.1} parent=43 // pred_check
          %p5713 = pneg %p217
        $region58: #{tpu_custom_call.1} parent=43 // pred_check_branch
          %5715 = sbr.rel (%p5713) target = $region60
        $region59: #{tpu_custom_call.1} parent=43 // pred_region
          %s5716 = smul.u32 2, %s31
          %s5718 = ssub.s32 512, 512
          %5719 = vsyncadd %s5709, %s5718
          %s5720 = smul.addr %s5716, 4
          %s5721 = smul.addr %s30, 16
          %s5722 = sadd.s32 %s5720, %s5721
          %s5723 = smul.addr %s5722, 64
          %s5724 = scalar_lea.hbm %s6, %s5723
          %s5725 = sshll.u32 %s5712, 4
          %s5726 = int_to_ptr.vmem [resolvable:$true] %s5725
          %5731 = dma.vmem_to_hbm [thread:$0]  %s5726, 512, %s5724, %s5709, 256, 256, 16
        $region60: #{tpu_custom_call.1} parent=43 // pred_fallthru
          _
      $region44: #{tpu_custom_call.1} parent=5 // pred_fallthru
        _
      %p5732 = scmp.le.s32.totalorder 2, %s21
      // Predicated region
      $region61: #{tpu_custom_call.1} parent=5 // pred_check
        %p5733 = pneg %p5732
      $region62: #{tpu_custom_call.1} parent=5 // pred_check_branch
        %5735 = sbr.rel (%p5733) target = $region64
      $region63: #{tpu_custom_call.1} parent=5 // pred_region
        %s5736 = ssub.s32 %s21, 2
        // Predicated region
        $region65: #{tpu_custom_call.1} parent=63 // pred_check
          %p5737 = pneg %p223
        $region66: #{tpu_custom_call.1} parent=63 // pred_check_branch
          %5739 = sbr.rel (%p5737) target = $region68
        $region67: #{tpu_custom_call.1} parent=63 // pred_region
          %s5740 = sand.u32 %s208, 1
          %s5741 = scalar_lea.sflag [#allocation5], %s5740
          %s5742 = sand.u32 %s208, 1
          %s5743 = smul.addr %s5742, 32
          %s5744 = scalar_lea.vmem [#allocation9], %s5743
          %5745 = dma.done %s5741, 512
        $region68: #{tpu_custom_call.1} parent=63 // pred_fallthru
          _
      $region64: #{tpu_custom_call.1} parent=5 // pred_fallthru
        _
    $region6: #{tpu_custom_call.1} parent=1 // loop_footer
      %s25 = sadd.s32 1, %s21
    $region7: #{tpu_custom_call.1} parent=1 // loop_footer_branch
      %20 = sbr.rel target = $region3
    $region8: #{tpu_custom_call.1} parent=1 // loop_exit
      _
    %5746 = vsyncpa [#allocation4], 1
    %s5747 = scalar_lea.sflag [#allocation4], 1
    %5748 = vsyncpa %s5747, 1
    %5749 = vsyncpa [#allocation7], 1
    %s5750 = scalar_lea.sflag [#allocation7], 1
    %5751 = vsyncpa %s5750, 1
    %5752 = vsyncpa [#allocation5], 1
    %s5753 = scalar_lea.sflag [#allocation5], 1
    %5754 = vsyncpa %s5753, 1

</llo_original>
